<compile_context>
chip_gen: v5e
topology: v5e:2x2
jax: 0.10.0
libtpu: 0.0.40
codegen_flags: <defaults>
</compile_context>

<pallas_src>
import math

import numpy as np
import jax
import jax.numpy as jnp
from jax import lax
from jax.experimental import pallas as pl
from jax.experimental.pallas import tpu as pltpu

BN_EPS = 1e-5
KSIZE, STRIDE, PAD = 5, 2, 2


# ------------------------------ Pallas kernel --------------------------------

def encoder_kernel(x_ref,
                   cw1_ref, cw2_ref, cw3_ref,
                   pm1_ref, pm2_ref, pm3_ref, gb_ref,
                   fw1_ref, fw2_ref, fw3_ref, fb_ref,
                   out_ref):
    """Entire SimpleEncoder forward on VMEM-resident data (single dispatch)."""
    gb = gb_ref[...]      # (2, L1+L2+L3) f32: row 0 = gamma (tiled), row 1 = beta
    fb = fb_ref[...]      # (3, max_fc_width) f32 fc biases (row-padded)

    def conv_bn_relu(a, cw_ref, pm_ref, lane_off):
        lanes = cw_ref.shape[1]
        # Whole stride-2 5x5 conv (all taps + zero padding folded at prep time)
        # as ONE bf16 matmul with f32 accumulation.  Conv bias intentionally
        # omitted: it is cancelled exactly by training-mode BN mean subtraction.
        y = jnp.dot(a.astype(jnp.bfloat16), cw_ref[...],
                    preferred_element_type=jnp.float32)        # (N, OH*OW*Cout)
        # Training-mode BatchNorm2d (biased batch stats over N,H,W), f32 math.
        # Single-pass E[x^2]-E[x]^2 — fine here since |mean| << std with random
        # zero-mean conv weights.  TODO(synk): switch to two-pass (centered)
        # variance if conv outputs ever get large offsets.
        s1 = jnp.sum(y, axis=0, keepdims=True)
        s2 = jnp.sum(y * y, axis=0, keepdims=True)
        # Stack [s1; s2] into (2, lanes) via iota+select (avoids a
        # sublane-unaligned concatenate), then ONE pooling matmul returns
        # [mean; E[x^2]] already broadcast back to every (spatial, channel) lane.
        row = lax.broadcasted_iota(jnp.int32, (2, lanes), 0)
        stats = jnp.dot(jnp.where(row == 0, s1, s2), pm_ref[...],
                        preferred_element_type=jnp.float32)
        mean, ex2 = stats[0:1, :], stats[1:2, :]
        var = jnp.maximum(ex2 - mean * mean, 0.0)
        gamma = gb[0:1, lane_off:lane_off + lanes]
        beta = gb[1:2, lane_off:lane_off + lanes]
        scale = gamma * lax.rsqrt(var + BN_EPS)
        shift = beta - mean * scale
        return jnp.maximum(y * scale + shift, 0.0)

    L1, L2 = cw1_ref.shape[1], cw2_ref.shape[1]
    a = conv_bn_relu(x_ref[...], cw1_ref, pm1_ref, 0)
    a = conv_bn_relu(a, cw2_ref, pm2_ref, L1)
    a = conv_bn_relu(a, cw3_ref, pm3_ref, L1 + L2)

    def fc_relu(h, w_ref, bias_row):
        d = w_ref.shape[1]
        z = jnp.dot(h.astype(jnp.bfloat16), w_ref[...],
                    preferred_element_type=jnp.float32)
        return jnp.maximum(z + fb[bias_row:bias_row + 1, 0:d], 0.0)

    h = fc_relu(a, fw1_ref, 0)   # torch NCHW flatten folded into fw1 row order
    h = fc_relu(h, fw2_ref, 1)
    out_ref[...] = fc_relu(h, fw3_ref, 2)
    # TODO(synk): BatchNorm running_mean/running_var side-effect updates are
    # not reproduced (they do not affect the forward output).


# ----------------------- one-time constant construction ----------------------

def _out_size(h):
    return (h + 2 * PAD - KSIZE) // STRIDE + 1


def _fold_conv(w, H, W):
    """Fold a stride-2 5x5 conv (+zero padding) into one dense matrix.

    Input strip index  (h*W + w)*Cin + ci  ->  output strip index
    (oh*OW + ow)*Cout + co.  Conv bias is NOT folded (cancelled by BN mean).
    """
    Cout, Cin = w.shape[0], w.shape[1]
    OH, OW = _out_size(H), _out_size(W)
    Wf = np.zeros((H * W * Cin, OH * OW * Cout), np.float32)
    wt = np.asarray(w, np.float32)
    for kh in range(KSIZE):
        for kw in range(KSIZE):
            for oh in range(OH):
                h = STRIDE * oh + kh - PAD
                if not (0 <= h < H):
                    continue
                for ow in range(OW):
                    w_ = STRIDE * ow + kw - PAD
                    if not (0 <= w_ < W):
                        continue
                    r0 = (h * W + w_) * Cin
                    c0 = (oh * OW + ow) * Cout
                    Wf[r0:r0 + Cin, c0:c0 + Cout] += wt[:, :, kh, kw].T
    return Wf


def _make_pool(S, C, count):
    """(S*C, S*C): per-channel sum over the S spatial lane groups, broadcast
    back to every lane, divided by `count` (= N*OH*OW)."""
    return np.kron(np.ones((S, S), np.float32),
                   np.eye(C, dtype=np.float32)) / np.float32(count)


def _fold_fc1(w1, C, OH, OW):
    """Fold torch's NCHW flatten into the fc1 weight row order so it consumes
    the (oh, ow, c)-ordered conv3 strip directly: returns (OH*OW*C, F_out)."""
    F_out = w1.shape[0]
    w1r = np.asarray(w1, np.float32).reshape(F_out, C, OH, OW)
    return np.ascontiguousarray(w1r.transpose(2, 3, 1, 0).reshape(OH * OW * C, F_out))


def prepare_params(params, batch, im_size):
    """One-time host-side prep of every kernel constant.

    Matmul weights are stored in bfloat16 (MXU-native, half the DMA bytes);
    BN pooling matrices / gammas / betas / fc biases stay float32 so all
    statistics and bias math in-kernel is f32.  Conv biases are deliberately
    NOT consumed — they are exactly cancelled by the training-mode BatchNorm
    mean subtraction (they would have to be reinstated for an eval-mode,
    running-stats forward).
    """
    p = {k: tuple(np.asarray(t, np.float32) for t in v) for k, v in params.items()}
    N = batch
    sizes = [im_size]
    for _ in range(3):
        sizes.append(_out_size(sizes[-1]))                 # e.g. [16, 8, 4, 2]
    chans = [p["conv1"][0].shape[1], p["conv1"][0].shape[0],
             p["conv2"][0].shape[0], p["conv3"][0].shape[0]]

    conv_folds, pools, gammas, betas = [], [], [], []
    for li, name in enumerate(("conv1", "conv2", "conv3")):
        H, OH = sizes[li], sizes[li + 1]
        Cout = chans[li + 1]
        conv_folds.append(_fold_conv(p[name][0], H, H))
        pools.append(_make_pool(OH * OH, Cout, N * OH * OH))
        gamma, beta = p["bn%d" % (li + 1)]
        gammas.append(np.tile(gamma, OH * OH))
        betas.append(np.tile(beta, OH * OH))
    gb = np.stack([np.concatenate(gammas), np.concatenate(betas)], axis=0)

    C3, S3 = chans[3], sizes[3]
    fw1 = _fold_fc1(p["fc1"][0], C3, S3, S3)
    fw2 = np.ascontiguousarray(p["fc2"][0].T)
    fw3 = np.ascontiguousarray(p["fc3"][0].T)
    widths = (fw1.shape[1], fw2.shape[1], fw3.shape[1])
    fb = np.zeros((3, max(widths)), np.float32)
    for i, name in enumerate(("fc1", "fc2", "fc3")):
        fb[i, :widths[i]] = p[name][1]

    bf16 = lambda a: jnp.asarray(a, jnp.bfloat16)
    f32 = lambda a: jnp.asarray(a, jnp.float32)
    return (bf16(conv_folds[0]), bf16(conv_folds[1]), bf16(conv_folds[2]),
            f32(pools[0]), f32(pools[1]), f32(pools[2]), f32(gb),
            bf16(fw1), bf16(fw2), bf16(fw3), f32(fb))


# --------------------------------- forward -----------------------------------

def simple_encoder_forward(prep, x):
    """x: (N, C, H, W) float32; prep: output of prepare_params()."""
    N, C, H, W = x.shape
    dim_out = prep[9].shape[1]                     # fw3 lane width
    # Only per-call layout op: NCHW -> strip (rows=n, lanes=(h, w, c)), ~6 KB.
    x_strip = jnp.transpose(x, (0, 2, 3, 1)).reshape(N, H * W * C)
    # TODO(synk): for non-toy batch sizes, add a batch-row grid with
    # dimension_semantics=("parallel",) so v7x's second TensorCore is used.
    return pl.pallas_call(
        encoder_kernel,
        out_shape=jax.ShapeDtypeStruct((N, dim_out), jnp.float32),
        in_specs=[pl.BlockSpec(memory_space=pltpu.MemorySpace.VMEM)]
                 * (1 + len(prep)),
        out_specs=pl.BlockSpec(memory_space=pltpu.MemorySpace.VMEM),
        compiler_params=pltpu.CompilerParams(vmem_limit_bytes=32 * 1024 * 1024),
    )(x_strip, *prep)


# --------------------------- parameter construction ---------------------------

def init_params(key, dim_in=3, dim_out=32, dim1=8, dim2=64, im_size=16):
    dims = [dim1, dim1 * 2, dim1 * 4, dim2, dim2]
    ks = jax.random.split(key, 12)

    def conv_p(k1, k2, cin, cout, ksz=5):
        fan = cin * ksz * ksz
        w = jax.random.normal(k1, (cout, cin, ksz, ksz), jnp.float32) / math.sqrt(fan)
        b = 0.1 * jax.random.normal(k2, (cout,), jnp.float32)
        return w, b

    def lin_p(k1, k2, fin, fout):
        w = jax.random.normal(k1, (fout, fin), jnp.float32) / math.sqrt(fin)
        b = 0.1 * jax.random.normal(k2, (fout,), jnp.float32)
        return w, b

    flat = dims[2] * math.ceil(im_size / 8) ** 2
    return {
        "conv1": conv_p(ks[0], ks[1], dim_in, dims[0]),
        "conv2": conv_p(ks[2], ks[3], dims[0], dims[1]),
        "conv3": conv_p(ks[4], ks[5], dims[1], dims[2]),
        # BatchNorm2d default init: weight=1, bias=0
        "bn1": (jnp.ones((dims[0],), jnp.float32), jnp.zeros((dims[0],), jnp.float32)),
        "bn2": (jnp.ones((dims[1],), jnp.float32), jnp.zeros((dims[1],), jnp.float32)),
        "bn3": (jnp.ones((dims[2],), jnp.float32), jnp.zeros((dims[2],), jnp.float32)),
        "fc1": lin_p(ks[6], ks[7], flat, dims[3]),
        "fc2": lin_p(ks[8], ks[9], dims[3], dims[4]),
        "fc3": lin_p(ks[10], ks[11], dims[4], dim_out),
    }


# ------------------------- float64 NumPy reference ----------------------------

def reference_forward_np(params, x):
    """Exact PyTorch-forward semantics in float64 NumPy (precision-unambiguous)."""
    p = {k: tuple(np.asarray(t, np.float64) for t in v) for k, v in params.items()}
    a = np.asarray(x, np.float64)

    def conv(a, w, b):
        N, C, H, W = a.shape
        OH, OW = _out_size(H), _out_size(W)
        OC = w.shape[0]
        ap = np.pad(a, ((0, 0), (0, 0), (PAD, PAD), (PAD, PAD)))
        out = np.zeros((N, OC, OH, OW), np.float64)
        for kh in range(KSIZE):
            for kw in range(KSIZE):
                patch = ap[:, :, kh:kh + STRIDE * OH:STRIDE,
                            kw:kw + STRIDE * OW:STRIDE]
                out += np.einsum("ncyx,oc->noyx", patch, w[:, :, kh, kw])
        return out + b.reshape(1, -1, 1, 1)

    def bn_relu(y, gamma, beta):
        mean = y.mean(axis=(0, 2, 3), keepdims=True)
        var = y.var(axis=(0, 2, 3), keepdims=True)       # biased (training mode)
        y = (y - mean) / np.sqrt(var + BN_EPS)
        y = y * gamma.reshape(1, -1, 1, 1) + beta.reshape(1, -1, 1, 1)
        return np.maximum(y, 0.0)

    a = bn_relu(conv(a, *p["conv1"]), *p["bn1"])
    a = bn_relu(conv(a, *p["conv2"]), *p["bn2"])
    a = bn_relu(conv(a, *p["conv3"]), *p["bn3"])
    a = a.reshape(a.shape[0], -1)                        # NCHW flatten, like torch
    a = np.maximum(a @ p["fc1"][0].T + p["fc1"][1], 0.0)
    a = np.maximum(a @ p["fc2"][0].T + p["fc2"][1], 0.0)
    a = np.maximum(a @ p["fc3"][0].T + p["fc3"][1], 0.0)
    return a


# ----------------------------------- main -------------------------------------

if __name__ == "__main__":
    key = jax.random.PRNGKey(0)
    k_param, k_x = jax.random.split(key)

    # small shapes consistent with the module:
    # batch=2, dim_in=3, im_size=16, dim1=8, dim2=64, dim_out=32
    N, dim_in, im_size = 2, 3, 16
    dim1, dim2, dim_out = 8, 64, 32

    params = init_params(k_param, dim_in=dim_in, dim_out=dim_out,
                         dim1=dim1, dim2=dim2, im_size=im_size)
    x = jax.random.normal(k_x, (N, dim_in, im_size, im_size), jnp.float32)

    prep = prepare_params(params, batch=N, im_size=im_size)   # once, outside jit

    fwd = jax.jit(simple_encoder_forward)
    out = jax.block_until_ready(fwd(prep, x))
    assert out.shape == (N, dim_out), out.shape

    ref = reference_forward_np(params, np.asarray(x))
    out64 = np.asarray(out, np.float64)
    abs_err = float(np.max(np.abs(out64 - ref)))
    rel_err = float(np.linalg.norm(out64 - ref) /
                    max(np.linalg.norm(ref), 1e-12))
    # Tolerance is set by the bf16 matmul operands (f32 accumulation / BN math);
    # a layout or semantics bug would produce O(1) errors, far above this.
    assert abs_err < 1.5e-1 and rel_err < 5e-2, (abs_err, rel_err)

    print("KERNEL_OK")
</pallas_src>

<mosaic_0001>
module attributes {stable_mosaic.version = 11 : i64} {
  func.func @encoder_kernel(%arg0: memref<2x768xf32, #tpu.memory_space<vmem>>, %arg1: memref<768x512xbf16, #tpu.memory_space<vmem>>, %arg2: memref<512x256xbf16, #tpu.memory_space<vmem>>, %arg3: memref<256x128xbf16, #tpu.memory_space<vmem>>, %arg4: memref<512x512xf32, #tpu.memory_space<vmem>>, %arg5: memref<256x256xf32, #tpu.memory_space<vmem>>, %arg6: memref<128x128xf32, #tpu.memory_space<vmem>>, %arg7: memref<2x896xf32, #tpu.memory_space<vmem>>, %arg8: memref<128x64xbf16, #tpu.memory_space<vmem>>, %arg9: memref<64x64xbf16, #tpu.memory_space<vmem>>, %arg10: memref<64x32xbf16, #tpu.memory_space<vmem>>, %arg11: memref<3x64xf32, #tpu.memory_space<vmem>>, %arg12: memref<2x32xf32, #tpu.memory_space<vmem>>) attributes {dimension_semantics = [], scalar_prefetch = 0 : i64, scratch_operands = 0 : i64, tpu.core_type = #tpu.core_type<tc>} {
    %c0 = arith.constant 0 : index
    %c0_0 = arith.constant 0 : index
    %0 = vector.load %arg7[%c0, %c0_0] : memref<2x896xf32, #tpu.memory_space<vmem>>, vector<2x896xf32>
    %c0_1 = arith.constant 0 : index
    %c0_2 = arith.constant 0 : index
    %1 = vector.load %arg11[%c0_1, %c0_2] : memref<3x64xf32, #tpu.memory_space<vmem>>, vector<3x64xf32>
    %c0_3 = arith.constant 0 : index
    %c0_4 = arith.constant 0 : index
    %2 = vector.load %arg0[%c0_3, %c0_4] : memref<2x768xf32, #tpu.memory_space<vmem>>, vector<2x768xf32>
    %3 = arith.truncf %2 : vector<2x768xf32> to vector<2x768xbf16>
    %c0_5 = arith.constant 0 : index
    %c0_6 = arith.constant 0 : index
    %4 = vector.load %arg1[%c0_5, %c0_6] : memref<768x512xbf16, #tpu.memory_space<vmem>>, vector<768x512xbf16>
    %cst = arith.constant dense<0.000000e+00> : vector<2x512xf32>
    %5 = tpu.matmul %3, %4, %cst {dimension_numbers = #tpu.dot_dimension_numbers<[1], [0], [0], [1], [0, 0, 1, 1], [], []>} : vector<2x768xbf16>, vector<768x512xbf16>, vector<2x512xf32> -> vector<2x512xf32>
    %cst_7 = arith.constant dense<0.000000e+00> : vector<512xf32>
    %6 = vector.multi_reduction <add>, %5, %cst_7 [0] : vector<2x512xf32> to vector<512xf32>
    %7 = vector.shape_cast %6 : vector<512xf32> to vector<1x512xf32>
    %8 = arith.mulf %5, %5 : vector<2x512xf32>
    %cst_8 = arith.constant dense<0.000000e+00> : vector<512xf32>
    %9 = vector.multi_reduction <add>, %8, %cst_8 [0] : vector<2x512xf32> to vector<512xf32>
    %10 = vector.shape_cast %9 : vector<512xf32> to vector<1x512xf32>
    %11 = tpu.iota {dimensions = array<i32: 0>} : vector<2x512xi32>
    %c0_i32 = arith.constant 0 : i32
    %12 = vector.broadcast %c0_i32 : i32 to vector<2x512xi32>
    %13 = arith.cmpi eq, %11, %12 : vector<2x512xi32>
    %14 = vector.shape_cast %7 : vector<1x512xf32> to vector<1x512xf32>
    %15 = vector.broadcast %14 : vector<1x512xf32> to vector<2x512xf32>
    %16 = vector.shape_cast %10 : vector<1x512xf32> to vector<1x512xf32>
    %17 = vector.broadcast %16 : vector<1x512xf32> to vector<2x512xf32>
    %18 = arith.select %13, %15, %17 : vector<2x512xi1>, vector<2x512xf32>
    %c0_9 = arith.constant 0 : index
    %c0_10 = arith.constant 0 : index
    %19 = vector.load %arg4[%c0_9, %c0_10] : memref<512x512xf32, #tpu.memory_space<vmem>>, vector<512x512xf32>
    %cst_11 = arith.constant dense<0.000000e+00> : vector<2x512xf32>
    %20 = tpu.matmul %18, %19, %cst_11 {dimension_numbers = #tpu.dot_dimension_numbers<[1], [0], [0], [1], [0, 0, 1, 1], [], []>} : vector<2x512xf32>, vector<512x512xf32>, vector<2x512xf32> -> vector<2x512xf32>
    %21 = vector.extract_strided_slice %20 {offsets = [0, 0], sizes = [1, 512], strides = [1, 1]} : vector<2x512xf32> to vector<1x512xf32>
    %22 = vector.extract_strided_slice %20 {offsets = [1, 0], sizes = [1, 512], strides = [1, 1]} : vector<2x512xf32> to vector<1x512xf32>
    %23 = arith.mulf %21, %21 : vector<1x512xf32>
    %24 = arith.subf %22, %23 : vector<1x512xf32>
    %cst_12 = arith.constant 0.000000e+00 : f32
    %25 = vector.broadcast %cst_12 : f32 to vector<1x512xf32>
    %26 = arith.maximumf %24, %25 : vector<1x512xf32>
    %27 = vector.extract_strided_slice %0 {offsets = [0, 0], sizes = [1, 512], strides = [1, 1]} : vector<2x896xf32> to vector<1x512xf32>
    %28 = vector.extract_strided_slice %0 {offsets = [1, 0], sizes = [1, 512], strides = [1, 1]} : vector<2x896xf32> to vector<1x512xf32>
    %cst_13 = arith.constant 9.99999974E-6 : f32
    %29 = vector.broadcast %cst_13 : f32 to vector<1x512xf32>
    %30 = arith.addf %26, %29 : vector<1x512xf32>
    %31 = math.rsqrt %30 : vector<1x512xf32>
    %32 = arith.mulf %27, %31 : vector<1x512xf32>
    %33 = arith.mulf %21, %32 : vector<1x512xf32>
    %34 = arith.subf %28, %33 : vector<1x512xf32>
    %35 = vector.broadcast %32 : vector<1x512xf32> to vector<2x512xf32>
    %36 = arith.mulf %5, %35 : vector<2x512xf32>
    %37 = vector.broadcast %34 : vector<1x512xf32> to vector<2x512xf32>
    %38 = arith.addf %36, %37 : vector<2x512xf32>
    %cst_14 = arith.constant 0.000000e+00 : f32
    %39 = vector.broadcast %cst_14 : f32 to vector<2x512xf32>
    %40 = arith.maximumf %38, %39 : vector<2x512xf32>
    %41 = arith.truncf %40 : vector<2x512xf32> to vector<2x512xbf16>
    %c0_15 = arith.constant 0 : index
    %c0_16 = arith.constant 0 : index
    %42 = vector.load %arg2[%c0_15, %c0_16] : memref<512x256xbf16, #tpu.memory_space<vmem>>, vector<512x256xbf16>
    %cst_17 = arith.constant dense<0.000000e+00> : vector<2x256xf32>
    %43 = tpu.matmul %41, %42, %cst_17 {dimension_numbers = #tpu.dot_dimension_numbers<[1], [0], [0], [1], [0, 0, 1, 1], [], []>} : vector<2x512xbf16>, vector<512x256xbf16>, vector<2x256xf32> -> vector<2x256xf32>
    %cst_18 = arith.constant dense<0.000000e+00> : vector<256xf32>
    %44 = vector.multi_reduction <add>, %43, %cst_18 [0] : vector<2x256xf32> to vector<256xf32>
    %45 = vector.shape_cast %44 : vector<256xf32> to vector<1x256xf32>
    %46 = arith.mulf %43, %43 : vector<2x256xf32>
    %cst_19 = arith.constant dense<0.000000e+00> : vector<256xf32>
    %47 = vector.multi_reduction <add>, %46, %cst_19 [0] : vector<2x256xf32> to vector<256xf32>
    %48 = vector.shape_cast %47 : vector<256xf32> to vector<1x256xf32>
    %49 = tpu.iota {dimensions = array<i32: 0>} : vector<2x256xi32>
    %c0_i32_20 = arith.constant 0 : i32
    %50 = vector.broadcast %c0_i32_20 : i32 to vector<2x256xi32>
    %51 = arith.cmpi eq, %49, %50 : vector<2x256xi32>
    %52 = vector.shape_cast %45 : vector<1x256xf32> to vector<1x256xf32>
    %53 = vector.broadcast %52 : vector<1x256xf32> to vector<2x256xf32>
    %54 = vector.shape_cast %48 : vector<1x256xf32> to vector<1x256xf32>
    %55 = vector.broadcast %54 : vector<1x256xf32> to vector<2x256xf32>
    %56 = arith.select %51, %53, %55 : vector<2x256xi1>, vector<2x256xf32>
    %c0_21 = arith.constant 0 : index
    %c0_22 = arith.constant 0 : index
    %57 = vector.load %arg5[%c0_21, %c0_22] : memref<256x256xf32, #tpu.memory_space<vmem>>, vector<256x256xf32>
    %cst_23 = arith.constant dense<0.000000e+00> : vector<2x256xf32>
    %58 = tpu.matmul %56, %57, %cst_23 {dimension_numbers = #tpu.dot_dimension_numbers<[1], [0], [0], [1], [0, 0, 1, 1], [], []>} : vector<2x256xf32>, vector<256x256xf32>, vector<2x256xf32> -> vector<2x256xf32>
    %59 = vector.extract_strided_slice %58 {offsets = [0, 0], sizes = [1, 256], strides = [1, 1]} : vector<2x256xf32> to vector<1x256xf32>
    %60 = vector.extract_strided_slice %58 {offsets = [1, 0], sizes = [1, 256], strides = [1, 1]} : vector<2x256xf32> to vector<1x256xf32>
    %61 = arith.mulf %59, %59 : vector<1x256xf32>
    %62 = arith.subf %60, %61 : vector<1x256xf32>
    %cst_24 = arith.constant 0.000000e+00 : f32
    %63 = vector.broadcast %cst_24 : f32 to vector<1x256xf32>
    %64 = arith.maximumf %62, %63 : vector<1x256xf32>
    %65 = vector.extract_strided_slice %0 {offsets = [0, 512], sizes = [1, 256], strides = [1, 1]} : vector<2x896xf32> to vector<1x256xf32>
    %66 = vector.extract_strided_slice %0 {offsets = [1, 512], sizes = [1, 256], strides = [1, 1]} : vector<2x896xf32> to vector<1x256xf32>
    %cst_25 = arith.constant 9.99999974E-6 : f32
    %67 = vector.broadcast %cst_25 : f32 to vector<1x256xf32>
    %68 = arith.addf %64, %67 : vector<1x256xf32>
    %69 = math.rsqrt %68 : vector<1x256xf32>
    %70 = arith.mulf %65, %69 : vector<1x256xf32>
    %71 = arith.mulf %59, %70 : vector<1x256xf32>
    %72 = arith.subf %66, %71 : vector<1x256xf32>
    %73 = vector.broadcast %70 : vector<1x256xf32> to vector<2x256xf32>
    %74 = arith.mulf %43, %73 : vector<2x256xf32>
    %75 = vector.broadcast %72 : vector<1x256xf32> to vector<2x256xf32>
    %76 = arith.addf %74, %75 : vector<2x256xf32>
    %cst_26 = arith.constant 0.000000e+00 : f32
    %77 = vector.broadcast %cst_26 : f32 to vector<2x256xf32>
    %78 = arith.maximumf %76, %77 : vector<2x256xf32>
    %79 = arith.truncf %78 : vector<2x256xf32> to vector<2x256xbf16>
    %c0_27 = arith.constant 0 : index
    %c0_28 = arith.constant 0 : index
    %80 = vector.load %arg3[%c0_27, %c0_28] : memref<256x128xbf16, #tpu.memory_space<vmem>>, vector<256x128xbf16>
    %cst_29 = arith.constant dense<0.000000e+00> : vector<2x128xf32>
    %81 = tpu.matmul %79, %80, %cst_29 {dimension_numbers = #tpu.dot_dimension_numbers<[1], [0], [0], [1], [0, 0, 1, 1], [], []>} : vector<2x256xbf16>, vector<256x128xbf16>, vector<2x128xf32> -> vector<2x128xf32>
    %cst_30 = arith.constant dense<0.000000e+00> : vector<128xf32>
    %82 = vector.multi_reduction <add>, %81, %cst_30 [0] : vector<2x128xf32> to vector<128xf32>
    %83 = vector.shape_cast %82 : vector<128xf32> to vector<1x128xf32>
    %84 = arith.mulf %81, %81 : vector<2x128xf32>
    %cst_31 = arith.constant dense<0.000000e+00> : vector<128xf32>
    %85 = vector.multi_reduction <add>, %84, %cst_31 [0] : vector<2x128xf32> to vector<128xf32>
    %86 = vector.shape_cast %85 : vector<128xf32> to vector<1x128xf32>
    %87 = tpu.iota {dimensions = array<i32: 0>} : vector<2x128xi32>
    %c0_i32_32 = arith.constant 0 : i32
    %88 = vector.broadcast %c0_i32_32 : i32 to vector<2x128xi32>
    %89 = arith.cmpi eq, %87, %88 : vector<2x128xi32>
    %90 = vector.shape_cast %83 : vector<1x128xf32> to vector<1x128xf32>
    %91 = vector.broadcast %90 : vector<1x128xf32> to vector<2x128xf32>
    %92 = vector.shape_cast %86 : vector<1x128xf32> to vector<1x128xf32>
    %93 = vector.broadcast %92 : vector<1x128xf32> to vector<2x128xf32>
    %94 = arith.select %89, %91, %93 : vector<2x128xi1>, vector<2x128xf32>
    %c0_33 = arith.constant 0 : index
    %c0_34 = arith.constant 0 : index
    %95 = vector.load %arg6[%c0_33, %c0_34] : memref<128x128xf32, #tpu.memory_space<vmem>>, vector<128x128xf32>
    %cst_35 = arith.constant dense<0.000000e+00> : vector<2x128xf32>
    %96 = tpu.matmul %94, %95, %cst_35 {dimension_numbers = #tpu.dot_dimension_numbers<[1], [0], [0], [1], [0, 0, 1, 1], [], []>} : vector<2x128xf32>, vector<128x128xf32>, vector<2x128xf32> -> vector<2x128xf32>
    %97 = vector.extract_strided_slice %96 {offsets = [0, 0], sizes = [1, 128], strides = [1, 1]} : vector<2x128xf32> to vector<1x128xf32>
    %98 = vector.extract_strided_slice %96 {offsets = [1, 0], sizes = [1, 128], strides = [1, 1]} : vector<2x128xf32> to vector<1x128xf32>
    %99 = arith.mulf %97, %97 : vector<1x128xf32>
    %100 = arith.subf %98, %99 : vector<1x128xf32>
    %cst_36 = arith.constant 0.000000e+00 : f32
    %101 = vector.broadcast %cst_36 : f32 to vector<1x128xf32>
    %102 = arith.maximumf %100, %101 : vector<1x128xf32>
    %103 = vector.extract_strided_slice %0 {offsets = [0, 768], sizes = [1, 128], strides = [1, 1]} : vector<2x896xf32> to vector<1x128xf32>
    %104 = vector.extract_strided_slice %0 {offsets = [1, 768], sizes = [1, 128], strides = [1, 1]} : vector<2x896xf32> to vector<1x128xf32>
    %cst_37 = arith.constant 9.99999974E-6 : f32
    %105 = vector.broadcast %cst_37 : f32 to vector<1x128xf32>
    %106 = arith.addf %102, %105 : vector<1x128xf32>
    %107 = math.rsqrt %106 : vector<1x128xf32>
    %108 = arith.mulf %103, %107 : vector<1x128xf32>
    %109 = arith.mulf %97, %108 : vector<1x128xf32>
    %110 = arith.subf %104, %109 : vector<1x128xf32>
    %111 = vector.broadcast %108 : vector<1x128xf32> to vector<2x128xf32>
    %112 = arith.mulf %81, %111 : vector<2x128xf32>
    %113 = vector.broadcast %110 : vector<1x128xf32> to vector<2x128xf32>
    %114 = arith.addf %112, %113 : vector<2x128xf32>
    %cst_38 = arith.constant 0.000000e+00 : f32
    %115 = vector.broadcast %cst_38 : f32 to vector<2x128xf32>
    %116 = arith.maximumf %114, %115 : vector<2x128xf32>
    %117 = arith.truncf %116 : vector<2x128xf32> to vector<2x128xbf16>
    %c0_39 = arith.constant 0 : index
    %c0_40 = arith.constant 0 : index
    %118 = vector.load %arg8[%c0_39, %c0_40] : memref<128x64xbf16, #tpu.memory_space<vmem>>, vector<128x64xbf16>
    %cst_41 = arith.constant dense<0.000000e+00> : vector<2x64xf32>
    %119 = tpu.matmul %117, %118, %cst_41 {dimension_numbers = #tpu.dot_dimension_numbers<[1], [0], [0], [1], [0, 0, 1, 1], [], []>} : vector<2x128xbf16>, vector<128x64xbf16>, vector<2x64xf32> -> vector<2x64xf32>
    %120 = vector.extract_strided_slice %1 {offsets = [0, 0], sizes = [1, 64], strides = [1, 1]} : vector<3x64xf32> to vector<1x64xf32>
    %121 = vector.broadcast %120 : vector<1x64xf32> to vector<2x64xf32>
    %122 = arith.addf %119, %121 : vector<2x64xf32>
    %cst_42 = arith.constant 0.000000e+00 : f32
    %123 = vector.broadcast %cst_42 : f32 to vector<2x64xf32>
    %124 = arith.maximumf %122, %123 : vector<2x64xf32>
    %125 = arith.truncf %124 : vector<2x64xf32> to vector<2x64xbf16>
    %c0_43 = arith.constant 0 : index
    %c0_44 = arith.constant 0 : index
    %126 = vector.load %arg9[%c0_43, %c0_44] : memref<64x64xbf16, #tpu.memory_space<vmem>>, vector<64x64xbf16>
    %cst_45 = arith.constant dense<0.000000e+00> : vector<2x64xf32>
    %127 = tpu.matmul %125, %126, %cst_45 {dimension_numbers = #tpu.dot_dimension_numbers<[1], [0], [0], [1], [0, 0, 1, 1], [], []>} : vector<2x64xbf16>, vector<64x64xbf16>, vector<2x64xf32> -> vector<2x64xf32>
    %128 = vector.extract_strided_slice %1 {offsets = [1, 0], sizes = [1, 64], strides = [1, 1]} : vector<3x64xf32> to vector<1x64xf32>
    %129 = vector.broadcast %128 : vector<1x64xf32> to vector<2x64xf32>
    %130 = arith.addf %127, %129 : vector<2x64xf32>
    %cst_46 = arith.constant 0.000000e+00 : f32
    %131 = vector.broadcast %cst_46 : f32 to vector<2x64xf32>
    %132 = arith.maximumf %130, %131 : vector<2x64xf32>
    %133 = arith.truncf %132 : vector<2x64xf32> to vector<2x64xbf16>
    %c0_47 = arith.constant 0 : index
    %c0_48 = arith.constant 0 : index
    %134 = vector.load %arg10[%c0_47, %c0_48] : memref<64x32xbf16, #tpu.memory_space<vmem>>, vector<64x32xbf16>
    %cst_49 = arith.constant dense<0.000000e+00> : vector<2x32xf32>
    %135 = tpu.matmul %133, %134, %cst_49 {dimension_numbers = #tpu.dot_dimension_numbers<[1], [0], [0], [1], [0, 0, 1, 1], [], []>} : vector<2x64xbf16>, vector<64x32xbf16>, vector<2x32xf32> -> vector<2x32xf32>
    %136 = vector.extract_strided_slice %1 {offsets = [2, 0], sizes = [1, 32], strides = [1, 1]} : vector<3x64xf32> to vector<1x32xf32>
    %137 = vector.broadcast %136 : vector<1x32xf32> to vector<2x32xf32>
    %138 = arith.addf %135, %137 : vector<2x32xf32>
    %cst_50 = arith.constant 0.000000e+00 : f32
    %139 = vector.broadcast %cst_50 : f32 to vector<2x32xf32>
    %140 = arith.maximumf %138, %139 : vector<2x32xf32>
    %c0_51 = arith.constant 0 : index
    %c0_52 = arith.constant 0 : index
    %141 = vector.load %arg12[%c0_51, %c0_52] : memref<2x32xf32, #tpu.memory_space<vmem>>, vector<2x32xf32>
    tpu.vector_store %arg12[%c0_51, %c0_52], %140 {strides = array<i32>} : memref<2x32xf32, #tpu.memory_space<vmem>>, vector<2x32xf32>,
    return
  }
}

</mosaic_0001>

<llo_original>
// kernel: simple_encoder_forward.1
$region0: #{simple_encoder_forward.1}
  #allocation0 [shape = 'u32[]', space=smem, size = 0x4, offset = 0x4, fixed_abs, tag = 'smem constant byte address 0x4 - core index']
  #allocation1 [shape = 'u32[72,128]{1,0:T(1,128)}', space=vmem, size = 0x9000, scoped, tag = 'internal scratch']
  %s0 = inlined_call_operand.vmem [shape: f32[2,768], index: 0, kind: input, shape index: {}]
  %s1 = inlined_call_operand.hbm [shape: bf16[768,512], index: 1, kind: input, shape index: {}]
  %s2 = inlined_call_operand.vmem [shape: bf16[512,256], index: 2, kind: input, shape index: {}]
  %s3 = inlined_call_operand.vmem [shape: bf16[256,128], index: 3, kind: input, shape index: {}]
  %s4 = inlined_call_operand.hbm [shape: f32[512,512], index: 4, kind: input, shape index: {}]
  %s5 = inlined_call_operand.vmem [shape: f32[256,256], index: 5, kind: input, shape index: {}]
  %s6 = inlined_call_operand.hbm [shape: f32[128,128], index: 6, kind: input, shape index: {}]
  %s7 = inlined_call_operand.vmem [shape: f32[2,896], index: 7, kind: input, shape index: {}]
  %s8 = inlined_call_operand.vmem [shape: bf16[128,64], index: 8, kind: input, shape index: {}]
  %s9 = inlined_call_operand.vmem [shape: bf16[64,64], index: 9, kind: input, shape index: {}]
  %s10 = inlined_call_operand.vmem [shape: bf16[64,32], index: 10, kind: input, shape index: {}]
  %s11 = inlined_call_operand.vmem [shape: f32[3,64], index: 11, kind: input, shape index: {}]
  %s12 = inlined_call_operand.hbm [shape: f32[2,32], index: 12, kind: output, shape index: {}]
  %s13 = sld [smem:[#allocation0]]
  $region70: #{simple_encoder_forward.1} parent=0
    _
  %s15 = ssub.s32 1, %s13
  %s16 = scalar_select 0, %s15, %s13
  $region1: #{simple_encoder_forward.1} parent=0
    #allocation2 [shape = 'u8[786432]{0}', space=vmem, size = 0xc0000, scoped, tag = 'input window, operand 1, single buffered']
    #allocation3 [shape = 's32[1]{0}', space=sflag, size = 0x4, scoped, tag = 'scoped memory for simple_encoder_forward.1']
    #allocation4 [shape = 's32[1]{0}', space=sflag, size = 0x4, scoped, tag = 'scoped memory for simple_encoder_forward.1']
    #allocation5 [shape = 'u8[1048576]{0}', space=vmem, size = 0x100000, scoped, tag = 'input window, operand 4, single buffered']
    #allocation6 [shape = 's32[1]{0}', space=sflag, size = 0x4, scoped, tag = 'scoped memory for simple_encoder_forward.1']
    #allocation7 [shape = 'u8[65536]{0}', space=vmem, size = 0x10000, scoped, tag = 'input window, operand 6, single buffered']
    #allocation8 [shape = 'u8[1024]{0}', space=vmem, size = 0x400, scoped, tag = 'output window, operand 0, single buffered']
    %17 = vsyncpa [#allocation3], 0
    %18 = vsyncpa [#allocation6], 0
    %19 = vsyncpa [#allocation4], 0
    // Predicated region
    $region2: #{simple_encoder_forward.1} parent=1 // pred_check
      _
    $region3: #{simple_encoder_forward.1} parent=1 // pred_check_branch
      %21 = sbr.rel (0) target = $region5
    $region4: #{simple_encoder_forward.1} parent=1 // pred_region
      _
    $region5: #{simple_encoder_forward.1} parent=1 // pred_fallthru
      _
    // Predicated region
    $region6: #{simple_encoder_forward.1} parent=1 // pred_check
      _
    $region7: #{simple_encoder_forward.1} parent=1 // pred_check_branch
      %23 = sbr.rel (0) target = $region9
    $region8: #{simple_encoder_forward.1} parent=1 // pred_region
      %25 = vsyncadd [#allocation3], 0
      %s26 = sshll.u32 %s1, 4
      %s27 = int_to_ptr.hbm [resolvable:$true] %s26
      %s28 = sshll.u32 [#allocation2], 4
      %s29 = int_to_ptr.vmem [resolvable:$true] %s28
      %34 = dma.hbm_to_vmem [thread:$0]  %s27, 24576, %s29, [#allocation3], 256, 256, 16
    $region9: #{simple_encoder_forward.1} parent=1 // pred_fallthru
      _
    // Predicated region
    $region10: #{simple_encoder_forward.1} parent=1 // pred_check
      _
    $region11: #{simple_encoder_forward.1} parent=1 // pred_check_branch
      %36 = sbr.rel (0) target = $region13
    $region12: #{simple_encoder_forward.1} parent=1 // pred_region
      _
    $region13: #{simple_encoder_forward.1} parent=1 // pred_fallthru
      _
    // Predicated region
    $region14: #{simple_encoder_forward.1} parent=1 // pred_check
      _
    $region15: #{simple_encoder_forward.1} parent=1 // pred_check_branch
      %38 = sbr.rel (0) target = $region17
    $region16: #{simple_encoder_forward.1} parent=1 // pred_region
      _
    $region17: #{simple_encoder_forward.1} parent=1 // pred_fallthru
      _
    // Predicated region
    $region18: #{simple_encoder_forward.1} parent=1 // pred_check
      _
    $region19: #{simple_encoder_forward.1} parent=1 // pred_check_branch
      %40 = sbr.rel (0) target = $region21
    $region20: #{simple_encoder_forward.1} parent=1 // pred_region
      %42 = vsyncadd [#allocation6], 0
      %s43 = sshll.u32 %s4, 4
      %s44 = int_to_ptr.hbm [resolvable:$true] %s43
      %s45 = sshll.u32 [#allocation5], 4
      %s46 = int_to_ptr.vmem [resolvable:$true] %s45
      %51 = dma.hbm_to_vmem [thread:$0]  %s44, 32768, %s46, [#allocation6], 512, 512, 32
    $region21: #{simple_encoder_forward.1} parent=1 // pred_fallthru
      _
    // Predicated region
    $region22: #{simple_encoder_forward.1} parent=1 // pred_check
      _
    $region23: #{simple_encoder_forward.1} parent=1 // pred_check_branch
      %53 = sbr.rel (0) target = $region25
    $region24: #{simple_encoder_forward.1} parent=1 // pred_region
      _
    $region25: #{simple_encoder_forward.1} parent=1 // pred_fallthru
      _
    // Predicated region
    $region26: #{simple_encoder_forward.1} parent=1 // pred_check
      _
    $region27: #{simple_encoder_forward.1} parent=1 // pred_check_branch
      %55 = sbr.rel (0) target = $region29
    $region28: #{simple_encoder_forward.1} parent=1 // pred_region
      %57 = vsyncadd [#allocation6], 0
      %s58 = sshll.u32 %s6, 4
      %s59 = int_to_ptr.hbm [resolvable:$true] %s58
      %s60 = sshll.u32 [#allocation7], 4
      %s61 = int_to_ptr.vmem [resolvable:$true] %s60
      %66 = dma.hbm_to_vmem [thread:$0]  %s59, 2048, %s61, [#allocation6], 128, 128, 8
    $region29: #{simple_encoder_forward.1} parent=1 // pred_fallthru
      _
    // Predicated region
    $region30: #{simple_encoder_forward.1} parent=1 // pred_check
      _
    $region31: #{simple_encoder_forward.1} parent=1 // pred_check_branch
      %68 = sbr.rel (0) target = $region33
    $region32: #{simple_encoder_forward.1} parent=1 // pred_region
      _
    $region33: #{simple_encoder_forward.1} parent=1 // pred_fallthru
      _
    // Predicated region
    $region34: #{simple_encoder_forward.1} parent=1 // pred_check
      _
    $region35: #{simple_encoder_forward.1} parent=1 // pred_check_branch
      %70 = sbr.rel (0) target = $region37
    $region36: #{simple_encoder_forward.1} parent=1 // pred_region
      _
    $region37: #{simple_encoder_forward.1} parent=1 // pred_fallthru
      _
    // Predicated region
    $region38: #{simple_encoder_forward.1} parent=1 // pred_check
      _
    $region39: #{simple_encoder_forward.1} parent=1 // pred_check_branch
      %72 = sbr.rel (0) target = $region41
    $region40: #{simple_encoder_forward.1} parent=1 // pred_region
      _
    $region41: #{simple_encoder_forward.1} parent=1 // pred_fallthru
      _
    // Predicated region
    $region42: #{simple_encoder_forward.1} parent=1 // pred_check
      _
    $region43: #{simple_encoder_forward.1} parent=1 // pred_check_branch
      %74 = sbr.rel (0) target = $region45
    $region44: #{simple_encoder_forward.1} parent=1 // pred_region
      _
    $region45: #{simple_encoder_forward.1} parent=1 // pred_fallthru
      _
    // Predicated region
    $region46: #{simple_encoder_forward.1} parent=1 // pred_check
      _
    $region47: #{simple_encoder_forward.1} parent=1 // pred_check_branch
      %76 = sbr.rel (0) target = $region49
    $region48: #{simple_encoder_forward.1} parent=1 // pred_region
      _
    $region49: #{simple_encoder_forward.1} parent=1 // pred_fallthru
      _
    // Predicated region
    $region50: #{simple_encoder_forward.1} parent=1 // pred_check
      _
    $region51: #{simple_encoder_forward.1} parent=1 // pred_check_branch
      %78 = sbr.rel (0) target = $region53
    $region52: #{simple_encoder_forward.1} parent=1 // pred_region
      %80 = dma.done [#allocation3], 24576
    $region53: #{simple_encoder_forward.1} parent=1 // pred_fallthru
      _
    // Predicated region
    $region54: #{simple_encoder_forward.1} parent=1 // pred_check
      _
    $region55: #{simple_encoder_forward.1} parent=1 // pred_check_branch
      %82 = sbr.rel (0) target = $region57
    $region56: #{simple_encoder_forward.1} parent=1 // pred_region
      %84 = dma.done [#allocation6], 32768
    $region57: #{simple_encoder_forward.1} parent=1 // pred_fallthru
      _
    // Predicated region
    $region58: #{simple_encoder_forward.1} parent=1 // pred_check
      _
    $region59: #{simple_encoder_forward.1} parent=1 // pred_check_branch
      %86 = sbr.rel (0) target = $region61
    $region60: #{simple_encoder_forward.1} parent=1 // pred_region
      %88 = dma.done [#allocation6], 2048
    $region61: #{simple_encoder_forward.1} parent=1 // pred_fallthru
      _
    %v90 = vld [vmem:[%s7] sm:$0xff]
    %v91 = vld [vmem:[%s7 + $0x8] sm:$0x3f]
    %v92 = vld [vmem:[%s11] sm:$0x7]
    %v93 = vld [vmem:[%s0] sm:$0xff]
    %v94 = vld [vmem:[%s0 + $0x8] sm:$0xf]
    %97 = vst [vmem:[#allocation1] ss:$4 sm:$0xff] %v93
    %s98 = scalar_lea.vmem [#allocation1], 32
    %99 = vst [vmem:[%s98] ss:$4 sm:$0xff] %v94
    %v100 = vld.sshfl [vmem:[#allocation1] sm:$0xff pattern:$0x73625140]
    %v101 = vld.sshfl [vmem:[#allocation1 + $0x8] sm:$0xff pattern:$0x73625140]
    %v102 = vld.sshfl [vmem:[#allocation1 + $0x10] sm:$0xff pattern:$0x73625140]
    %v103 = vld.sshfl [vmem:[#allocation1 + $0x18] sm:$0xff pattern:$0x73625140]
    %v104 = vld.sshfl [vmem:[#allocation1 + $0x20] sm:$0xff pattern:$0x73625140]
    %v105 = vld.sshfl [vmem:[#allocation1 + $0x28] sm:$0xff pattern:$0x73625140]
    %v112 = vpack.c.bf16 %v100, %v100
    %v113 = vpack.c.bf16 %v101, %v101
    %v114 = vpack.c.bf16 %v102, %v102
    %v115 = vpack.c.bf16 %v103, %v103
    %v116 = vpack.c.bf16 %v104, %v104
    %v117 = vpack.c.bf16 %v105, %v105
    %v118 = vld [vmem:[#allocation2] sm:$0xff]
    %v119 = vld [vmem:[#allocation2 + $0x8] sm:$0xff]
    %v120 = vld [vmem:[#allocation2 + $0x10] sm:$0xff]
    %v121 = vld [vmem:[#allocation2 + $0x18] sm:$0xff]
    %v122 = vld [vmem:[#allocation2 + $0x20] sm:$0xff]
    %v123 = vld [vmem:[#allocation2 + $0x28] sm:$0xff]
    %v124 = vld [vmem:[#allocation2 + $0x30] sm:$0xff]
    %v125 = vld [vmem:[#allocation2 + $0x38] sm:$0xff]
    %v126 = vld [vmem:[#allocation2 + $0x40] sm:$0xff]
    %v127 = vld [vmem:[#allocation2 + $0x48] sm:$0xff]
    %v128 = vld [vmem:[#allocation2 + $0x50] sm:$0xff]
    %v129 = vld [vmem:[#allocation2 + $0x58] sm:$0xff]
    %v130 = vld [vmem:[#allocation2 + $0x60] sm:$0xff]
    %v131 = vld [vmem:[#allocation2 + $0x68] sm:$0xff]
    %v132 = vld [vmem:[#allocation2 + $0x70] sm:$0xff]
    %v133 = vld [vmem:[#allocation2 + $0x78] sm:$0xff]
    %v134 = vld [vmem:[#allocation2 + $0x80] sm:$0xff]
    %v135 = vld [vmem:[#allocation2 + $0x88] sm:$0xff]
    %v136 = vld [vmem:[#allocation2 + $0x90] sm:$0xff]
    %v137 = vld [vmem:[#allocation2 + $0x98] sm:$0xff]
    %v138 = vld [vmem:[#allocation2 + $0xa0] sm:$0xff]
    %v139 = vld [vmem:[#allocation2 + $0xa8] sm:$0xff]
    %v140 = vld [vmem:[#allocation2 + $0xb0] sm:$0xff]
    %v141 = vld [vmem:[#allocation2 + $0xb8] sm:$0xff]
    %v142 = vld [vmem:[#allocation2 + $0xc0] sm:$0xff]
    %v143 = vld [vmem:[#allocation2 + $0xc8] sm:$0xff]
    %v144 = vld [vmem:[#allocation2 + $0xd0] sm:$0xff]
    %v145 = vld [vmem:[#allocation2 + $0xd8] sm:$0xff]
    %v146 = vld [vmem:[#allocation2 + $0xe0] sm:$0xff]
    %v147 = vld [vmem:[#allocation2 + $0xe8] sm:$0xff]
    %v148 = vld [vmem:[#allocation2 + $0xf0] sm:$0xff]
    %v149 = vld [vmem:[#allocation2 + $0xf8] sm:$0xff]
    %v150 = vld [vmem:[#allocation2 + $0x100] sm:$0xff]
    %v151 = vld [vmem:[#allocation2 + $0x108] sm:$0xff]
    %v152 = vld [vmem:[#allocation2 + $0x110] sm:$0xff]
    %v153 = vld [vmem:[#allocation2 + $0x118] sm:$0xff]
    %v154 = vld [vmem:[#allocation2 + $0x120] sm:$0xff]
    %v155 = vld [vmem:[#allocation2 + $0x128] sm:$0xff]
    %v156 = vld [vmem:[#allocation2 + $0x130] sm:$0xff]
    %v157 = vld [vmem:[#allocation2 + $0x138] sm:$0xff]
    %v158 = vld [vmem:[#allocation2 + $0x140] sm:$0xff]
    %v159 = vld [vmem:[#allocation2 + $0x148] sm:$0xff]
    %v160 = vld [vmem:[#allocation2 + $0x150] sm:$0xff]
    %v161 = vld [vmem:[#allocation2 + $0x158] sm:$0xff]
    %v162 = vld [vmem:[#allocation2 + $0x160] sm:$0xff]
    %v163 = vld [vmem:[#allocation2 + $0x168] sm:$0xff]
    %v164 = vld [vmem:[#allocation2 + $0x170] sm:$0xff]
    %v165 = vld [vmem:[#allocation2 + $0x178] sm:$0xff]
    %v166 = vld [vmem:[#allocation2 + $0x180] sm:$0xff]
    %v167 = vld [vmem:[#allocation2 + $0x188] sm:$0xff]
    %v168 = vld [vmem:[#allocation2 + $0x190] sm:$0xff]
    %v169 = vld [vmem:[#allocation2 + $0x198] sm:$0xff]
    %v170 = vld [vmem:[#allocation2 + $0x1a0] sm:$0xff]
    %v171 = vld [vmem:[#allocation2 + $0x1a8] sm:$0xff]
    %v172 = vld [vmem:[#allocation2 + $0x1b0] sm:$0xff]
    %v173 = vld [vmem:[#allocation2 + $0x1b8] sm:$0xff]
    %v174 = vld [vmem:[#allocation2 + $0x1c0] sm:$0xff]
    %v175 = vld [vmem:[#allocation2 + $0x1c8] sm:$0xff]
    %v176 = vld [vmem:[#allocation2 + $0x1d0] sm:$0xff]
    %v177 = vld [vmem:[#allocation2 + $0x1d8] sm:$0xff]
    %v178 = vld [vmem:[#allocation2 + $0x1e0] sm:$0xff]
    %v179 = vld [vmem:[#allocation2 + $0x1e8] sm:$0xff]
    %v180 = vld [vmem:[#allocation2 + $0x1f0] sm:$0xff]
    %v181 = vld [vmem:[#allocation2 + $0x1f8] sm:$0xff]
    %v182 = vld [vmem:[#allocation2 + $0x200] sm:$0xff]
    %v183 = vld [vmem:[#allocation2 + $0x208] sm:$0xff]
    %v184 = vld [vmem:[#allocation2 + $0x210] sm:$0xff]
    %v185 = vld [vmem:[#allocation2 + $0x218] sm:$0xff]
    %v186 = vld [vmem:[#allocation2 + $0x220] sm:$0xff]
    %v187 = vld [vmem:[#allocation2 + $0x228] sm:$0xff]
    %v188 = vld [vmem:[#allocation2 + $0x230] sm:$0xff]
    %v189 = vld [vmem:[#allocation2 + $0x238] sm:$0xff]
    %v190 = vld [vmem:[#allocation2 + $0x240] sm:$0xff]
    %v191 = vld [vmem:[#allocation2 + $0x248] sm:$0xff]
    %v192 = vld [vmem:[#allocation2 + $0x250] sm:$0xff]
    %v193 = vld [vmem:[#allocation2 + $0x258] sm:$0xff]
    %v194 = vld [vmem:[#allocation2 + $0x260] sm:$0xff]
    %v195 = vld [vmem:[#allocation2 + $0x268] sm:$0xff]
    %v196 = vld [vmem:[#allocation2 + $0x270] sm:$0xff]
    %v197 = vld [vmem:[#allocation2 + $0x278] sm:$0xff]
    %v198 = vld [vmem:[#allocation2 + $0x280] sm:$0xff]
    %v199 = vld [vmem:[#allocation2 + $0x288] sm:$0xff]
    %v200 = vld [vmem:[#allocation2 + $0x290] sm:$0xff]
    %v201 = vld [vmem:[#allocation2 + $0x298] sm:$0xff]
    %v202 = vld [vmem:[#allocation2 + $0x2a0] sm:$0xff]
    %v203 = vld [vmem:[#allocation2 + $0x2a8] sm:$0xff]
    %v204 = vld [vmem:[#allocation2 + $0x2b0] sm:$0xff]
    %v205 = vld [vmem:[#allocation2 + $0x2b8] sm:$0xff]
    %v206 = vld [vmem:[#allocation2 + $0x2c0] sm:$0xff]
    %v207 = vld [vmem:[#allocation2 + $0x2c8] sm:$0xff]
    %v208 = vld [vmem:[#allocation2 + $0x2d0] sm:$0xff]
    %v209 = vld [vmem:[#allocation2 + $0x2d8] sm:$0xff]
    %v210 = vld [vmem:[#allocation2 + $0x2e0] sm:$0xff]
    %v211 = vld [vmem:[#allocation2 + $0x2e8] sm:$0xff]
    %v212 = vld [vmem:[#allocation2 + $0x2f0] sm:$0xff]
    %v213 = vld [vmem:[#allocation2 + $0x2f8] sm:$0xff]
    %v214 = vld [vmem:[#allocation2 + $0x300] sm:$0xff]
    %v215 = vld [vmem:[#allocation2 + $0x308] sm:$0xff]
    %v216 = vld [vmem:[#allocation2 + $0x310] sm:$0xff]
    %v217 = vld [vmem:[#allocation2 + $0x318] sm:$0xff]
    %v218 = vld [vmem:[#allocation2 + $0x320] sm:$0xff]
    %v219 = vld [vmem:[#allocation2 + $0x328] sm:$0xff]
    %v220 = vld [vmem:[#allocation2 + $0x330] sm:$0xff]
    %v221 = vld [vmem:[#allocation2 + $0x338] sm:$0xff]
    %v222 = vld [vmem:[#allocation2 + $0x340] sm:$0xff]
    %v223 = vld [vmem:[#allocation2 + $0x348] sm:$0xff]
    %v224 = vld [vmem:[#allocation2 + $0x350] sm:$0xff]
    %v225 = vld [vmem:[#allocation2 + $0x358] sm:$0xff]
    %v226 = vld [vmem:[#allocation2 + $0x360] sm:$0xff]
    %v227 = vld [vmem:[#allocation2 + $0x368] sm:$0xff]
    %v228 = vld [vmem:[#allocation2 + $0x370] sm:$0xff]
    %v229 = vld [vmem:[#allocation2 + $0x378] sm:$0xff]
    %v230 = vld [vmem:[#allocation2 + $0x380] sm:$0xff]
    %v231 = vld [vmem:[#allocation2 + $0x388] sm:$0xff]
    %v232 = vld [vmem:[#allocation2 + $0x390] sm:$0xff]
    %v233 = vld [vmem:[#allocation2 + $0x398] sm:$0xff]
    %v234 = vld [vmem:[#allocation2 + $0x3a0] sm:$0xff]
    %v235 = vld [vmem:[#allocation2 + $0x3a8] sm:$0xff]
    %v236 = vld [vmem:[#allocation2 + $0x3b0] sm:$0xff]
    %v237 = vld [vmem:[#allocation2 + $0x3b8] sm:$0xff]
    %v238 = vld [vmem:[#allocation2 + $0x3c0] sm:$0xff]
    %v239 = vld [vmem:[#allocation2 + $0x3c8] sm:$0xff]
    %v240 = vld [vmem:[#allocation2 + $0x3d0] sm:$0xff]
    %v241 = vld [vmem:[#allocation2 + $0x3d8] sm:$0xff]
    %v242 = vld [vmem:[#allocation2 + $0x3e0] sm:$0xff]
    %v243 = vld [vmem:[#allocation2 + $0x3e8] sm:$0xff]
    %v244 = vld [vmem:[#allocation2 + $0x3f0] sm:$0xff]
    %v245 = vld [vmem:[#allocation2 + $0x3f8] sm:$0xff]
    %v246 = vld [vmem:[#allocation2 + $0x400] sm:$0xff]
    %v247 = vld [vmem:[#allocation2 + $0x408] sm:$0xff]
    %v248 = vld [vmem:[#allocation2 + $0x410] sm:$0xff]
    %v249 = vld [vmem:[#allocation2 + $0x418] sm:$0xff]
    %v250 = vld [vmem:[#allocation2 + $0x420] sm:$0xff]
    %v251 = vld [vmem:[#allocation2 + $0x428] sm:$0xff]
    %v252 = vld [vmem:[#allocation2 + $0x430] sm:$0xff]
    %v253 = vld [vmem:[#allocation2 + $0x438] sm:$0xff]
    %v254 = vld [vmem:[#allocation2 + $0x440] sm:$0xff]
    %v255 = vld [vmem:[#allocation2 + $0x448] sm:$0xff]
    %v256 = vld [vmem:[#allocation2 + $0x450] sm:$0xff]
    %v257 = vld [vmem:[#allocation2 + $0x458] sm:$0xff]
    %v258 = vld [vmem:[#allocation2 + $0x460] sm:$0xff]
    %v259 = vld [vmem:[#allocation2 + $0x468] sm:$0xff]
    %v260 = vld [vmem:[#allocation2 + $0x470] sm:$0xff]
    %v261 = vld [vmem:[#allocation2 + $0x478] sm:$0xff]
    %v262 = vld [vmem:[#allocation2 + $0x480] sm:$0xff]
    %v263 = vld [vmem:[#allocation2 + $0x488] sm:$0xff]
    %v264 = vld [vmem:[#allocation2 + $0x490] sm:$0xff]
    %v265 = vld [vmem:[#allocation2 + $0x498] sm:$0xff]
    %v266 = vld [vmem:[#allocation2 + $0x4a0] sm:$0xff]
    %v267 = vld [vmem:[#allocation2 + $0x4a8] sm:$0xff]
    %v268 = vld [vmem:[#allocation2 + $0x4b0] sm:$0xff]
    %v269 = vld [vmem:[#allocation2 + $0x4b8] sm:$0xff]
    %v270 = vld [vmem:[#allocation2 + $0x4c0] sm:$0xff]
    %v271 = vld [vmem:[#allocation2 + $0x4c8] sm:$0xff]
    %v272 = vld [vmem:[#allocation2 + $0x4d0] sm:$0xff]
    %v273 = vld [vmem:[#allocation2 + $0x4d8] sm:$0xff]
    %v274 = vld [vmem:[#allocation2 + $0x4e0] sm:$0xff]
    %v275 = vld [vmem:[#allocation2 + $0x4e8] sm:$0xff]
    %v276 = vld [vmem:[#allocation2 + $0x4f0] sm:$0xff]
    %v277 = vld [vmem:[#allocation2 + $0x4f8] sm:$0xff]
    %v278 = vld [vmem:[#allocation2 + $0x500] sm:$0xff]
    %v279 = vld [vmem:[#allocation2 + $0x508] sm:$0xff]
    %v280 = vld [vmem:[#allocation2 + $0x510] sm:$0xff]
    %v281 = vld [vmem:[#allocation2 + $0x518] sm:$0xff]
    %v282 = vld [vmem:[#allocation2 + $0x520] sm:$0xff]
    %v283 = vld [vmem:[#allocation2 + $0x528] sm:$0xff]
    %v284 = vld [vmem:[#allocation2 + $0x530] sm:$0xff]
    %v285 = vld [vmem:[#allocation2 + $0x538] sm:$0xff]
    %v286 = vld [vmem:[#allocation2 + $0x540] sm:$0xff]
    %v287 = vld [vmem:[#allocation2 + $0x548] sm:$0xff]
    %v288 = vld [vmem:[#allocation2 + $0x550] sm:$0xff]
    %v289 = vld [vmem:[#allocation2 + $0x558] sm:$0xff]
    %v290 = vld [vmem:[#allocation2 + $0x560] sm:$0xff]
    %v291 = vld [vmem:[#allocation2 + $0x568] sm:$0xff]
    %v292 = vld [vmem:[#allocation2 + $0x570] sm:$0xff]
    %v293 = vld [vmem:[#allocation2 + $0x578] sm:$0xff]
    %v294 = vld [vmem:[#allocation2 + $0x580] sm:$0xff]
    %v295 = vld [vmem:[#allocation2 + $0x588] sm:$0xff]
    %v296 = vld [vmem:[#allocation2 + $0x590] sm:$0xff]
    %v297 = vld [vmem:[#allocation2 + $0x598] sm:$0xff]
    %v298 = vld [vmem:[#allocation2 + $0x5a0] sm:$0xff]
    %v299 = vld [vmem:[#allocation2 + $0x5a8] sm:$0xff]
    %v300 = vld [vmem:[#allocation2 + $0x5b0] sm:$0xff]
    %v301 = vld [vmem:[#allocation2 + $0x5b8] sm:$0xff]
    %v302 = vld [vmem:[#allocation2 + $0x5c0] sm:$0xff]
    %v303 = vld [vmem:[#allocation2 + $0x5c8] sm:$0xff]
    %v304 = vld [vmem:[#allocation2 + $0x5d0] sm:$0xff]
    %v305 = vld [vmem:[#allocation2 + $0x5d8] sm:$0xff]
    %v306 = vld [vmem:[#allocation2 + $0x5e0] sm:$0xff]
    %v307 = vld [vmem:[#allocation2 + $0x5e8] sm:$0xff]
    %v308 = vld [vmem:[#allocation2 + $0x5f0] sm:$0xff]
    %v309 = vld [vmem:[#allocation2 + $0x5f8] sm:$0xff]
    %v502 = vunpack.c.l.b16 %v118
    %v503 = vunpack.c.h.b16 %v118
    %v504 = vunpack.c.l.b16 %v119
    %v505 = vunpack.c.h.b16 %v119
    %v506 = vunpack.c.l.b16 %v120
    %v507 = vunpack.c.h.b16 %v120
    %v508 = vunpack.c.l.b16 %v121
    %v509 = vunpack.c.h.b16 %v121
    %v510 = vunpack.c.l.b16 %v122
    %v511 = vunpack.c.h.b16 %v122
    %v512 = vunpack.c.l.b16 %v123
    %v513 = vunpack.c.h.b16 %v123
    %v514 = vunpack.c.l.b16 %v124
    %v515 = vunpack.c.h.b16 %v124
    %v516 = vunpack.c.l.b16 %v125
    %v517 = vunpack.c.h.b16 %v125
    %v518 = vunpack.c.l.b16 %v126
    %v519 = vunpack.c.h.b16 %v126
    %v520 = vunpack.c.l.b16 %v127
    %v521 = vunpack.c.h.b16 %v127
    %v522 = vunpack.c.l.b16 %v128
    %v523 = vunpack.c.h.b16 %v128
    %v524 = vunpack.c.l.b16 %v129
    %v525 = vunpack.c.h.b16 %v129
    %v526 = vunpack.c.l.b16 %v130
    %v527 = vunpack.c.h.b16 %v130
    %v528 = vunpack.c.l.b16 %v131
    %v529 = vunpack.c.h.b16 %v131
    %v530 = vunpack.c.l.b16 %v132
    %v531 = vunpack.c.h.b16 %v132
    %v532 = vunpack.c.l.b16 %v133
    %v533 = vunpack.c.h.b16 %v133
    %v534 = vunpack.c.l.b16 %v134
    %v535 = vunpack.c.h.b16 %v134
    %v536 = vunpack.c.l.b16 %v135
    %v537 = vunpack.c.h.b16 %v135
    %v538 = vunpack.c.l.b16 %v136
    %v539 = vunpack.c.h.b16 %v136
    %v540 = vunpack.c.l.b16 %v137
    %v541 = vunpack.c.h.b16 %v137
    %v542 = vunpack.c.l.b16 %v138
    %v543 = vunpack.c.h.b16 %v138
    %v544 = vunpack.c.l.b16 %v139
    %v545 = vunpack.c.h.b16 %v139
    %v546 = vunpack.c.l.b16 %v140
    %v547 = vunpack.c.h.b16 %v140
    %v548 = vunpack.c.l.b16 %v141
    %v549 = vunpack.c.h.b16 %v141
    %v550 = vunpack.c.l.b16 %v142
    %v551 = vunpack.c.h.b16 %v142
    %v552 = vunpack.c.l.b16 %v143
    %v553 = vunpack.c.h.b16 %v143
    %v554 = vunpack.c.l.b16 %v144
    %v555 = vunpack.c.h.b16 %v144
    %v556 = vunpack.c.l.b16 %v145
    %v557 = vunpack.c.h.b16 %v145
    %v558 = vunpack.c.l.b16 %v146
    %v559 = vunpack.c.h.b16 %v146
    %v560 = vunpack.c.l.b16 %v147
    %v561 = vunpack.c.h.b16 %v147
    %v562 = vunpack.c.l.b16 %v148
    %v563 = vunpack.c.h.b16 %v148
    %v564 = vunpack.c.l.b16 %v149
    %v565 = vunpack.c.h.b16 %v149
    %v566 = vunpack.c.l.b16 %v150
    %v567 = vunpack.c.h.b16 %v150
    %v568 = vunpack.c.l.b16 %v151
    %v569 = vunpack.c.h.b16 %v151
    %v570 = vunpack.c.l.b16 %v152
    %v571 = vunpack.c.h.b16 %v152
    %v572 = vunpack.c.l.b16 %v153
    %v573 = vunpack.c.h.b16 %v153
    %v574 = vunpack.c.l.b16 %v154
    %v575 = vunpack.c.h.b16 %v154
    %v576 = vunpack.c.l.b16 %v155
    %v577 = vunpack.c.h.b16 %v155
    %v578 = vunpack.c.l.b16 %v156
    %v579 = vunpack.c.h.b16 %v156
    %v580 = vunpack.c.l.b16 %v157
    %v581 = vunpack.c.h.b16 %v157
    %v582 = vunpack.c.l.b16 %v158
    %v583 = vunpack.c.h.b16 %v158
    %v584 = vunpack.c.l.b16 %v159
    %v585 = vunpack.c.h.b16 %v159
    %v586 = vunpack.c.l.b16 %v160
    %v587 = vunpack.c.h.b16 %v160
    %v588 = vunpack.c.l.b16 %v161
    %v589 = vunpack.c.h.b16 %v161
    %v590 = vunpack.c.l.b16 %v162
    %v591 = vunpack.c.h.b16 %v162
    %v592 = vunpack.c.l.b16 %v163
    %v593 = vunpack.c.h.b16 %v163
    %v594 = vunpack.c.l.b16 %v164
    %v595 = vunpack.c.h.b16 %v164
    %v596 = vunpack.c.l.b16 %v165
    %v597 = vunpack.c.h.b16 %v165
    %v598 = vunpack.c.l.b16 %v166
    %v599 = vunpack.c.h.b16 %v166
    %v600 = vunpack.c.l.b16 %v167
    %v601 = vunpack.c.h.b16 %v167
    %v602 = vunpack.c.l.b16 %v168
    %v603 = vunpack.c.h.b16 %v168
    %v604 = vunpack.c.l.b16 %v169
    %v605 = vunpack.c.h.b16 %v169
    %v606 = vunpack.c.l.b16 %v170
    %v607 = vunpack.c.h.b16 %v170
    %v608 = vunpack.c.l.b16 %v171
    %v609 = vunpack.c.h.b16 %v171
    %v610 = vunpack.c.l.b16 %v172
    %v611 = vunpack.c.h.b16 %v172
    %v612 = vunpack.c.l.b16 %v173
    %v613 = vunpack.c.h.b16 %v173
    %v614 = vunpack.c.l.b16 %v174
    %v615 = vunpack.c.h.b16 %v174
    %v616 = vunpack.c.l.b16 %v175
    %v617 = vunpack.c.h.b16 %v175
    %v618 = vunpack.c.l.b16 %v176
    %v619 = vunpack.c.h.b16 %v176
    %v620 = vunpack.c.l.b16 %v177
    %v621 = vunpack.c.h.b16 %v177
    %v622 = vunpack.c.l.b16 %v178
    %v623 = vunpack.c.h.b16 %v178
    %v624 = vunpack.c.l.b16 %v179
    %v625 = vunpack.c.h.b16 %v179
    %v626 = vunpack.c.l.b16 %v180
    %v627 = vunpack.c.h.b16 %v180
    %v628 = vunpack.c.l.b16 %v181
    %v629 = vunpack.c.h.b16 %v181
    %v630 = vunpack.c.l.b16 %v182
    %v631 = vunpack.c.h.b16 %v182
    %v632 = vunpack.c.l.b16 %v183
    %v633 = vunpack.c.h.b16 %v183
    %v634 = vunpack.c.l.b16 %v184
    %v635 = vunpack.c.h.b16 %v184
    %v636 = vunpack.c.l.b16 %v185
    %v637 = vunpack.c.h.b16 %v185
    %v638 = vunpack.c.l.b16 %v186
    %v639 = vunpack.c.h.b16 %v186
    %v640 = vunpack.c.l.b16 %v187
    %v641 = vunpack.c.h.b16 %v187
    %v642 = vunpack.c.l.b16 %v188
    %v643 = vunpack.c.h.b16 %v188
    %v644 = vunpack.c.l.b16 %v189
    %v645 = vunpack.c.h.b16 %v189
    %v646 = vunpack.c.l.b16 %v190
    %v647 = vunpack.c.h.b16 %v190
    %v648 = vunpack.c.l.b16 %v191
    %v649 = vunpack.c.h.b16 %v191
    %v650 = vunpack.c.l.b16 %v192
    %v651 = vunpack.c.h.b16 %v192
    %v652 = vunpack.c.l.b16 %v193
    %v653 = vunpack.c.h.b16 %v193
    %v654 = vunpack.c.l.b16 %v194
    %v655 = vunpack.c.h.b16 %v194
    %v656 = vunpack.c.l.b16 %v195
    %v657 = vunpack.c.h.b16 %v195
    %v658 = vunpack.c.l.b16 %v196
    %v659 = vunpack.c.h.b16 %v196
    %v660 = vunpack.c.l.b16 %v197
    %v661 = vunpack.c.h.b16 %v197
    %v662 = vunpack.c.l.b16 %v198
    %v663 = vunpack.c.h.b16 %v198
    %v664 = vunpack.c.l.b16 %v199
    %v665 = vunpack.c.h.b16 %v199
    %v666 = vunpack.c.l.b16 %v200
    %v667 = vunpack.c.h.b16 %v200
    %v668 = vunpack.c.l.b16 %v201
    %v669 = vunpack.c.h.b16 %v201
    %v670 = vunpack.c.l.b16 %v202
    %v671 = vunpack.c.h.b16 %v202
    %v672 = vunpack.c.l.b16 %v203
    %v673 = vunpack.c.h.b16 %v203
    %v674 = vunpack.c.l.b16 %v204
    %v675 = vunpack.c.h.b16 %v204
    %v676 = vunpack.c.l.b16 %v205
    %v677 = vunpack.c.h.b16 %v205
    %v678 = vunpack.c.l.b16 %v206
    %v679 = vunpack.c.h.b16 %v206
    %v680 = vunpack.c.l.b16 %v207
    %v681 = vunpack.c.h.b16 %v207
    %v682 = vunpack.c.l.b16 %v208
    %v683 = vunpack.c.h.b16 %v208
    %v684 = vunpack.c.l.b16 %v209
    %v685 = vunpack.c.h.b16 %v209
    %v686 = vunpack.c.l.b16 %v210
    %v687 = vunpack.c.h.b16 %v210
    %v688 = vunpack.c.l.b16 %v211
    %v689 = vunpack.c.h.b16 %v211
    %v690 = vunpack.c.l.b16 %v212
    %v691 = vunpack.c.h.b16 %v212
    %v692 = vunpack.c.l.b16 %v213
    %v693 = vunpack.c.h.b16 %v213
    %v694 = vunpack.c.l.b16 %v214
    %v695 = vunpack.c.h.b16 %v214
    %v696 = vunpack.c.l.b16 %v215
    %v697 = vunpack.c.h.b16 %v215
    %v698 = vunpack.c.l.b16 %v216
    %v699 = vunpack.c.h.b16 %v216
    %v700 = vunpack.c.l.b16 %v217
    %v701 = vunpack.c.h.b16 %v217
    %v702 = vunpack.c.l.b16 %v218
    %v703 = vunpack.c.h.b16 %v218
    %v704 = vunpack.c.l.b16 %v219
    %v705 = vunpack.c.h.b16 %v219
    %v706 = vunpack.c.l.b16 %v220
    %v707 = vunpack.c.h.b16 %v220
    %v708 = vunpack.c.l.b16 %v221
    %v709 = vunpack.c.h.b16 %v221
    %v710 = vunpack.c.l.b16 %v222
    %v711 = vunpack.c.h.b16 %v222
    %v712 = vunpack.c.l.b16 %v223
    %v713 = vunpack.c.h.b16 %v223
    %v714 = vunpack.c.l.b16 %v224
    %v715 = vunpack.c.h.b16 %v224
    %v716 = vunpack.c.l.b16 %v225
    %v717 = vunpack.c.h.b16 %v225
    %v718 = vunpack.c.l.b16 %v226
    %v719 = vunpack.c.h.b16 %v226
    %v720 = vunpack.c.l.b16 %v227
    %v721 = vunpack.c.h.b16 %v227
    %v722 = vunpack.c.l.b16 %v228
    %v723 = vunpack.c.h.b16 %v228
    %v724 = vunpack.c.l.b16 %v229
    %v725 = vunpack.c.h.b16 %v229
    %v726 = vunpack.c.l.b16 %v230
    %v727 = vunpack.c.h.b16 %v230
    %v728 = vunpack.c.l.b16 %v231
    %v729 = vunpack.c.h.b16 %v231
    %v730 = vunpack.c.l.b16 %v232
    %v731 = vunpack.c.h.b16 %v232
    %v732 = vunpack.c.l.b16 %v233
    %v733 = vunpack.c.h.b16 %v233
    %v734 = vunpack.c.l.b16 %v234
    %v735 = vunpack.c.h.b16 %v234
    %v736 = vunpack.c.l.b16 %v235
    %v737 = vunpack.c.h.b16 %v235
    %v738 = vunpack.c.l.b16 %v236
    %v739 = vunpack.c.h.b16 %v236
    %v740 = vunpack.c.l.b16 %v237
    %v741 = vunpack.c.h.b16 %v237
    %v742 = vunpack.c.l.b16 %v238
    %v743 = vunpack.c.h.b16 %v238
    %v744 = vunpack.c.l.b16 %v239
    %v745 = vunpack.c.h.b16 %v239
    %v746 = vunpack.c.l.b16 %v240
    %v747 = vunpack.c.h.b16 %v240
    %v748 = vunpack.c.l.b16 %v241
    %v749 = vunpack.c.h.b16 %v241
    %v750 = vunpack.c.l.b16 %v242
    %v751 = vunpack.c.h.b16 %v242
    %v752 = vunpack.c.l.b16 %v243
    %v753 = vunpack.c.h.b16 %v243
    %v754 = vunpack.c.l.b16 %v244
    %v755 = vunpack.c.h.b16 %v244
    %v756 = vunpack.c.l.b16 %v245
    %v757 = vunpack.c.h.b16 %v245
    %v758 = vunpack.c.l.b16 %v246
    %v759 = vunpack.c.h.b16 %v246
    %v760 = vunpack.c.l.b16 %v247
    %v761 = vunpack.c.h.b16 %v247
    %v762 = vunpack.c.l.b16 %v248
    %v763 = vunpack.c.h.b16 %v248
    %v764 = vunpack.c.l.b16 %v249
    %v765 = vunpack.c.h.b16 %v249
    %v766 = vunpack.c.l.b16 %v250
    %v767 = vunpack.c.h.b16 %v250
    %v768 = vunpack.c.l.b16 %v251
    %v769 = vunpack.c.h.b16 %v251
    %v770 = vunpack.c.l.b16 %v252
    %v771 = vunpack.c.h.b16 %v252
    %v772 = vunpack.c.l.b16 %v253
    %v773 = vunpack.c.h.b16 %v253
    %v774 = vunpack.c.l.b16 %v254
    %v775 = vunpack.c.h.b16 %v254
    %v776 = vunpack.c.l.b16 %v255
    %v777 = vunpack.c.h.b16 %v255
    %v778 = vunpack.c.l.b16 %v256
    %v779 = vunpack.c.h.b16 %v256
    %v780 = vunpack.c.l.b16 %v257
    %v781 = vunpack.c.h.b16 %v257
    %v782 = vunpack.c.l.b16 %v258
    %v783 = vunpack.c.h.b16 %v258
    %v784 = vunpack.c.l.b16 %v259
    %v785 = vunpack.c.h.b16 %v259
    %v786 = vunpack.c.l.b16 %v260
    %v787 = vunpack.c.h.b16 %v260
    %v788 = vunpack.c.l.b16 %v261
    %v789 = vunpack.c.h.b16 %v261
    %v790 = vunpack.c.l.b16 %v262
    %v791 = vunpack.c.h.b16 %v262
    %v792 = vunpack.c.l.b16 %v263
    %v793 = vunpack.c.h.b16 %v263
    %v794 = vunpack.c.l.b16 %v264
    %v795 = vunpack.c.h.b16 %v264
    %v796 = vunpack.c.l.b16 %v265
    %v797 = vunpack.c.h.b16 %v265
    %v798 = vunpack.c.l.b16 %v266
    %v799 = vunpack.c.h.b16 %v266
    %v800 = vunpack.c.l.b16 %v267
    %v801 = vunpack.c.h.b16 %v267
    %v802 = vunpack.c.l.b16 %v268
    %v803 = vunpack.c.h.b16 %v268
    %v804 = vunpack.c.l.b16 %v269
    %v805 = vunpack.c.h.b16 %v269
    %v806 = vunpack.c.l.b16 %v270
    %v807 = vunpack.c.h.b16 %v270
    %v808 = vunpack.c.l.b16 %v271
    %v809 = vunpack.c.h.b16 %v271
    %v810 = vunpack.c.l.b16 %v272
    %v811 = vunpack.c.h.b16 %v272
    %v812 = vunpack.c.l.b16 %v273
    %v813 = vunpack.c.h.b16 %v273
    %v814 = vunpack.c.l.b16 %v274
    %v815 = vunpack.c.h.b16 %v274
    %v816 = vunpack.c.l.b16 %v275
    %v817 = vunpack.c.h.b16 %v275
    %v818 = vunpack.c.l.b16 %v276
    %v819 = vunpack.c.h.b16 %v276
    %v820 = vunpack.c.l.b16 %v277
    %v821 = vunpack.c.h.b16 %v277
    %v822 = vunpack.c.l.b16 %v278
    %v823 = vunpack.c.h.b16 %v278
    %v824 = vunpack.c.l.b16 %v279
    %v825 = vunpack.c.h.b16 %v279
    %v826 = vunpack.c.l.b16 %v280
    %v827 = vunpack.c.h.b16 %v280
    %v828 = vunpack.c.l.b16 %v281
    %v829 = vunpack.c.h.b16 %v281
    %v830 = vunpack.c.l.b16 %v282
    %v831 = vunpack.c.h.b16 %v282
    %v832 = vunpack.c.l.b16 %v283
    %v833 = vunpack.c.h.b16 %v283
    %v834 = vunpack.c.l.b16 %v284
    %v835 = vunpack.c.h.b16 %v284
    %v836 = vunpack.c.l.b16 %v285
    %v837 = vunpack.c.h.b16 %v285
    %v838 = vunpack.c.l.b16 %v286
    %v839 = vunpack.c.h.b16 %v286
    %v840 = vunpack.c.l.b16 %v287
    %v841 = vunpack.c.h.b16 %v287
    %v842 = vunpack.c.l.b16 %v288
    %v843 = vunpack.c.h.b16 %v288
    %v844 = vunpack.c.l.b16 %v289
    %v845 = vunpack.c.h.b16 %v289
    %v846 = vunpack.c.l.b16 %v290
    %v847 = vunpack.c.h.b16 %v290
    %v848 = vunpack.c.l.b16 %v291
    %v849 = vunpack.c.h.b16 %v291
    %v850 = vunpack.c.l.b16 %v292
    %v851 = vunpack.c.h.b16 %v292
    %v852 = vunpack.c.l.b16 %v293
    %v853 = vunpack.c.h.b16 %v293
    %v854 = vunpack.c.l.b16 %v294
    %v855 = vunpack.c.h.b16 %v294
    %v856 = vunpack.c.l.b16 %v295
    %v857 = vunpack.c.h.b16 %v295
    %v858 = vunpack.c.l.b16 %v296
    %v859 = vunpack.c.h.b16 %v296
    %v860 = vunpack.c.l.b16 %v297
    %v861 = vunpack.c.h.b16 %v297
    %v862 = vunpack.c.l.b16 %v298
    %v863 = vunpack.c.h.b16 %v298
    %v864 = vunpack.c.l.b16 %v299
    %v865 = vunpack.c.h.b16 %v299
    %v866 = vunpack.c.l.b16 %v300
    %v867 = vunpack.c.h.b16 %v300
    %v868 = vunpack.c.l.b16 %v301
    %v869 = vunpack.c.h.b16 %v301
    %v870 = vunpack.c.l.b16 %v302
    %v871 = vunpack.c.h.b16 %v302
    %v872 = vunpack.c.l.b16 %v303
    %v873 = vunpack.c.h.b16 %v303
    %v874 = vunpack.c.l.b16 %v304
    %v875 = vunpack.c.h.b16 %v304
    %v876 = vunpack.c.l.b16 %v305
    %v877 = vunpack.c.h.b16 %v305
    %v878 = vunpack.c.l.b16 %v306
    %v879 = vunpack.c.h.b16 %v306
    %v880 = vunpack.c.l.b16 %v307
    %v881 = vunpack.c.h.b16 %v307
    %v882 = vunpack.c.l.b16 %v308
    %v883 = vunpack.c.h.b16 %v308
    %v884 = vunpack.c.l.b16 %v309
    %v885 = vunpack.c.h.b16 %v309
    %v886 = vpack.c.b16 %v506, %v502
    %v887 = vpack.c.b16 %v507, %v503
    %v888 = vpack.c.b16 %v508, %v504
    %v889 = vpack.c.b16 %v509, %v505
    %v890 = vpack.c.b16 %v514, %v510
    %v891 = vpack.c.b16 %v515, %v511
    %v892 = vpack.c.b16 %v516, %v512
    %v893 = vpack.c.b16 %v517, %v513
    %v894 = vpack.c.b16 %v522, %v518
    %v895 = vpack.c.b16 %v523, %v519
    %v896 = vpack.c.b16 %v524, %v520
    %v897 = vpack.c.b16 %v525, %v521
    %v898 = vpack.c.b16 %v530, %v526
    %v899 = vpack.c.b16 %v531, %v527
    %v900 = vpack.c.b16 %v532, %v528
    %v901 = vpack.c.b16 %v533, %v529
    %v902 = vpack.c.b16 %v538, %v534
    %v903 = vpack.c.b16 %v539, %v535
    %v904 = vpack.c.b16 %v540, %v536
    %v905 = vpack.c.b16 %v541, %v537
    %v906 = vpack.c.b16 %v546, %v542
    %v907 = vpack.c.b16 %v547, %v543
    %v908 = vpack.c.b16 %v548, %v544
    %v909 = vpack.c.b16 %v549, %v545
    %v910 = vpack.c.b16 %v554, %v550
    %v911 = vpack.c.b16 %v555, %v551
    %v912 = vpack.c.b16 %v556, %v552
    %v913 = vpack.c.b16 %v557, %v553
    %v914 = vpack.c.b16 %v562, %v558
    %v915 = vpack.c.b16 %v563, %v559
    %v916 = vpack.c.b16 %v564, %v560
    %v917 = vpack.c.b16 %v565, %v561
    %v918 = vpack.c.b16 %v570, %v566
    %v919 = vpack.c.b16 %v571, %v567
    %v920 = vpack.c.b16 %v572, %v568
    %v921 = vpack.c.b16 %v573, %v569
    %v922 = vpack.c.b16 %v578, %v574
    %v923 = vpack.c.b16 %v579, %v575
    %v924 = vpack.c.b16 %v580, %v576
    %v925 = vpack.c.b16 %v581, %v577
    %v926 = vpack.c.b16 %v586, %v582
    %v927 = vpack.c.b16 %v587, %v583
    %v928 = vpack.c.b16 %v588, %v584
    %v929 = vpack.c.b16 %v589, %v585
    %v930 = vpack.c.b16 %v594, %v590
    %v931 = vpack.c.b16 %v595, %v591
    %v932 = vpack.c.b16 %v596, %v592
    %v933 = vpack.c.b16 %v597, %v593
    %v934 = vpack.c.b16 %v602, %v598
    %v935 = vpack.c.b16 %v603, %v599
    %v936 = vpack.c.b16 %v604, %v600
    %v937 = vpack.c.b16 %v605, %v601
    %v938 = vpack.c.b16 %v610, %v606
    %v939 = vpack.c.b16 %v611, %v607
    %v940 = vpack.c.b16 %v612, %v608
    %v941 = vpack.c.b16 %v613, %v609
    %v942 = vpack.c.b16 %v618, %v614
    %v943 = vpack.c.b16 %v619, %v615
    %v944 = vpack.c.b16 %v620, %v616
    %v945 = vpack.c.b16 %v621, %v617
    %v946 = vpack.c.b16 %v626, %v622
    %v947 = vpack.c.b16 %v627, %v623
    %v948 = vpack.c.b16 %v628, %v624
    %v949 = vpack.c.b16 %v629, %v625
    %v950 = vpack.c.b16 %v634, %v630
    %v951 = vpack.c.b16 %v635, %v631
    %v952 = vpack.c.b16 %v636, %v632
    %v953 = vpack.c.b16 %v637, %v633
    %v954 = vpack.c.b16 %v642, %v638
    %v955 = vpack.c.b16 %v643, %v639
    %v956 = vpack.c.b16 %v644, %v640
    %v957 = vpack.c.b16 %v645, %v641
    %v958 = vpack.c.b16 %v650, %v646
    %v959 = vpack.c.b16 %v651, %v647
    %v960 = vpack.c.b16 %v652, %v648
    %v961 = vpack.c.b16 %v653, %v649
    %v962 = vpack.c.b16 %v658, %v654
    %v963 = vpack.c.b16 %v659, %v655
    %v964 = vpack.c.b16 %v660, %v656
    %v965 = vpack.c.b16 %v661, %v657
    %v966 = vpack.c.b16 %v666, %v662
    %v967 = vpack.c.b16 %v667, %v663
    %v968 = vpack.c.b16 %v668, %v664
    %v969 = vpack.c.b16 %v669, %v665
    %v970 = vpack.c.b16 %v674, %v670
    %v971 = vpack.c.b16 %v675, %v671
    %v972 = vpack.c.b16 %v676, %v672
    %v973 = vpack.c.b16 %v677, %v673
    %v974 = vpack.c.b16 %v682, %v678
    %v975 = vpack.c.b16 %v683, %v679
    %v976 = vpack.c.b16 %v684, %v680
    %v977 = vpack.c.b16 %v685, %v681
    %v978 = vpack.c.b16 %v690, %v686
    %v979 = vpack.c.b16 %v691, %v687
    %v980 = vpack.c.b16 %v692, %v688
    %v981 = vpack.c.b16 %v693, %v689
    %v982 = vpack.c.b16 %v698, %v694
    %v983 = vpack.c.b16 %v699, %v695
    %v984 = vpack.c.b16 %v700, %v696
    %v985 = vpack.c.b16 %v701, %v697
    %v986 = vpack.c.b16 %v706, %v702
    %v987 = vpack.c.b16 %v707, %v703
    %v988 = vpack.c.b16 %v708, %v704
    %v989 = vpack.c.b16 %v709, %v705
    %v990 = vpack.c.b16 %v714, %v710
    %v991 = vpack.c.b16 %v715, %v711
    %v992 = vpack.c.b16 %v716, %v712
    %v993 = vpack.c.b16 %v717, %v713
    %v994 = vpack.c.b16 %v722, %v718
    %v995 = vpack.c.b16 %v723, %v719
    %v996 = vpack.c.b16 %v724, %v720
    %v997 = vpack.c.b16 %v725, %v721
    %v998 = vpack.c.b16 %v730, %v726
    %v999 = vpack.c.b16 %v731, %v727
    %v1000 = vpack.c.b16 %v732, %v728
    %v1001 = vpack.c.b16 %v733, %v729
    %v1002 = vpack.c.b16 %v738, %v734
    %v1003 = vpack.c.b16 %v739, %v735
    %v1004 = vpack.c.b16 %v740, %v736
    %v1005 = vpack.c.b16 %v741, %v737
    %v1006 = vpack.c.b16 %v746, %v742
    %v1007 = vpack.c.b16 %v747, %v743
    %v1008 = vpack.c.b16 %v748, %v744
    %v1009 = vpack.c.b16 %v749, %v745
    %v1010 = vpack.c.b16 %v754, %v750
    %v1011 = vpack.c.b16 %v755, %v751
    %v1012 = vpack.c.b16 %v756, %v752
    %v1013 = vpack.c.b16 %v757, %v753
    %v1014 = vpack.c.b16 %v762, %v758
    %v1015 = vpack.c.b16 %v763, %v759
    %v1016 = vpack.c.b16 %v764, %v760
    %v1017 = vpack.c.b16 %v765, %v761
    %v1018 = vpack.c.b16 %v770, %v766
    %v1019 = vpack.c.b16 %v771, %v767
    %v1020 = vpack.c.b16 %v772, %v768
    %v1021 = vpack.c.b16 %v773, %v769
    %v1022 = vpack.c.b16 %v778, %v774
    %v1023 = vpack.c.b16 %v779, %v775
    %v1024 = vpack.c.b16 %v780, %v776
    %v1025 = vpack.c.b16 %v781, %v777
    %v1026 = vpack.c.b16 %v786, %v782
    %v1027 = vpack.c.b16 %v787, %v783
    %v1028 = vpack.c.b16 %v788, %v784
    %v1029 = vpack.c.b16 %v789, %v785
    %v1030 = vpack.c.b16 %v794, %v790
    %v1031 = vpack.c.b16 %v795, %v791
    %v1032 = vpack.c.b16 %v796, %v792
    %v1033 = vpack.c.b16 %v797, %v793
    %v1034 = vpack.c.b16 %v802, %v798
    %v1035 = vpack.c.b16 %v803, %v799
    %v1036 = vpack.c.b16 %v804, %v800
    %v1037 = vpack.c.b16 %v805, %v801
    %v1038 = vpack.c.b16 %v810, %v806
    %v1039 = vpack.c.b16 %v811, %v807
    %v1040 = vpack.c.b16 %v812, %v808
    %v1041 = vpack.c.b16 %v813, %v809
    %v1042 = vpack.c.b16 %v818, %v814
    %v1043 = vpack.c.b16 %v819, %v815
    %v1044 = vpack.c.b16 %v820, %v816
    %v1045 = vpack.c.b16 %v821, %v817
    %v1046 = vpack.c.b16 %v826, %v822
    %v1047 = vpack.c.b16 %v827, %v823
    %v1048 = vpack.c.b16 %v828, %v824
    %v1049 = vpack.c.b16 %v829, %v825
    %v1050 = vpack.c.b16 %v834, %v830
    %v1051 = vpack.c.b16 %v835, %v831
    %v1052 = vpack.c.b16 %v836, %v832
    %v1053 = vpack.c.b16 %v837, %v833
    %v1054 = vpack.c.b16 %v842, %v838
    %v1055 = vpack.c.b16 %v843, %v839
    %v1056 = vpack.c.b16 %v844, %v840
    %v1057 = vpack.c.b16 %v845, %v841
    %v1058 = vpack.c.b16 %v850, %v846
    %v1059 = vpack.c.b16 %v851, %v847
    %v1060 = vpack.c.b16 %v852, %v848
    %v1061 = vpack.c.b16 %v853, %v849
    %v1062 = vpack.c.b16 %v858, %v854
    %v1063 = vpack.c.b16 %v859, %v855
    %v1064 = vpack.c.b16 %v860, %v856
    %v1065 = vpack.c.b16 %v861, %v857
    %v1066 = vpack.c.b16 %v866, %v862
    %v1067 = vpack.c.b16 %v867, %v863
    %v1068 = vpack.c.b16 %v868, %v864
    %v1069 = vpack.c.b16 %v869, %v865
    %v1070 = vpack.c.b16 %v874, %v870
    %v1071 = vpack.c.b16 %v875, %v871
    %v1072 = vpack.c.b16 %v876, %v872
    %v1073 = vpack.c.b16 %v877, %v873
    %v1074 = vpack.c.b16 %v882, %v878
    %v1075 = vpack.c.b16 %v883, %v879
    %v1076 = vpack.c.b16 %v884, %v880
    %v1077 = vpack.c.b16 %v885, %v881
    %1270 = vmatpush.bf16.msra.mxu0 %v914
    %1271 = vmatpush.bf16.msra.mxu0 %v910
    %1272 = vmatpush.bf16.msra.mxu0 %v906
    %1273 = vmatpush.bf16.msra.mxu0 %v902
    %1274 = vmatpush.bf16.msra.mxu0 %v898
    %1275 = vmatpush.bf16.msra.mxu0 %v894
    %1276 = vmatpush.bf16.msra.mxu0 %v890
    %1277 = vmatpush.bf16.msra.mxu0 %v886
    %1278 = vmatmul.bf16.gmra.mxu0 %v112
    %v1279 = vpop.f32.mrf.mxu0
    %v1280 = vadd.f32 0.0, %v1279
    %v1281 = vpop.f32.mrf.mxu0
    %1282 = vdwg.mxu0
    %1283 = vmatpush.bf16.msra.mxu0 %v946
    %1284 = vmatpush.bf16.msra.mxu0 %v942
    %1285 = vmatpush.bf16.msra.mxu0 %v938
    %1286 = vmatpush.bf16.msra.mxu0 %v934
    %1287 = vmatpush.bf16.msra.mxu0 %v930
    %1288 = vmatpush.bf16.msra.mxu0 %v926
    %1289 = vmatpush.bf16.msra.mxu0 %v922
    %1290 = vmatpush.bf16.msra.mxu0 %v918
    %1291 = vmatmul.bf16.gmra.mxu0 %v113
    %v1292 = vpop.f32.mrf.mxu0
    %v1293 = vadd.f32 %v1280, %v1292
    %v1294 = vpop.f32.mrf.mxu0
    %1295 = vdwg.mxu0
    %1296 = vmatpush.bf16.msra.mxu0 %v978
    %1297 = vmatpush.bf16.msra.mxu0 %v974
    %1298 = vmatpush.bf16.msra.mxu0 %v970
    %1299 = vmatpush.bf16.msra.mxu0 %v966
    %1300 = vmatpush.bf16.msra.mxu0 %v962
    %1301 = vmatpush.bf16.msra.mxu0 %v958
    %1302 = vmatpush.bf16.msra.mxu0 %v954
    %1303 = vmatpush.bf16.msra.mxu0 %v950
    %1304 = vmatmul.bf16.gmra.mxu0 %v114
    %v1305 = vpop.f32.mrf.mxu0
    %v1306 = vadd.f32 %v1293, %v1305
    %v1307 = vpop.f32.mrf.mxu0
    %1308 = vdwg.mxu0
    %1309 = vmatpush.bf16.msra.mxu0 %v1010
    %1310 = vmatpush.bf16.msra.mxu0 %v1006
    %1311 = vmatpush.bf16.msra.mxu0 %v1002
    %1312 = vmatpush.bf16.msra.mxu0 %v998
    %1313 = vmatpush.bf16.msra.mxu0 %v994
    %1314 = vmatpush.bf16.msra.mxu0 %v990
    %1315 = vmatpush.bf16.msra.mxu0 %v986
    %1316 = vmatpush.bf16.msra.mxu0 %v982
    %1317 = vmatmul.bf16.gmra.mxu0 %v115
    %v1318 = vpop.f32.mrf.mxu0
    %v1319 = vadd.f32 %v1306, %v1318
    %v1320 = vpop.f32.mrf.mxu0
    %1321 = vdwg.mxu0
    %1322 = vmatpush.bf16.msra.mxu0 %v1042
    %1323 = vmatpush.bf16.msra.mxu0 %v1038
    %1324 = vmatpush.bf16.msra.mxu0 %v1034
    %1325 = vmatpush.bf16.msra.mxu0 %v1030
    %1326 = vmatpush.bf16.msra.mxu0 %v1026
    %1327 = vmatpush.bf16.msra.mxu0 %v1022
    %1328 = vmatpush.bf16.msra.mxu0 %v1018
    %1329 = vmatpush.bf16.msra.mxu0 %v1014
    %1330 = vmatmul.bf16.gmra.mxu0 %v116
    %v1331 = vpop.f32.mrf.mxu0
    %v1332 = vadd.f32 %v1319, %v1331
    %v1333 = vpop.f32.mrf.mxu0
    %1334 = vdwg.mxu0
    %1335 = vmatpush.bf16.msra.mxu0 %v1074
    %1336 = vmatpush.bf16.msra.mxu0 %v1070
    %1337 = vmatpush.bf16.msra.mxu0 %v1066
    %1338 = vmatpush.bf16.msra.mxu0 %v1062
    %1339 = vmatpush.bf16.msra.mxu0 %v1058
    %1340 = vmatpush.bf16.msra.mxu0 %v1054
    %1341 = vmatpush.bf16.msra.mxu0 %v1050
    %1342 = vmatpush.bf16.msra.mxu0 %v1046
    %1343 = vmatmul.bf16.gmra.mxu0 %v117
    %v1344 = vpop.f32.mrf.mxu0
    %v1345 = vadd.f32 %v1332, %v1344
    %v1346 = vpop.f32.mrf.mxu0
    %1347 = vdwg.mxu0
    %1348 = vmatpush.bf16.msra.mxu0 %v915
    %1349 = vmatpush.bf16.msra.mxu0 %v911
    %1350 = vmatpush.bf16.msra.mxu0 %v907
    %1351 = vmatpush.bf16.msra.mxu0 %v903
    %1352 = vmatpush.bf16.msra.mxu0 %v899
    %1353 = vmatpush.bf16.msra.mxu0 %v895
    %1354 = vmatpush.bf16.msra.mxu0 %v891
    %1355 = vmatpush.bf16.msra.mxu0 %v887
    %1356 = vmatmul.bf16.gmra.mxu0 %v112
    %v1357 = vpop.f32.mrf.mxu0
    %v1358 = vadd.f32 0.0, %v1357
    %v1359 = vpop.f32.mrf.mxu0
    %1360 = vdwg.mxu0
    %1361 = vmatpush.bf16.msra.mxu0 %v947
    %1362 = vmatpush.bf16.msra.mxu0 %v943
    %1363 = vmatpush.bf16.msra.mxu0 %v939
    %1364 = vmatpush.bf16.msra.mxu0 %v935
    %1365 = vmatpush.bf16.msra.mxu0 %v931
    %1366 = vmatpush.bf16.msra.mxu0 %v927
    %1367 = vmatpush.bf16.msra.mxu0 %v923
    %1368 = vmatpush.bf16.msra.mxu0 %v919
    %1369 = vmatmul.bf16.gmra.mxu0 %v113
    %v1370 = vpop.f32.mrf.mxu0
    %v1371 = vadd.f32 %v1358, %v1370
    %v1372 = vpop.f32.mrf.mxu0
    %1373 = vdwg.mxu0
    %1374 = vmatpush.bf16.msra.mxu0 %v979
    %1375 = vmatpush.bf16.msra.mxu0 %v975
    %1376 = vmatpush.bf16.msra.mxu0 %v971
    %1377 = vmatpush.bf16.msra.mxu0 %v967
    %1378 = vmatpush.bf16.msra.mxu0 %v963
    %1379 = vmatpush.bf16.msra.mxu0 %v959
    %1380 = vmatpush.bf16.msra.mxu0 %v955
    %1381 = vmatpush.bf16.msra.mxu0 %v951
    %1382 = vmatmul.bf16.gmra.mxu0 %v114
    %v1383 = vpop.f32.mrf.mxu0
    %v1384 = vadd.f32 %v1371, %v1383
    %v1385 = vpop.f32.mrf.mxu0
    %1386 = vdwg.mxu0
    %1387 = vmatpush.bf16.msra.mxu0 %v1011
    %1388 = vmatpush.bf16.msra.mxu0 %v1007
    %1389 = vmatpush.bf16.msra.mxu0 %v1003
    %1390 = vmatpush.bf16.msra.mxu0 %v999
    %1391 = vmatpush.bf16.msra.mxu0 %v995
    %1392 = vmatpush.bf16.msra.mxu0 %v991
    %1393 = vmatpush.bf16.msra.mxu0 %v987
    %1394 = vmatpush.bf16.msra.mxu0 %v983
    %1395 = vmatmul.bf16.gmra.mxu0 %v115
    %v1396 = vpop.f32.mrf.mxu0
    %v1397 = vadd.f32 %v1384, %v1396
    %v1398 = vpop.f32.mrf.mxu0
    %1399 = vdwg.mxu0
    %1400 = vmatpush.bf16.msra.mxu0 %v1043
    %1401 = vmatpush.bf16.msra.mxu0 %v1039
    %1402 = vmatpush.bf16.msra.mxu0 %v1035
    %1403 = vmatpush.bf16.msra.mxu0 %v1031
    %1404 = vmatpush.bf16.msra.mxu0 %v1027
    %1405 = vmatpush.bf16.msra.mxu0 %v1023
    %1406 = vmatpush.bf16.msra.mxu0 %v1019
    %1407 = vmatpush.bf16.msra.mxu0 %v1015
    %1408 = vmatmul.bf16.gmra.mxu0 %v116
    %v1409 = vpop.f32.mrf.mxu0
    %v1410 = vadd.f32 %v1397, %v1409
    %v1411 = vpop.f32.mrf.mxu0
    %1412 = vdwg.mxu0
    %1413 = vmatpush.bf16.msra.mxu0 %v1075
    %1414 = vmatpush.bf16.msra.mxu0 %v1071
    %1415 = vmatpush.bf16.msra.mxu0 %v1067
    %1416 = vmatpush.bf16.msra.mxu0 %v1063
    %1417 = vmatpush.bf16.msra.mxu0 %v1059
    %1418 = vmatpush.bf16.msra.mxu0 %v1055
    %1419 = vmatpush.bf16.msra.mxu0 %v1051
    %1420 = vmatpush.bf16.msra.mxu0 %v1047
    %1421 = vmatmul.bf16.gmra.mxu0 %v117
    %v1422 = vpop.f32.mrf.mxu0
    %v1423 = vadd.f32 %v1410, %v1422
    %v1424 = vpop.f32.mrf.mxu0
    %1425 = vdwg.mxu0
    %1426 = vmatpush.bf16.msra.mxu0 %v916
    %1427 = vmatpush.bf16.msra.mxu0 %v912
    %1428 = vmatpush.bf16.msra.mxu0 %v908
    %1429 = vmatpush.bf16.msra.mxu0 %v904
    %1430 = vmatpush.bf16.msra.mxu0 %v900
    %1431 = vmatpush.bf16.msra.mxu0 %v896
    %1432 = vmatpush.bf16.msra.mxu0 %v892
    %1433 = vmatpush.bf16.msra.mxu0 %v888
    %1434 = vmatmul.bf16.gmra.mxu0 %v112
    %v1435 = vpop.f32.mrf.mxu0
    %v1436 = vadd.f32 0.0, %v1435
    %v1437 = vpop.f32.mrf.mxu0
    %1438 = vdwg.mxu0
    %1439 = vmatpush.bf16.msra.mxu0 %v948
    %1440 = vmatpush.bf16.msra.mxu0 %v944
    %1441 = vmatpush.bf16.msra.mxu0 %v940
    %1442 = vmatpush.bf16.msra.mxu0 %v936
    %1443 = vmatpush.bf16.msra.mxu0 %v932
    %1444 = vmatpush.bf16.msra.mxu0 %v928
    %1445 = vmatpush.bf16.msra.mxu0 %v924
    %1446 = vmatpush.bf16.msra.mxu0 %v920
    %1447 = vmatmul.bf16.gmra.mxu0 %v113
    %v1448 = vpop.f32.mrf.mxu0
    %v1449 = vadd.f32 %v1436, %v1448
    %v1450 = vpop.f32.mrf.mxu0
    %1451 = vdwg.mxu0
    %1452 = vmatpush.bf16.msra.mxu0 %v980
    %1453 = vmatpush.bf16.msra.mxu0 %v976
    %1454 = vmatpush.bf16.msra.mxu0 %v972
    %1455 = vmatpush.bf16.msra.mxu0 %v968
    %1456 = vmatpush.bf16.msra.mxu0 %v964
    %1457 = vmatpush.bf16.msra.mxu0 %v960
    %1458 = vmatpush.bf16.msra.mxu0 %v956
    %1459 = vmatpush.bf16.msra.mxu0 %v952
    %1460 = vmatmul.bf16.gmra.mxu0 %v114
    %v1461 = vpop.f32.mrf.mxu0
    %v1462 = vadd.f32 %v1449, %v1461
    %v1463 = vpop.f32.mrf.mxu0
    %1464 = vdwg.mxu0
    %1465 = vmatpush.bf16.msra.mxu0 %v1012
    %1466 = vmatpush.bf16.msra.mxu0 %v1008
    %1467 = vmatpush.bf16.msra.mxu0 %v1004
    %1468 = vmatpush.bf16.msra.mxu0 %v1000
    %1469 = vmatpush.bf16.msra.mxu0 %v996
    %1470 = vmatpush.bf16.msra.mxu0 %v992
    %1471 = vmatpush.bf16.msra.mxu0 %v988
    %1472 = vmatpush.bf16.msra.mxu0 %v984
    %1473 = vmatmul.bf16.gmra.mxu0 %v115
    %v1474 = vpop.f32.mrf.mxu0
    %v1475 = vadd.f32 %v1462, %v1474
    %v1476 = vpop.f32.mrf.mxu0
    %1477 = vdwg.mxu0
    %1478 = vmatpush.bf16.msra.mxu0 %v1044
    %1479 = vmatpush.bf16.msra.mxu0 %v1040
    %1480 = vmatpush.bf16.msra.mxu0 %v1036
    %1481 = vmatpush.bf16.msra.mxu0 %v1032
    %1482 = vmatpush.bf16.msra.mxu0 %v1028
    %1483 = vmatpush.bf16.msra.mxu0 %v1024
    %1484 = vmatpush.bf16.msra.mxu0 %v1020
    %1485 = vmatpush.bf16.msra.mxu0 %v1016
    %1486 = vmatmul.bf16.gmra.mxu0 %v116
    %v1487 = vpop.f32.mrf.mxu0
    %v1488 = vadd.f32 %v1475, %v1487
    %v1489 = vpop.f32.mrf.mxu0
    %1490 = vdwg.mxu0
    %1491 = vmatpush.bf16.msra.mxu0 %v1076
    %1492 = vmatpush.bf16.msra.mxu0 %v1072
    %1493 = vmatpush.bf16.msra.mxu0 %v1068
    %1494 = vmatpush.bf16.msra.mxu0 %v1064
    %1495 = vmatpush.bf16.msra.mxu0 %v1060
    %1496 = vmatpush.bf16.msra.mxu0 %v1056
    %1497 = vmatpush.bf16.msra.mxu0 %v1052
    %1498 = vmatpush.bf16.msra.mxu0 %v1048
    %1499 = vmatmul.bf16.gmra.mxu0 %v117
    %v1500 = vpop.f32.mrf.mxu0
    %v1501 = vadd.f32 %v1488, %v1500
    %v1502 = vpop.f32.mrf.mxu0
    %1503 = vdwg.mxu0
    %1504 = vmatpush.bf16.msra.mxu0 %v917
    %1505 = vmatpush.bf16.msra.mxu0 %v913
    %1506 = vmatpush.bf16.msra.mxu0 %v909
    %1507 = vmatpush.bf16.msra.mxu0 %v905
    %1508 = vmatpush.bf16.msra.mxu0 %v901
    %1509 = vmatpush.bf16.msra.mxu0 %v897
    %1510 = vmatpush.bf16.msra.mxu0 %v893
    %1511 = vmatpush.bf16.msra.mxu0 %v889
    %1512 = vmatmul.bf16.gmra.mxu0 %v112
    %v1513 = vpop.f32.mrf.mxu0
    %v1514 = vadd.f32 0.0, %v1513
    %v1515 = vpop.f32.mrf.mxu0
    %1516 = vdwg.mxu0
    %1517 = vmatpush.bf16.msra.mxu0 %v949
    %1518 = vmatpush.bf16.msra.mxu0 %v945
    %1519 = vmatpush.bf16.msra.mxu0 %v941
    %1520 = vmatpush.bf16.msra.mxu0 %v937
    %1521 = vmatpush.bf16.msra.mxu0 %v933
    %1522 = vmatpush.bf16.msra.mxu0 %v929
    %1523 = vmatpush.bf16.msra.mxu0 %v925
    %1524 = vmatpush.bf16.msra.mxu0 %v921
    %1525 = vmatmul.bf16.gmra.mxu0 %v113
    %v1526 = vpop.f32.mrf.mxu0
    %v1527 = vadd.f32 %v1514, %v1526
    %v1528 = vpop.f32.mrf.mxu0
    %1529 = vdwg.mxu0
    %1530 = vmatpush.bf16.msra.mxu0 %v981
    %1531 = vmatpush.bf16.msra.mxu0 %v977
    %1532 = vmatpush.bf16.msra.mxu0 %v973
    %1533 = vmatpush.bf16.msra.mxu0 %v969
    %1534 = vmatpush.bf16.msra.mxu0 %v965
    %1535 = vmatpush.bf16.msra.mxu0 %v961
    %1536 = vmatpush.bf16.msra.mxu0 %v957
    %1537 = vmatpush.bf16.msra.mxu0 %v953
    %1538 = vmatmul.bf16.gmra.mxu0 %v114
    %v1539 = vpop.f32.mrf.mxu0
    %v1540 = vadd.f32 %v1527, %v1539
    %v1541 = vpop.f32.mrf.mxu0
    %1542 = vdwg.mxu0
    %1543 = vmatpush.bf16.msra.mxu0 %v1013
    %1544 = vmatpush.bf16.msra.mxu0 %v1009
    %1545 = vmatpush.bf16.msra.mxu0 %v1005
    %1546 = vmatpush.bf16.msra.mxu0 %v1001
    %1547 = vmatpush.bf16.msra.mxu0 %v997
    %1548 = vmatpush.bf16.msra.mxu0 %v993
    %1549 = vmatpush.bf16.msra.mxu0 %v989
    %1550 = vmatpush.bf16.msra.mxu0 %v985
    %1551 = vmatmul.bf16.gmra.mxu0 %v115
    %v1552 = vpop.f32.mrf.mxu0
    %v1553 = vadd.f32 %v1540, %v1552
    %v1554 = vpop.f32.mrf.mxu0
    %1555 = vdwg.mxu0
    %1556 = vmatpush.bf16.msra.mxu0 %v1045
    %1557 = vmatpush.bf16.msra.mxu0 %v1041
    %1558 = vmatpush.bf16.msra.mxu0 %v1037
    %1559 = vmatpush.bf16.msra.mxu0 %v1033
    %1560 = vmatpush.bf16.msra.mxu0 %v1029
    %1561 = vmatpush.bf16.msra.mxu0 %v1025
    %1562 = vmatpush.bf16.msra.mxu0 %v1021
    %1563 = vmatpush.bf16.msra.mxu0 %v1017
    %1564 = vmatmul.bf16.gmra.mxu0 %v116
    %v1565 = vpop.f32.mrf.mxu0
    %v1566 = vadd.f32 %v1553, %v1565
    %v1567 = vpop.f32.mrf.mxu0
    %1568 = vdwg.mxu0
    %1569 = vmatpush.bf16.msra.mxu0 %v1077
    %1570 = vmatpush.bf16.msra.mxu0 %v1073
    %1571 = vmatpush.bf16.msra.mxu0 %v1069
    %1572 = vmatpush.bf16.msra.mxu0 %v1065
    %1573 = vmatpush.bf16.msra.mxu0 %v1061
    %1574 = vmatpush.bf16.msra.mxu0 %v1057
    %1575 = vmatpush.bf16.msra.mxu0 %v1053
    %1576 = vmatpush.bf16.msra.mxu0 %v1049
    %1577 = vmatmul.bf16.gmra.mxu0 %v117
    %v1578 = vpop.f32.mrf.mxu0
    %v1579 = vadd.f32 %v1566, %v1578
    %v1580 = vpop.f32.mrf.mxu0
    %1581 = vdwg.mxu0
    %vm1582 = vcmask 1041408
    %v1583 = vsel %vm1582, %v1345, 0.0
    %v1584 = vrot.slane %v1583, 4
    %v1585 = vadd.f32 %v1583, %v1584
    %v1586 = vrot.slane %v1585, 2
    %v1587 = vadd.f32 %v1585, %v1586
    %v1588 = vrot.slane %v1587, 1
    %v1589 = vadd.f32 %v1587, %v1588
    %v1590 = vsel %vm1582, %v1423, 0.0
    %v1591 = vrot.slane %v1590, 4
    %v1592 = vadd.f32 %v1590, %v1591
    %v1593 = vrot.slane %v1592, 2
    %v1594 = vadd.f32 %v1592, %v1593
    %v1595 = vrot.slane %v1594, 1
    %v1596 = vadd.f32 %v1594, %v1595
    %v1597 = vsel %vm1582, %v1501, 0.0
    %v1598 = vrot.slane %v1597, 4
    %v1599 = vadd.f32 %v1597, %v1598
    %v1600 = vrot.slane %v1599, 2
    %v1601 = vadd.f32 %v1599, %v1600
    %v1602 = vrot.slane %v1601, 1
    %v1603 = vadd.f32 %v1601, %v1602
    %v1604 = vsel %vm1582, %v1579, 0.0
    %v1605 = vrot.slane %v1604, 4
    %v1606 = vadd.f32 %v1604, %v1605
    %v1607 = vrot.slane %v1606, 2
    %v1608 = vadd.f32 %v1606, %v1607
    %v1609 = vrot.slane %v1608, 1
    %v1610 = vadd.f32 %v1608, %v1609
    %v1611 = vmul.f32 %v1345, %v1345
    %v1612 = vmul.f32 %v1423, %v1423
    %v1613 = vmul.f32 %v1501, %v1501
    %v1614 = vmul.f32 %v1579, %v1579
    %v1615 = vsel %vm1582, %v1611, 0.0
    %v1616 = vrot.slane %v1615, 4
    %v1617 = vadd.f32 %v1615, %v1616
    %v1618 = vrot.slane %v1617, 2
    %v1619 = vadd.f32 %v1617, %v1618
    %v1620 = vrot.slane %v1619, 1
    %v1621 = vadd.f32 %v1619, %v1620
    %v1622 = vsel %vm1582, %v1612, 0.0
    %v1623 = vrot.slane %v1622, 4
    %v1624 = vadd.f32 %v1622, %v1623
    %v1625 = vrot.slane %v1624, 2
    %v1626 = vadd.f32 %v1624, %v1625
    %v1627 = vrot.slane %v1626, 1
    %v1628 = vadd.f32 %v1626, %v1627
    %v1629 = vsel %vm1582, %v1613, 0.0
    %v1630 = vrot.slane %v1629, 4
    %v1631 = vadd.f32 %v1629, %v1630
    %v1632 = vrot.slane %v1631, 2
    %v1633 = vadd.f32 %v1631, %v1632
    %v1634 = vrot.slane %v1633, 1
    %v1635 = vadd.f32 %v1633, %v1634
    %v1636 = vsel %vm1582, %v1614, 0.0
    %v1637 = vrot.slane %v1636, 4
    %v1638 = vadd.f32 %v1636, %v1637
    %v1639 = vrot.slane %v1638, 2
    %v1640 = vadd.f32 %v1638, %v1639
    %v1641 = vrot.slane %v1640, 1
    %v1642 = vadd.f32 %v1640, %v1641
    %v1643 = vlaneseq
    %v1644 = vshrl.u32 %v1643, 7
    %vm1645 = vcmp.eq.s32.totalorder %v1644, 0
    %v1646 = vsel %vm1645, %v1589, %v1621
    %v1647 = vsel %vm1645, %v1596, %v1628
    %v1648 = vsel %vm1645, %v1603, %v1635
    %v1649 = vsel %vm1645, %v1610, %v1642
    %v1650 = vld [vmem:[#allocation5] sm:$0xff]
    %v1651 = vld [vmem:[#allocation5 + $0x8] sm:$0xff]
    %v1652 = vld [vmem:[#allocation5 + $0x10] sm:$0xff]
    %v1653 = vld [vmem:[#allocation5 + $0x18] sm:$0xff]
    %v1654 = vld [vmem:[#allocation5 + $0x20] sm:$0xff]
    %v1655 = vld [vmem:[#allocation5 + $0x28] sm:$0xff]
    %v1656 = vld [vmem:[#allocation5 + $0x30] sm:$0xff]
    %v1657 = vld [vmem:[#allocation5 + $0x38] sm:$0xff]
    %v1658 = vld [vmem:[#allocation5 + $0x40] sm:$0xff]
    %v1659 = vld [vmem:[#allocation5 + $0x48] sm:$0xff]
    %v1660 = vld [vmem:[#allocation5 + $0x50] sm:$0xff]
    %v1661 = vld [vmem:[#allocation5 + $0x58] sm:$0xff]
    %v1662 = vld [vmem:[#allocation5 + $0x60] sm:$0xff]
    %v1663 = vld [vmem:[#allocation5 + $0x68] sm:$0xff]
    %v1664 = vld [vmem:[#allocation5 + $0x70] sm:$0xff]
    %v1665 = vld [vmem:[#allocation5 + $0x78] sm:$0xff]
    %v1666 = vld [vmem:[#allocation5 + $0x80] sm:$0xff]
    %v1667 = vld [vmem:[#allocation5 + $0x88] sm:$0xff]
    %v1668 = vld [vmem:[#allocation5 + $0x90] sm:$0xff]
    %v1669 = vld [vmem:[#allocation5 + $0x98] sm:$0xff]
    %v1670 = vld [vmem:[#allocation5 + $0xa0] sm:$0xff]
    %v1671 = vld [vmem:[#allocation5 + $0xa8] sm:$0xff]
    %v1672 = vld [vmem:[#allocation5 + $0xb0] sm:$0xff]
    %v1673 = vld [vmem:[#allocation5 + $0xb8] sm:$0xff]
    %v1674 = vld [vmem:[#allocation5 + $0xc0] sm:$0xff]
    %v1675 = vld [vmem:[#allocation5 + $0xc8] sm:$0xff]
    %v1676 = vld [vmem:[#allocation5 + $0xd0] sm:$0xff]
    %v1677 = vld [vmem:[#allocation5 + $0xd8] sm:$0xff]
    %v1678 = vld [vmem:[#allocation5 + $0xe0] sm:$0xff]
    %v1679 = vld [vmem:[#allocation5 + $0xe8] sm:$0xff]
    %v1680 = vld [vmem:[#allocation5 + $0xf0] sm:$0xff]
    %v1681 = vld [vmem:[#allocation5 + $0xf8] sm:$0xff]
    %v1682 = vld [vmem:[#allocation5 + $0x100] sm:$0xff]
    %v1683 = vld [vmem:[#allocation5 + $0x108] sm:$0xff]
    %v1684 = vld [vmem:[#allocation5 + $0x110] sm:$0xff]
    %v1685 = vld [vmem:[#allocation5 + $0x118] sm:$0xff]
    %v1686 = vld [vmem:[#allocation5 + $0x120] sm:$0xff]
    %v1687 = vld [vmem:[#allocation5 + $0x128] sm:$0xff]
    %v1688 = vld [vmem:[#allocation5 + $0x130] sm:$0xff]
    %v1689 = vld [vmem:[#allocation5 + $0x138] sm:$0xff]
    %v1690 = vld [vmem:[#allocation5 + $0x140] sm:$0xff]
    %v1691 = vld [vmem:[#allocation5 + $0x148] sm:$0xff]
    %v1692 = vld [vmem:[#allocation5 + $0x150] sm:$0xff]
    %v1693 = vld [vmem:[#allocation5 + $0x158] sm:$0xff]
    %v1694 = vld [vmem:[#allocation5 + $0x160] sm:$0xff]
    %v1695 = vld [vmem:[#allocation5 + $0x168] sm:$0xff]
    %v1696 = vld [vmem:[#allocation5 + $0x170] sm:$0xff]
    %v1697 = vld [vmem:[#allocation5 + $0x178] sm:$0xff]
    %v1698 = vld [vmem:[#allocation5 + $0x180] sm:$0xff]
    %v1699 = vld [vmem:[#allocation5 + $0x188] sm:$0xff]
    %v1700 = vld [vmem:[#allocation5 + $0x190] sm:$0xff]
    %v1701 = vld [vmem:[#allocation5 + $0x198] sm:$0xff]
    %v1702 = vld [vmem:[#allocation5 + $0x1a0] sm:$0xff]
    %v1703 = vld [vmem:[#allocation5 + $0x1a8] sm:$0xff]
    %v1704 = vld [vmem:[#allocation5 + $0x1b0] sm:$0xff]
    %v1705 = vld [vmem:[#allocation5 + $0x1b8] sm:$0xff]
    %v1706 = vld [vmem:[#allocation5 + $0x1c0] sm:$0xff]
    %v1707 = vld [vmem:[#allocation5 + $0x1c8] sm:$0xff]
    %v1708 = vld [vmem:[#allocation5 + $0x1d0] sm:$0xff]
    %v1709 = vld [vmem:[#allocation5 + $0x1d8] sm:$0xff]
    %v1710 = vld [vmem:[#allocation5 + $0x1e0] sm:$0xff]
    %v1711 = vld [vmem:[#allocation5 + $0x1e8] sm:$0xff]
    %v1712 = vld [vmem:[#allocation5 + $0x1f0] sm:$0xff]
    %v1713 = vld [vmem:[#allocation5 + $0x1f8] sm:$0xff]
    %v1714 = vld [vmem:[#allocation5 + $0x200] sm:$0xff]
    %v1715 = vld [vmem:[#allocation5 + $0x208] sm:$0xff]
    %v1716 = vld [vmem:[#allocation5 + $0x210] sm:$0xff]
    %v1717 = vld [vmem:[#allocation5 + $0x218] sm:$0xff]
    %v1718 = vld [vmem:[#allocation5 + $0x220] sm:$0xff]
    %v1719 = vld [vmem:[#allocation5 + $0x228] sm:$0xff]
    %v1720 = vld [vmem:[#allocation5 + $0x230] sm:$0xff]
    %v1721 = vld [vmem:[#allocation5 + $0x238] sm:$0xff]
    %v1722 = vld [vmem:[#allocation5 + $0x240] sm:$0xff]
    %v1723 = vld [vmem:[#allocation5 + $0x248] sm:$0xff]
    %v1724 = vld [vmem:[#allocation5 + $0x250] sm:$0xff]
    %v1725 = vld [vmem:[#allocation5 + $0x258] sm:$0xff]
    %v1726 = vld [vmem:[#allocation5 + $0x260] sm:$0xff]
    %v1727 = vld [vmem:[#allocation5 + $0x268] sm:$0xff]
    %v1728 = vld [vmem:[#allocation5 + $0x270] sm:$0xff]
    %v1729 = vld [vmem:[#allocation5 + $0x278] sm:$0xff]
    %v1730 = vld [vmem:[#allocation5 + $0x280] sm:$0xff]
    %v1731 = vld [vmem:[#allocation5 + $0x288] sm:$0xff]
    %v1732 = vld [vmem:[#allocation5 + $0x290] sm:$0xff]
    %v1733 = vld [vmem:[#allocation5 + $0x298] sm:$0xff]
    %v1734 = vld [vmem:[#allocation5 + $0x2a0] sm:$0xff]
    %v1735 = vld [vmem:[#allocation5 + $0x2a8] sm:$0xff]
    %v1736 = vld [vmem:[#allocation5 + $0x2b0] sm:$0xff]
    %v1737 = vld [vmem:[#allocation5 + $0x2b8] sm:$0xff]
    %v1738 = vld [vmem:[#allocation5 + $0x2c0] sm:$0xff]
    %v1739 = vld [vmem:[#allocation5 + $0x2c8] sm:$0xff]
    %v1740 = vld [vmem:[#allocation5 + $0x2d0] sm:$0xff]
    %v1741 = vld [vmem:[#allocation5 + $0x2d8] sm:$0xff]
    %v1742 = vld [vmem:[#allocation5 + $0x2e0] sm:$0xff]
    %v1743 = vld [vmem:[#allocation5 + $0x2e8] sm:$0xff]
    %v1744 = vld [vmem:[#allocation5 + $0x2f0] sm:$0xff]
    %v1745 = vld [vmem:[#allocation5 + $0x2f8] sm:$0xff]
    %v1746 = vld [vmem:[#allocation5 + $0x300] sm:$0xff]
    %v1747 = vld [vmem:[#allocation5 + $0x308] sm:$0xff]
    %v1748 = vld [vmem:[#allocation5 + $0x310] sm:$0xff]
    %v1749 = vld [vmem:[#allocation5 + $0x318] sm:$0xff]
    %v1750 = vld [vmem:[#allocation5 + $0x320] sm:$0xff]
    %v1751 = vld [vmem:[#allocation5 + $0x328] sm:$0xff]
    %v1752 = vld [vmem:[#allocation5 + $0x330] sm:$0xff]
    %v1753 = vld [vmem:[#allocation5 + $0x338] sm:$0xff]
    %v1754 = vld [vmem:[#allocation5 + $0x340] sm:$0xff]
    %v1755 = vld [vmem:[#allocation5 + $0x348] sm:$0xff]
    %v1756 = vld [vmem:[#allocation5 + $0x350] sm:$0xff]
    %v1757 = vld [vmem:[#allocation5 + $0x358] sm:$0xff]
    %v1758 = vld [vmem:[#allocation5 + $0x360] sm:$0xff]
    %v1759 = vld [vmem:[#allocation5 + $0x368] sm:$0xff]
    %v1760 = vld [vmem:[#allocation5 + $0x370] sm:$0xff]
    %v1761 = vld [vmem:[#allocation5 + $0x378] sm:$0xff]
    %v1762 = vld [vmem:[#allocation5 + $0x380] sm:$0xff]
    %v1763 = vld [vmem:[#allocation5 + $0x388] sm:$0xff]
    %v1764 = vld [vmem:[#allocation5 + $0x390] sm:$0xff]
    %v1765 = vld [vmem:[#allocation5 + $0x398] sm:$0xff]
    %v1766 = vld [vmem:[#allocation5 + $0x3a0] sm:$0xff]
    %v1767 = vld [vmem:[#allocation5 + $0x3a8] sm:$0xff]
    %v1768 = vld [vmem:[#allocation5 + $0x3b0] sm:$0xff]
    %v1769 = vld [vmem:[#allocation5 + $0x3b8] sm:$0xff]
    %v1770 = vld [vmem:[#allocation5 + $0x3c0] sm:$0xff]
    %v1771 = vld [vmem:[#allocation5 + $0x3c8] sm:$0xff]
    %v1772 = vld [vmem:[#allocation5 + $0x3d0] sm:$0xff]
    %v1773 = vld [vmem:[#allocation5 + $0x3d8] sm:$0xff]
    %v1774 = vld [vmem:[#allocation5 + $0x3e0] sm:$0xff]
    %v1775 = vld [vmem:[#allocation5 + $0x3e8] sm:$0xff]
    %v1776 = vld [vmem:[#allocation5 + $0x3f0] sm:$0xff]
    %v1777 = vld [vmem:[#allocation5 + $0x3f8] sm:$0xff]
    %v1778 = vld [vmem:[#allocation5 + $0x400] sm:$0xff]
    %v1779 = vld [vmem:[#allocation5 + $0x408] sm:$0xff]
    %v1780 = vld [vmem:[#allocation5 + $0x410] sm:$0xff]
    %v1781 = vld [vmem:[#allocation5 + $0x418] sm:$0xff]
    %v1782 = vld [vmem:[#allocation5 + $0x420] sm:$0xff]
    %v1783 = vld [vmem:[#allocation5 + $0x428] sm:$0xff]
    %v1784 = vld [vmem:[#allocation5 + $0x430] sm:$0xff]
    %v1785 = vld [vmem:[#allocation5 + $0x438] sm:$0xff]
    %v1786 = vld [vmem:[#allocation5 + $0x440] sm:$0xff]
    %v1787 = vld [vmem:[#allocation5 + $0x448] sm:$0xff]
    %v1788 = vld [vmem:[#allocation5 + $0x450] sm:$0xff]
    %v1789 = vld [vmem:[#allocation5 + $0x458] sm:$0xff]
    %v1790 = vld [vmem:[#allocation5 + $0x460] sm:$0xff]
    %v1791 = vld [vmem:[#allocation5 + $0x468] sm:$0xff]
    %v1792 = vld [vmem:[#allocation5 + $0x470] sm:$0xff]
    %v1793 = vld [vmem:[#allocation5 + $0x478] sm:$0xff]
    %v1794 = vld [vmem:[#allocation5 + $0x480] sm:$0xff]
    %v1795 = vld [vmem:[#allocation5 + $0x488] sm:$0xff]
    %v1796 = vld [vmem:[#allocation5 + $0x490] sm:$0xff]
    %v1797 = vld [vmem:[#allocation5 + $0x498] sm:$0xff]
    %v1798 = vld [vmem:[#allocation5 + $0x4a0] sm:$0xff]
    %v1799 = vld [vmem:[#allocation5 + $0x4a8] sm:$0xff]
    %v1800 = vld [vmem:[#allocation5 + $0x4b0] sm:$0xff]
    %v1801 = vld [vmem:[#allocation5 + $0x4b8] sm:$0xff]
    %v1802 = vld [vmem:[#allocation5 + $0x4c0] sm:$0xff]
    %v1803 = vld [vmem:[#allocation5 + $0x4c8] sm:$0xff]
    %v1804 = vld [vmem:[#allocation5 + $0x4d0] sm:$0xff]
    %v1805 = vld [vmem:[#allocation5 + $0x4d8] sm:$0xff]
    %v1806 = vld [vmem:[#allocation5 + $0x4e0] sm:$0xff]
    %v1807 = vld [vmem:[#allocation5 + $0x4e8] sm:$0xff]
    %v1808 = vld [vmem:[#allocation5 + $0x4f0] sm:$0xff]
    %v1809 = vld [vmem:[#allocation5 + $0x4f8] sm:$0xff]
    %v1810 = vld [vmem:[#allocation5 + $0x500] sm:$0xff]
    %v1811 = vld [vmem:[#allocation5 + $0x508] sm:$0xff]
    %v1812 = vld [vmem:[#allocation5 + $0x510] sm:$0xff]
    %v1813 = vld [vmem:[#allocation5 + $0x518] sm:$0xff]
    %v1814 = vld [vmem:[#allocation5 + $0x520] sm:$0xff]
    %v1815 = vld [vmem:[#allocation5 + $0x528] sm:$0xff]
    %v1816 = vld [vmem:[#allocation5 + $0x530] sm:$0xff]
    %v1817 = vld [vmem:[#allocation5 + $0x538] sm:$0xff]
    %v1818 = vld [vmem:[#allocation5 + $0x540] sm:$0xff]
    %v1819 = vld [vmem:[#allocation5 + $0x548] sm:$0xff]
    %v1820 = vld [vmem:[#allocation5 + $0x550] sm:$0xff]
    %v1821 = vld [vmem:[#allocation5 + $0x558] sm:$0xff]
    %v1822 = vld [vmem:[#allocation5 + $0x560] sm:$0xff]
    %v1823 = vld [vmem:[#allocation5 + $0x568] sm:$0xff]
    %v1824 = vld [vmem:[#allocation5 + $0x570] sm:$0xff]
    %v1825 = vld [vmem:[#allocation5 + $0x578] sm:$0xff]
    %v1826 = vld [vmem:[#allocation5 + $0x580] sm:$0xff]
    %v1827 = vld [vmem:[#allocation5 + $0x588] sm:$0xff]
    %v1828 = vld [vmem:[#allocation5 + $0x590] sm:$0xff]
    %v1829 = vld [vmem:[#allocation5 + $0x598] sm:$0xff]
    %v1830 = vld [vmem:[#allocation5 + $0x5a0] sm:$0xff]
    %v1831 = vld [vmem:[#allocation5 + $0x5a8] sm:$0xff]
    %v1832 = vld [vmem:[#allocation5 + $0x5b0] sm:$0xff]
    %v1833 = vld [vmem:[#allocation5 + $0x5b8] sm:$0xff]
    %v1834 = vld [vmem:[#allocation5 + $0x5c0] sm:$0xff]
    %v1835 = vld [vmem:[#allocation5 + $0x5c8] sm:$0xff]
    %v1836 = vld [vmem:[#allocation5 + $0x5d0] sm:$0xff]
    %v1837 = vld [vmem:[#allocation5 + $0x5d8] sm:$0xff]
    %v1838 = vld [vmem:[#allocation5 + $0x5e0] sm:$0xff]
    %v1839 = vld [vmem:[#allocation5 + $0x5e8] sm:$0xff]
    %v1840 = vld [vmem:[#allocation5 + $0x5f0] sm:$0xff]
    %v1841 = vld [vmem:[#allocation5 + $0x5f8] sm:$0xff]
    %v1842 = vld [vmem:[#allocation5 + $0x600] sm:$0xff]
    %v1843 = vld [vmem:[#allocation5 + $0x608] sm:$0xff]
    %v1844 = vld [vmem:[#allocation5 + $0x610] sm:$0xff]
    %v1845 = vld [vmem:[#allocation5 + $0x618] sm:$0xff]
    %v1846 = vld [vmem:[#allocation5 + $0x620] sm:$0xff]
    %v1847 = vld [vmem:[#allocation5 + $0x628] sm:$0xff]
    %v1848 = vld [vmem:[#allocation5 + $0x630] sm:$0xff]
    %v1849 = vld [vmem:[#allocation5 + $0x638] sm:$0xff]
    %v1850 = vld [vmem:[#allocation5 + $0x640] sm:$0xff]
    %v1851 = vld [vmem:[#allocation5 + $0x648] sm:$0xff]
    %v1852 = vld [vmem:[#allocation5 + $0x650] sm:$0xff]
    %v1853 = vld [vmem:[#allocation5 + $0x658] sm:$0xff]
    %v1854 = vld [vmem:[#allocation5 + $0x660] sm:$0xff]
    %v1855 = vld [vmem:[#allocation5 + $0x668] sm:$0xff]
    %v1856 = vld [vmem:[#allocation5 + $0x670] sm:$0xff]
    %v1857 = vld [vmem:[#allocation5 + $0x678] sm:$0xff]
    %v1858 = vld [vmem:[#allocation5 + $0x680] sm:$0xff]
    %v1859 = vld [vmem:[#allocation5 + $0x688] sm:$0xff]
    %v1860 = vld [vmem:[#allocation5 + $0x690] sm:$0xff]
    %v1861 = vld [vmem:[#allocation5 + $0x698] sm:$0xff]
    %v1862 = vld [vmem:[#allocation5 + $0x6a0] sm:$0xff]
    %v1863 = vld [vmem:[#allocation5 + $0x6a8] sm:$0xff]
    %v1864 = vld [vmem:[#allocation5 + $0x6b0] sm:$0xff]
    %v1865 = vld [vmem:[#allocation5 + $0x6b8] sm:$0xff]
    %v1866 = vld [vmem:[#allocation5 + $0x6c0] sm:$0xff]
    %v1867 = vld [vmem:[#allocation5 + $0x6c8] sm:$0xff]
    %v1868 = vld [vmem:[#allocation5 + $0x6d0] sm:$0xff]
    %v1869 = vld [vmem:[#allocation5 + $0x6d8] sm:$0xff]
    %v1870 = vld [vmem:[#allocation5 + $0x6e0] sm:$0xff]
    %v1871 = vld [vmem:[#allocation5 + $0x6e8] sm:$0xff]
    %v1872 = vld [vmem:[#allocation5 + $0x6f0] sm:$0xff]
    %v1873 = vld [vmem:[#allocation5 + $0x6f8] sm:$0xff]
    %v1874 = vld [vmem:[#allocation5 + $0x700] sm:$0xff]
    %v1875 = vld [vmem:[#allocation5 + $0x708] sm:$0xff]
    %v1876 = vld [vmem:[#allocation5 + $0x710] sm:$0xff]
    %v1877 = vld [vmem:[#allocation5 + $0x718] sm:$0xff]
    %v1878 = vld [vmem:[#allocation5 + $0x720] sm:$0xff]
    %v1879 = vld [vmem:[#allocation5 + $0x728] sm:$0xff]
    %v1880 = vld [vmem:[#allocation5 + $0x730] sm:$0xff]
    %v1881 = vld [vmem:[#allocation5 + $0x738] sm:$0xff]
    %v1882 = vld [vmem:[#allocation5 + $0x740] sm:$0xff]
    %v1883 = vld [vmem:[#allocation5 + $0x748] sm:$0xff]
    %v1884 = vld [vmem:[#allocation5 + $0x750] sm:$0xff]
    %v1885 = vld [vmem:[#allocation5 + $0x758] sm:$0xff]
    %v1886 = vld [vmem:[#allocation5 + $0x760] sm:$0xff]
    %v1887 = vld [vmem:[#allocation5 + $0x768] sm:$0xff]
    %v1888 = vld [vmem:[#allocation5 + $0x770] sm:$0xff]
    %v1889 = vld [vmem:[#allocation5 + $0x778] sm:$0xff]
    %v1890 = vld [vmem:[#allocation5 + $0x780] sm:$0xff]
    %v1891 = vld [vmem:[#allocation5 + $0x788] sm:$0xff]
    %v1892 = vld [vmem:[#allocation5 + $0x790] sm:$0xff]
    %v1893 = vld [vmem:[#allocation5 + $0x798] sm:$0xff]
    %v1894 = vld [vmem:[#allocation5 + $0x7a0] sm:$0xff]
    %v1895 = vld [vmem:[#allocation5 + $0x7a8] sm:$0xff]
    %v1896 = vld [vmem:[#allocation5 + $0x7b0] sm:$0xff]
    %v1897 = vld [vmem:[#allocation5 + $0x7b8] sm:$0xff]
    %v1898 = vld [vmem:[#allocation5 + $0x7c0] sm:$0xff]
    %v1899 = vld [vmem:[#allocation5 + $0x7c8] sm:$0xff]
    %v1900 = vld [vmem:[#allocation5 + $0x7d0] sm:$0xff]
    %v1901 = vld [vmem:[#allocation5 + $0x7d8] sm:$0xff]
    %v1902 = vld [vmem:[#allocation5 + $0x7e0] sm:$0xff]
    %v1903 = vld [vmem:[#allocation5 + $0x7e8] sm:$0xff]
    %v1904 = vld [vmem:[#allocation5 + $0x7f0] sm:$0xff]
    %v1905 = vld [vmem:[#allocation5 + $0x7f8] sm:$0xff]
    %1906 = vmatpush.msra.mxu0 %v1710
    %1907 = vmatpush.msra.mxu0 %v1706
    %1908 = vmatpush.msra.mxu0 %v1702
    %1909 = vmatpush.msra.mxu0 %v1698
    %1910 = vmatpush.msra.mxu0 %v1694
    %1911 = vmatpush.msra.mxu0 %v1690
    %1912 = vmatpush.msra.mxu0 %v1686
    %1913 = vmatpush.msra.mxu0 %v1682
    %1914 = vmatpush.msra.mxu0 %v1678
    %1915 = vmatpush.msra.mxu0 %v1674
    %1916 = vmatpush.msra.mxu0 %v1670
    %1917 = vmatpush.msra.mxu0 %v1666
    %1918 = vmatpush.msra.mxu0 %v1662
    %1919 = vmatpush.msra.mxu0 %v1658
    %1920 = vmatpush.msra.mxu0 %v1654
    %1921 = vmatpush.msra.mxu0 %v1650
    %1922 = vmatmul.f32.gmra.mxu0 %v1646
    %v1923 = vpop.f32.mrf.mxu0
    %v1924 = vadd.f32 0.0, %v1923
    %1925 = vdwg.mxu0
    %1926 = vmatpush.msra.mxu0 %v1774
    %1927 = vmatpush.msra.mxu0 %v1770
    %1928 = vmatpush.msra.mxu0 %v1766
    %1929 = vmatpush.msra.mxu0 %v1762
    %1930 = vmatpush.msra.mxu0 %v1758
    %1931 = vmatpush.msra.mxu0 %v1754
    %1932 = vmatpush.msra.mxu0 %v1750
    %1933 = vmatpush.msra.mxu0 %v1746
    %1934 = vmatpush.msra.mxu0 %v1742
    %1935 = vmatpush.msra.mxu0 %v1738
    %1936 = vmatpush.msra.mxu0 %v1734
    %1937 = vmatpush.msra.mxu0 %v1730
    %1938 = vmatpush.msra.mxu0 %v1726
    %1939 = vmatpush.msra.mxu0 %v1722
    %1940 = vmatpush.msra.mxu0 %v1718
    %1941 = vmatpush.msra.mxu0 %v1714
    %1942 = vmatmul.f32.gmra.mxu0 %v1647
    %v1943 = vpop.f32.mrf.mxu0
    %v1944 = vadd.f32 %v1924, %v1943
    %1945 = vdwg.mxu0
    %1946 = vmatpush.msra.mxu0 %v1838
    %1947 = vmatpush.msra.mxu0 %v1834
    %1948 = vmatpush.msra.mxu0 %v1830
    %1949 = vmatpush.msra.mxu0 %v1826
    %1950 = vmatpush.msra.mxu0 %v1822
    %1951 = vmatpush.msra.mxu0 %v1818
    %1952 = vmatpush.msra.mxu0 %v1814
    %1953 = vmatpush.msra.mxu0 %v1810
    %1954 = vmatpush.msra.mxu0 %v1806
    %1955 = vmatpush.msra.mxu0 %v1802
    %1956 = vmatpush.msra.mxu0 %v1798
    %1957 = vmatpush.msra.mxu0 %v1794
    %1958 = vmatpush.msra.mxu0 %v1790
    %1959 = vmatpush.msra.mxu0 %v1786
    %1960 = vmatpush.msra.mxu0 %v1782
    %1961 = vmatpush.msra.mxu0 %v1778
    %1962 = vmatmul.f32.gmra.mxu0 %v1648
    %v1963 = vpop.f32.mrf.mxu0
    %v1964 = vadd.f32 %v1944, %v1963
    %1965 = vdwg.mxu0
    %1966 = vmatpush.msra.mxu0 %v1902
    %1967 = vmatpush.msra.mxu0 %v1898
    %1968 = vmatpush.msra.mxu0 %v1894
    %1969 = vmatpush.msra.mxu0 %v1890
    %1970 = vmatpush.msra.mxu0 %v1886
    %1971 = vmatpush.msra.mxu0 %v1882
    %1972 = vmatpush.msra.mxu0 %v1878
    %1973 = vmatpush.msra.mxu0 %v1874
    %1974 = vmatpush.msra.mxu0 %v1870
    %1975 = vmatpush.msra.mxu0 %v1866
    %1976 = vmatpush.msra.mxu0 %v1862
    %1977 = vmatpush.msra.mxu0 %v1858
    %1978 = vmatpush.msra.mxu0 %v1854
    %1979 = vmatpush.msra.mxu0 %v1850
    %1980 = vmatpush.msra.mxu0 %v1846
    %1981 = vmatpush.msra.mxu0 %v1842
    %1982 = vmatmul.f32.gmra.mxu0 %v1649
    %v1983 = vpop.f32.mrf.mxu0
    %v1984 = vadd.f32 %v1964, %v1983
    %1985 = vdwg.mxu0
    %1986 = vmatpush.msra.mxu0 %v1711
    %1987 = vmatpush.msra.mxu0 %v1707
    %1988 = vmatpush.msra.mxu0 %v1703
    %1989 = vmatpush.msra.mxu0 %v1699
    %1990 = vmatpush.msra.mxu0 %v1695
    %1991 = vmatpush.msra.mxu0 %v1691
    %1992 = vmatpush.msra.mxu0 %v1687
    %1993 = vmatpush.msra.mxu0 %v1683
    %1994 = vmatpush.msra.mxu0 %v1679
    %1995 = vmatpush.msra.mxu0 %v1675
    %1996 = vmatpush.msra.mxu0 %v1671
    %1997 = vmatpush.msra.mxu0 %v1667
    %1998 = vmatpush.msra.mxu0 %v1663
    %1999 = vmatpush.msra.mxu0 %v1659
    %2000 = vmatpush.msra.mxu0 %v1655
    %2001 = vmatpush.msra.mxu0 %v1651
    %2002 = vmatmul.f32.gmra.mxu0 %v1646
    %v2003 = vpop.f32.mrf.mxu0
    %v2004 = vadd.f32 0.0, %v2003
    %2005 = vdwg.mxu0
    %2006 = vmatpush.msra.mxu0 %v1775
    %2007 = vmatpush.msra.mxu0 %v1771
    %2008 = vmatpush.msra.mxu0 %v1767
    %2009 = vmatpush.msra.mxu0 %v1763
    %2010 = vmatpush.msra.mxu0 %v1759
    %2011 = vmatpush.msra.mxu0 %v1755
    %2012 = vmatpush.msra.mxu0 %v1751
    %2013 = vmatpush.msra.mxu0 %v1747
    %2014 = vmatpush.msra.mxu0 %v1743
    %2015 = vmatpush.msra.mxu0 %v1739
    %2016 = vmatpush.msra.mxu0 %v1735
    %2017 = vmatpush.msra.mxu0 %v1731
    %2018 = vmatpush.msra.mxu0 %v1727
    %2019 = vmatpush.msra.mxu0 %v1723
    %2020 = vmatpush.msra.mxu0 %v1719
    %2021 = vmatpush.msra.mxu0 %v1715
    %2022 = vmatmul.f32.gmra.mxu0 %v1647
    %v2023 = vpop.f32.mrf.mxu0
    %v2024 = vadd.f32 %v2004, %v2023
    %2025 = vdwg.mxu0
    %2026 = vmatpush.msra.mxu0 %v1839
    %2027 = vmatpush.msra.mxu0 %v1835
    %2028 = vmatpush.msra.mxu0 %v1831
    %2029 = vmatpush.msra.mxu0 %v1827
    %2030 = vmatpush.msra.mxu0 %v1823
    %2031 = vmatpush.msra.mxu0 %v1819
    %2032 = vmatpush.msra.mxu0 %v1815
    %2033 = vmatpush.msra.mxu0 %v1811
    %2034 = vmatpush.msra.mxu0 %v1807
    %2035 = vmatpush.msra.mxu0 %v1803
    %2036 = vmatpush.msra.mxu0 %v1799
    %2037 = vmatpush.msra.mxu0 %v1795
    %2038 = vmatpush.msra.mxu0 %v1791
    %2039 = vmatpush.msra.mxu0 %v1787
    %2040 = vmatpush.msra.mxu0 %v1783
    %2041 = vmatpush.msra.mxu0 %v1779
    %2042 = vmatmul.f32.gmra.mxu0 %v1648
    %v2043 = vpop.f32.mrf.mxu0
    %v2044 = vadd.f32 %v2024, %v2043
    %2045 = vdwg.mxu0
    %2046 = vmatpush.msra.mxu0 %v1903
    %2047 = vmatpush.msra.mxu0 %v1899
    %2048 = vmatpush.msra.mxu0 %v1895
    %2049 = vmatpush.msra.mxu0 %v1891
    %2050 = vmatpush.msra.mxu0 %v1887
    %2051 = vmatpush.msra.mxu0 %v1883
    %2052 = vmatpush.msra.mxu0 %v1879
    %2053 = vmatpush.msra.mxu0 %v1875
    %2054 = vmatpush.msra.mxu0 %v1871
    %2055 = vmatpush.msra.mxu0 %v1867
    %2056 = vmatpush.msra.mxu0 %v1863
    %2057 = vmatpush.msra.mxu0 %v1859
    %2058 = vmatpush.msra.mxu0 %v1855
    %2059 = vmatpush.msra.mxu0 %v1851
    %2060 = vmatpush.msra.mxu0 %v1847
    %2061 = vmatpush.msra.mxu0 %v1843
    %2062 = vmatmul.f32.gmra.mxu0 %v1649
    %v2063 = vpop.f32.mrf.mxu0
    %v2064 = vadd.f32 %v2044, %v2063
    %2065 = vdwg.mxu0
    %2066 = vmatpush.msra.mxu0 %v1712
    %2067 = vmatpush.msra.mxu0 %v1708
    %2068 = vmatpush.msra.mxu0 %v1704
    %2069 = vmatpush.msra.mxu0 %v1700
    %2070 = vmatpush.msra.mxu0 %v1696
    %2071 = vmatpush.msra.mxu0 %v1692
    %2072 = vmatpush.msra.mxu0 %v1688
    %2073 = vmatpush.msra.mxu0 %v1684
    %2074 = vmatpush.msra.mxu0 %v1680
    %2075 = vmatpush.msra.mxu0 %v1676
    %2076 = vmatpush.msra.mxu0 %v1672
    %2077 = vmatpush.msra.mxu0 %v1668
    %2078 = vmatpush.msra.mxu0 %v1664
    %2079 = vmatpush.msra.mxu0 %v1660
    %2080 = vmatpush.msra.mxu0 %v1656
    %2081 = vmatpush.msra.mxu0 %v1652
    %2082 = vmatmul.f32.gmra.mxu0 %v1646
    %v2083 = vpop.f32.mrf.mxu0
    %v2084 = vadd.f32 0.0, %v2083
    %2085 = vdwg.mxu0
    %2086 = vmatpush.msra.mxu0 %v1776
    %2087 = vmatpush.msra.mxu0 %v1772
    %2088 = vmatpush.msra.mxu0 %v1768
    %2089 = vmatpush.msra.mxu0 %v1764
    %2090 = vmatpush.msra.mxu0 %v1760
    %2091 = vmatpush.msra.mxu0 %v1756
    %2092 = vmatpush.msra.mxu0 %v1752
    %2093 = vmatpush.msra.mxu0 %v1748
    %2094 = vmatpush.msra.mxu0 %v1744
    %2095 = vmatpush.msra.mxu0 %v1740
    %2096 = vmatpush.msra.mxu0 %v1736
    %2097 = vmatpush.msra.mxu0 %v1732
    %2098 = vmatpush.msra.mxu0 %v1728
    %2099 = vmatpush.msra.mxu0 %v1724
    %2100 = vmatpush.msra.mxu0 %v1720
    %2101 = vmatpush.msra.mxu0 %v1716
    %2102 = vmatmul.f32.gmra.mxu0 %v1647
    %v2103 = vpop.f32.mrf.mxu0
    %v2104 = vadd.f32 %v2084, %v2103
    %2105 = vdwg.mxu0
    %2106 = vmatpush.msra.mxu0 %v1840
    %2107 = vmatpush.msra.mxu0 %v1836
    %2108 = vmatpush.msra.mxu0 %v1832
    %2109 = vmatpush.msra.mxu0 %v1828
    %2110 = vmatpush.msra.mxu0 %v1824
    %2111 = vmatpush.msra.mxu0 %v1820
    %2112 = vmatpush.msra.mxu0 %v1816
    %2113 = vmatpush.msra.mxu0 %v1812
    %2114 = vmatpush.msra.mxu0 %v1808
    %2115 = vmatpush.msra.mxu0 %v1804
    %2116 = vmatpush.msra.mxu0 %v1800
    %2117 = vmatpush.msra.mxu0 %v1796
    %2118 = vmatpush.msra.mxu0 %v1792
    %2119 = vmatpush.msra.mxu0 %v1788
    %2120 = vmatpush.msra.mxu0 %v1784
    %2121 = vmatpush.msra.mxu0 %v1780
    %2122 = vmatmul.f32.gmra.mxu0 %v1648
    %v2123 = vpop.f32.mrf.mxu0
    %v2124 = vadd.f32 %v2104, %v2123
    %2125 = vdwg.mxu0
    %2126 = vmatpush.msra.mxu0 %v1904
    %2127 = vmatpush.msra.mxu0 %v1900
    %2128 = vmatpush.msra.mxu0 %v1896
    %2129 = vmatpush.msra.mxu0 %v1892
    %2130 = vmatpush.msra.mxu0 %v1888
    %2131 = vmatpush.msra.mxu0 %v1884
    %2132 = vmatpush.msra.mxu0 %v1880
    %2133 = vmatpush.msra.mxu0 %v1876
    %2134 = vmatpush.msra.mxu0 %v1872
    %2135 = vmatpush.msra.mxu0 %v1868
    %2136 = vmatpush.msra.mxu0 %v1864
    %2137 = vmatpush.msra.mxu0 %v1860
    %2138 = vmatpush.msra.mxu0 %v1856
    %2139 = vmatpush.msra.mxu0 %v1852
    %2140 = vmatpush.msra.mxu0 %v1848
    %2141 = vmatpush.msra.mxu0 %v1844
    %2142 = vmatmul.f32.gmra.mxu0 %v1649
    %v2143 = vpop.f32.mrf.mxu0
    %v2144 = vadd.f32 %v2124, %v2143
    %2145 = vdwg.mxu0
    %2146 = vmatpush.msra.mxu0 %v1713
    %2147 = vmatpush.msra.mxu0 %v1709
    %2148 = vmatpush.msra.mxu0 %v1705
    %2149 = vmatpush.msra.mxu0 %v1701
    %2150 = vmatpush.msra.mxu0 %v1697
    %2151 = vmatpush.msra.mxu0 %v1693
    %2152 = vmatpush.msra.mxu0 %v1689
    %2153 = vmatpush.msra.mxu0 %v1685
    %2154 = vmatpush.msra.mxu0 %v1681
    %2155 = vmatpush.msra.mxu0 %v1677
    %2156 = vmatpush.msra.mxu0 %v1673
    %2157 = vmatpush.msra.mxu0 %v1669
    %2158 = vmatpush.msra.mxu0 %v1665
    %2159 = vmatpush.msra.mxu0 %v1661
    %2160 = vmatpush.msra.mxu0 %v1657
    %2161 = vmatpush.msra.mxu0 %v1653
    %2162 = vmatmul.f32.gmra.mxu0 %v1646
    %v2163 = vpop.f32.mrf.mxu0
    %v2164 = vadd.f32 0.0, %v2163
    %2165 = vdwg.mxu0
    %2166 = vmatpush.msra.mxu0 %v1777
    %2167 = vmatpush.msra.mxu0 %v1773
    %2168 = vmatpush.msra.mxu0 %v1769
    %2169 = vmatpush.msra.mxu0 %v1765
    %2170 = vmatpush.msra.mxu0 %v1761
    %2171 = vmatpush.msra.mxu0 %v1757
    %2172 = vmatpush.msra.mxu0 %v1753
    %2173 = vmatpush.msra.mxu0 %v1749
    %2174 = vmatpush.msra.mxu0 %v1745
    %2175 = vmatpush.msra.mxu0 %v1741
    %2176 = vmatpush.msra.mxu0 %v1737
    %2177 = vmatpush.msra.mxu0 %v1733
    %2178 = vmatpush.msra.mxu0 %v1729
    %2179 = vmatpush.msra.mxu0 %v1725
    %2180 = vmatpush.msra.mxu0 %v1721
    %2181 = vmatpush.msra.mxu0 %v1717
    %2182 = vmatmul.f32.gmra.mxu0 %v1647
    %v2183 = vpop.f32.mrf.mxu0
    %v2184 = vadd.f32 %v2164, %v2183
    %2185 = vdwg.mxu0
    %2186 = vmatpush.msra.mxu0 %v1841
    %2187 = vmatpush.msra.mxu0 %v1837
    %2188 = vmatpush.msra.mxu0 %v1833
    %2189 = vmatpush.msra.mxu0 %v1829
    %2190 = vmatpush.msra.mxu0 %v1825
    %2191 = vmatpush.msra.mxu0 %v1821
    %2192 = vmatpush.msra.mxu0 %v1817
    %2193 = vmatpush.msra.mxu0 %v1813
    %2194 = vmatpush.msra.mxu0 %v1809
    %2195 = vmatpush.msra.mxu0 %v1805
    %2196 = vmatpush.msra.mxu0 %v1801
    %2197 = vmatpush.msra.mxu0 %v1797
    %2198 = vmatpush.msra.mxu0 %v1793
    %2199 = vmatpush.msra.mxu0 %v1789
    %2200 = vmatpush.msra.mxu0 %v1785
    %2201 = vmatpush.msra.mxu0 %v1781
    %2202 = vmatmul.f32.gmra.mxu0 %v1648
    %v2203 = vpop.f32.mrf.mxu0
    %v2204 = vadd.f32 %v2184, %v2203
    %2205 = vdwg.mxu0
    %2206 = vmatpush.msra.mxu0 %v1905
    %2207 = vmatpush.msra.mxu0 %v1901
    %2208 = vmatpush.msra.mxu0 %v1897
    %2209 = vmatpush.msra.mxu0 %v1893
    %2210 = vmatpush.msra.mxu0 %v1889
    %2211 = vmatpush.msra.mxu0 %v1885
    %2212 = vmatpush.msra.mxu0 %v1881
    %2213 = vmatpush.msra.mxu0 %v1877
    %2214 = vmatpush.msra.mxu0 %v1873
    %2215 = vmatpush.msra.mxu0 %v1869
    %2216 = vmatpush.msra.mxu0 %v1865
    %2217 = vmatpush.msra.mxu0 %v1861
    %2218 = vmatpush.msra.mxu0 %v1857
    %2219 = vmatpush.msra.mxu0 %v1853
    %2220 = vmatpush.msra.mxu0 %v1849
    %2221 = vmatpush.msra.mxu0 %v1845
    %2222 = vmatmul.f32.gmra.mxu0 %v1649
    %v2223 = vpop.f32.mrf.mxu0
    %v2224 = vadd.f32 %v2204, %v2223
    %2225 = vdwg.mxu0
    %v2226 = vmul.f32 %v1984, %v1984
    %v2227 = vmul.f32 %v2064, %v2064
    %v2228 = vmul.f32 %v2144, %v2144
    %v2229 = vmul.f32 %v2224, %v2224
    %v2234 = vrot.slane %v2226, 7
    %v2235 = vrot.slane %v2227, 7
    %v2236 = vrot.slane %v2228, 7
    %v2237 = vrot.slane %v2229, 7
    %v2242 = vsub.f32 %v1984, %v2234
    %v2243 = vsub.f32 %v2064, %v2235
    %v2244 = vsub.f32 %v2144, %v2236
    %v2245 = vsub.f32 %v2224, %v2237
    %v2246 = vmax.f32 %v2242, 0.0
    %v2247 = vmax.f32 %v2243, 0.0
    %v2248 = vmax.f32 %v2244, 0.0
    %v2249 = vmax.f32 %v2245, 0.0
    %v2250 = vadd.f32 %v2246, 1e-05
    %v2251 = vadd.f32 %v2247, 1e-05
    %v2252 = vadd.f32 %v2248, 1e-05
    %v2253 = vadd.f32 %v2249, 1e-05
    %v2254 = vrsqrt.pop %v2250
    %v2255 = vmul.f32 %v2254, %v2250
    %v2256 = vmul.f32 %v2255, %v2254
    %v2257 = vmul.f32 0.5, %v2256
    %v2258 = vsub.f32 1.5, %v2257
    %v2259 = vmul.f32 %v2254, %v2258
    %vm2260 = vweird.f32 %v2250
    %vm2261 = vweird.f32 %v2254
    %vm2262 = vmor %vm2260, %vm2261
    %v2263 = vsel %vm2262, %v2254, %v2259
    %v2264 = vrsqrt.pop %v2251
    %v2265 = vmul.f32 %v2264, %v2251
    %v2266 = vmul.f32 %v2265, %v2264
    %v2267 = vmul.f32 0.5, %v2266
    %v2268 = vsub.f32 1.5, %v2267
    %v2269 = vmul.f32 %v2264, %v2268
    %vm2270 = vweird.f32 %v2251
    %vm2271 = vweird.f32 %v2264
    %vm2272 = vmor %vm2270, %vm2271
    %v2273 = vsel %vm2272, %v2264, %v2269
    %v2274 = vrsqrt.pop %v2252
    %v2275 = vmul.f32 %v2274, %v2252
    %v2276 = vmul.f32 %v2275, %v2274
    %v2277 = vmul.f32 0.5, %v2276
    %v2278 = vsub.f32 1.5, %v2277
    %v2279 = vmul.f32 %v2274, %v2278
    %vm2280 = vweird.f32 %v2252
    %vm2281 = vweird.f32 %v2274
    %vm2282 = vmor %vm2280, %vm2281
    %v2283 = vsel %vm2282, %v2274, %v2279
    %v2284 = vrsqrt.pop %v2253
    %v2285 = vmul.f32 %v2284, %v2253
    %v2286 = vmul.f32 %v2285, %v2284
    %v2287 = vmul.f32 0.5, %v2286
    %v2288 = vsub.f32 1.5, %v2287
    %v2289 = vmul.f32 %v2284, %v2288
    %vm2290 = vweird.f32 %v2253
    %vm2291 = vweird.f32 %v2284
    %vm2292 = vmor %vm2290, %vm2291
    %v2293 = vsel %vm2292, %v2284, %v2289
    %v2298 = vrot.slane %v2273, 6
    %v2299 = vrot.slane %v2283, 4
    %v2300 = vrot.slane %v2293, 2
    %v2301 = vsel %vm1582, %v2263, %v2298
    %vm2302 = vcmask 1045508
    %v2303 = vsel %vm2302, %v2299, %v2300
    %vm2304 = vcmask 1043456
    %v2305 = vsel %vm2304, %v2301, %v2303
    %v2306 = vrot.slane %v2305, 7
    %v2307 = vrot.slane %v2306, 2
    %v2309 = vmul.f32 %v90, %v2307
    %v2311 = vperm.slane %v2309, 0
    %v2312 = vperm.slane %v2309, 2
    %v2313 = vperm.slane %v2309, 4
    %v2314 = vperm.slane %v2309, 6
    %v2319 = vmul.f32 %v1984, %v2311
    %v2320 = vmul.f32 %v2064, %v2312
    %v2321 = vmul.f32 %v2144, %v2313
    %v2322 = vmul.f32 %v2224, %v2314
    %v2327 = vrot.slane %v2320, 6
    %v2328 = vrot.slane %v2321, 4
    %v2329 = vrot.slane %v2322, 2
    %v2330 = vsel %vm1582, %v2319, %v2327
    %v2331 = vsel %vm2302, %v2328, %v2329
    %v2332 = vsel %vm2304, %v2330, %v2331
    %v2333 = vrot.slane %v2332, 7
    %v2335 = vsub.f32 %v90, %v2333
    %v2336 = vperm.slane %v2311, 0
    %v2337 = vperm.slane %v2312, 0
    %v2338 = vperm.slane %v2313, 0
    %v2339 = vperm.slane %v2314, 0
    %v2340 = vmul.f32 %v1345, %v2336
    %v2341 = vmul.f32 %v1423, %v2337
    %v2342 = vmul.f32 %v1501, %v2338
    %v2343 = vmul.f32 %v1579, %v2339
    %v2345 = vperm.slane %v2335, 1
    %v2346 = vperm.slane %v2335, 3
    %v2347 = vperm.slane %v2335, 5
    %v2348 = vperm.slane %v2335, 7
    %v2353 = vperm.slane %v2345, 1
    %v2354 = vperm.slane %v2346, 1
    %v2355 = vperm.slane %v2347, 1
    %v2356 = vperm.slane %v2348, 1
    %v2357 = vadd.f32 %v2340, %v2353
    %v2358 = vadd.f32 %v2341, %v2354
    %v2359 = vadd.f32 %v2342, %v2355
    %v2360 = vadd.f32 %v2343, %v2356
    %v2361 = vmax.f32 %v2357, 0.0
    %v2362 = vmax.f32 %v2358, 0.0
    %v2363 = vmax.f32 %v2359, 0.0
    %v2364 = vmax.f32 %v2360, 0.0
    %v2365 = vpack.c.bf16 %v2361, %v2361
    %v2366 = vpack.c.bf16 %v2362, %v2362
    %v2367 = vpack.c.bf16 %v2363, %v2363
    %v2368 = vpack.c.bf16 %v2364, %v2364
    %v2369 = vld [vmem:[%s2] sm:$0xff]
    %v2370 = vld [vmem:[%s2 + $0x8] sm:$0xff]
    %v2371 = vld [vmem:[%s2 + $0x10] sm:$0xff]
    %v2372 = vld [vmem:[%s2 + $0x18] sm:$0xff]
    %v2373 = vld [vmem:[%s2 + $0x20] sm:$0xff]
    %v2374 = vld [vmem:[%s2 + $0x28] sm:$0xff]
    %v2375 = vld [vmem:[%s2 + $0x30] sm:$0xff]
    %v2376 = vld [vmem:[%s2 + $0x38] sm:$0xff]
    %v2377 = vld [vmem:[%s2 + $0x40] sm:$0xff]
    %v2378 = vld [vmem:[%s2 + $0x48] sm:$0xff]
    %v2379 = vld [vmem:[%s2 + $0x50] sm:$0xff]
    %v2380 = vld [vmem:[%s2 + $0x58] sm:$0xff]
    %v2381 = vld [vmem:[%s2 + $0x60] sm:$0xff]
    %v2382 = vld [vmem:[%s2 + $0x68] sm:$0xff]
    %v2383 = vld [vmem:[%s2 + $0x70] sm:$0xff]
    %v2384 = vld [vmem:[%s2 + $0x78] sm:$0xff]
    %v2385 = vld [vmem:[%s2 + $0x80] sm:$0xff]
    %v2386 = vld [vmem:[%s2 + $0x88] sm:$0xff]
    %v2387 = vld [vmem:[%s2 + $0x90] sm:$0xff]
    %v2388 = vld [vmem:[%s2 + $0x98] sm:$0xff]
    %v2389 = vld [vmem:[%s2 + $0xa0] sm:$0xff]
    %v2390 = vld [vmem:[%s2 + $0xa8] sm:$0xff]
    %v2391 = vld [vmem:[%s2 + $0xb0] sm:$0xff]
    %v2392 = vld [vmem:[%s2 + $0xb8] sm:$0xff]
    %v2393 = vld [vmem:[%s2 + $0xc0] sm:$0xff]
    %v2394 = vld [vmem:[%s2 + $0xc8] sm:$0xff]
    %v2395 = vld [vmem:[%s2 + $0xd0] sm:$0xff]
    %v2396 = vld [vmem:[%s2 + $0xd8] sm:$0xff]
    %v2397 = vld [vmem:[%s2 + $0xe0] sm:$0xff]
    %v2398 = vld [vmem:[%s2 + $0xe8] sm:$0xff]
    %v2399 = vld [vmem:[%s2 + $0xf0] sm:$0xff]
    %v2400 = vld [vmem:[%s2 + $0xf8] sm:$0xff]
    %v2401 = vld [vmem:[%s2 + $0x100] sm:$0xff]
    %v2402 = vld [vmem:[%s2 + $0x108] sm:$0xff]
    %v2403 = vld [vmem:[%s2 + $0x110] sm:$0xff]
    %v2404 = vld [vmem:[%s2 + $0x118] sm:$0xff]
    %v2405 = vld [vmem:[%s2 + $0x120] sm:$0xff]
    %v2406 = vld [vmem:[%s2 + $0x128] sm:$0xff]
    %v2407 = vld [vmem:[%s2 + $0x130] sm:$0xff]
    %v2408 = vld [vmem:[%s2 + $0x138] sm:$0xff]
    %v2409 = vld [vmem:[%s2 + $0x140] sm:$0xff]
    %v2410 = vld [vmem:[%s2 + $0x148] sm:$0xff]
    %v2411 = vld [vmem:[%s2 + $0x150] sm:$0xff]
    %v2412 = vld [vmem:[%s2 + $0x158] sm:$0xff]
    %v2413 = vld [vmem:[%s2 + $0x160] sm:$0xff]
    %v2414 = vld [vmem:[%s2 + $0x168] sm:$0xff]
    %v2415 = vld [vmem:[%s2 + $0x170] sm:$0xff]
    %v2416 = vld [vmem:[%s2 + $0x178] sm:$0xff]
    %v2417 = vld [vmem:[%s2 + $0x180] sm:$0xff]
    %v2418 = vld [vmem:[%s2 + $0x188] sm:$0xff]
    %v2419 = vld [vmem:[%s2 + $0x190] sm:$0xff]
    %v2420 = vld [vmem:[%s2 + $0x198] sm:$0xff]
    %v2421 = vld [vmem:[%s2 + $0x1a0] sm:$0xff]
    %v2422 = vld [vmem:[%s2 + $0x1a8] sm:$0xff]
    %v2423 = vld [vmem:[%s2 + $0x1b0] sm:$0xff]
    %v2424 = vld [vmem:[%s2 + $0x1b8] sm:$0xff]
    %v2425 = vld [vmem:[%s2 + $0x1c0] sm:$0xff]
    %v2426 = vld [vmem:[%s2 + $0x1c8] sm:$0xff]
    %v2427 = vld [vmem:[%s2 + $0x1d0] sm:$0xff]
    %v2428 = vld [vmem:[%s2 + $0x1d8] sm:$0xff]
    %v2429 = vld [vmem:[%s2 + $0x1e0] sm:$0xff]
    %v2430 = vld [vmem:[%s2 + $0x1e8] sm:$0xff]
    %v2431 = vld [vmem:[%s2 + $0x1f0] sm:$0xff]
    %v2432 = vld [vmem:[%s2 + $0x1f8] sm:$0xff]
    %v2497 = vunpack.c.l.b16 %v2369
    %v2498 = vunpack.c.h.b16 %v2369
    %v2499 = vunpack.c.l.b16 %v2370
    %v2500 = vunpack.c.h.b16 %v2370
    %v2501 = vunpack.c.l.b16 %v2371
    %v2502 = vunpack.c.h.b16 %v2371
    %v2503 = vunpack.c.l.b16 %v2372
    %v2504 = vunpack.c.h.b16 %v2372
    %v2505 = vunpack.c.l.b16 %v2373
    %v2506 = vunpack.c.h.b16 %v2373
    %v2507 = vunpack.c.l.b16 %v2374
    %v2508 = vunpack.c.h.b16 %v2374
    %v2509 = vunpack.c.l.b16 %v2375
    %v2510 = vunpack.c.h.b16 %v2375
    %v2511 = vunpack.c.l.b16 %v2376
    %v2512 = vunpack.c.h.b16 %v2376
    %v2513 = vunpack.c.l.b16 %v2377
    %v2514 = vunpack.c.h.b16 %v2377
    %v2515 = vunpack.c.l.b16 %v2378
    %v2516 = vunpack.c.h.b16 %v2378
    %v2517 = vunpack.c.l.b16 %v2379
    %v2518 = vunpack.c.h.b16 %v2379
    %v2519 = vunpack.c.l.b16 %v2380
    %v2520 = vunpack.c.h.b16 %v2380
    %v2521 = vunpack.c.l.b16 %v2381
    %v2522 = vunpack.c.h.b16 %v2381
    %v2523 = vunpack.c.l.b16 %v2382
    %v2524 = vunpack.c.h.b16 %v2382
    %v2525 = vunpack.c.l.b16 %v2383
    %v2526 = vunpack.c.h.b16 %v2383
    %v2527 = vunpack.c.l.b16 %v2384
    %v2528 = vunpack.c.h.b16 %v2384
    %v2529 = vunpack.c.l.b16 %v2385
    %v2530 = vunpack.c.h.b16 %v2385
    %v2531 = vunpack.c.l.b16 %v2386
    %v2532 = vunpack.c.h.b16 %v2386
    %v2533 = vunpack.c.l.b16 %v2387
    %v2534 = vunpack.c.h.b16 %v2387
    %v2535 = vunpack.c.l.b16 %v2388
    %v2536 = vunpack.c.h.b16 %v2388
    %v2537 = vunpack.c.l.b16 %v2389
    %v2538 = vunpack.c.h.b16 %v2389
    %v2539 = vunpack.c.l.b16 %v2390
    %v2540 = vunpack.c.h.b16 %v2390
    %v2541 = vunpack.c.l.b16 %v2391
    %v2542 = vunpack.c.h.b16 %v2391
    %v2543 = vunpack.c.l.b16 %v2392
    %v2544 = vunpack.c.h.b16 %v2392
    %v2545 = vunpack.c.l.b16 %v2393
    %v2546 = vunpack.c.h.b16 %v2393
    %v2547 = vunpack.c.l.b16 %v2394
    %v2548 = vunpack.c.h.b16 %v2394
    %v2549 = vunpack.c.l.b16 %v2395
    %v2550 = vunpack.c.h.b16 %v2395
    %v2551 = vunpack.c.l.b16 %v2396
    %v2552 = vunpack.c.h.b16 %v2396
    %v2553 = vunpack.c.l.b16 %v2397
    %v2554 = vunpack.c.h.b16 %v2397
    %v2555 = vunpack.c.l.b16 %v2398
    %v2556 = vunpack.c.h.b16 %v2398
    %v2557 = vunpack.c.l.b16 %v2399
    %v2558 = vunpack.c.h.b16 %v2399
    %v2559 = vunpack.c.l.b16 %v2400
    %v2560 = vunpack.c.h.b16 %v2400
    %v2561 = vunpack.c.l.b16 %v2401
    %v2562 = vunpack.c.h.b16 %v2401
    %v2563 = vunpack.c.l.b16 %v2402
    %v2564 = vunpack.c.h.b16 %v2402
    %v2565 = vunpack.c.l.b16 %v2403
    %v2566 = vunpack.c.h.b16 %v2403
    %v2567 = vunpack.c.l.b16 %v2404
    %v2568 = vunpack.c.h.b16 %v2404
    %v2569 = vunpack.c.l.b16 %v2405
    %v2570 = vunpack.c.h.b16 %v2405
    %v2571 = vunpack.c.l.b16 %v2406
    %v2572 = vunpack.c.h.b16 %v2406
    %v2573 = vunpack.c.l.b16 %v2407
    %v2574 = vunpack.c.h.b16 %v2407
    %v2575 = vunpack.c.l.b16 %v2408
    %v2576 = vunpack.c.h.b16 %v2408
    %v2577 = vunpack.c.l.b16 %v2409
    %v2578 = vunpack.c.h.b16 %v2409
    %v2579 = vunpack.c.l.b16 %v2410
    %v2580 = vunpack.c.h.b16 %v2410
    %v2581 = vunpack.c.l.b16 %v2411
    %v2582 = vunpack.c.h.b16 %v2411
    %v2583 = vunpack.c.l.b16 %v2412
    %v2584 = vunpack.c.h.b16 %v2412
    %v2585 = vunpack.c.l.b16 %v2413
    %v2586 = vunpack.c.h.b16 %v2413
    %v2587 = vunpack.c.l.b16 %v2414
    %v2588 = vunpack.c.h.b16 %v2414
    %v2589 = vunpack.c.l.b16 %v2415
    %v2590 = vunpack.c.h.b16 %v2415
    %v2591 = vunpack.c.l.b16 %v2416
    %v2592 = vunpack.c.h.b16 %v2416
    %v2593 = vunpack.c.l.b16 %v2417
    %v2594 = vunpack.c.h.b16 %v2417
    %v2595 = vunpack.c.l.b16 %v2418
    %v2596 = vunpack.c.h.b16 %v2418
    %v2597 = vunpack.c.l.b16 %v2419
    %v2598 = vunpack.c.h.b16 %v2419
    %v2599 = vunpack.c.l.b16 %v2420
    %v2600 = vunpack.c.h.b16 %v2420
    %v2601 = vunpack.c.l.b16 %v2421
    %v2602 = vunpack.c.h.b16 %v2421
    %v2603 = vunpack.c.l.b16 %v2422
    %v2604 = vunpack.c.h.b16 %v2422
    %v2605 = vunpack.c.l.b16 %v2423
    %v2606 = vunpack.c.h.b16 %v2423
    %v2607 = vunpack.c.l.b16 %v2424
    %v2608 = vunpack.c.h.b16 %v2424
    %v2609 = vunpack.c.l.b16 %v2425
    %v2610 = vunpack.c.h.b16 %v2425
    %v2611 = vunpack.c.l.b16 %v2426
    %v2612 = vunpack.c.h.b16 %v2426
    %v2613 = vunpack.c.l.b16 %v2427
    %v2614 = vunpack.c.h.b16 %v2427
    %v2615 = vunpack.c.l.b16 %v2428
    %v2616 = vunpack.c.h.b16 %v2428
    %v2617 = vunpack.c.l.b16 %v2429
    %v2618 = vunpack.c.h.b16 %v2429
    %v2619 = vunpack.c.l.b16 %v2430
    %v2620 = vunpack.c.h.b16 %v2430
    %v2621 = vunpack.c.l.b16 %v2431
    %v2622 = vunpack.c.h.b16 %v2431
    %v2623 = vunpack.c.l.b16 %v2432
    %v2624 = vunpack.c.h.b16 %v2432
    %v2625 = vpack.c.b16 %v2499, %v2497
    %v2626 = vpack.c.b16 %v2500, %v2498
    %v2627 = vpack.c.b16 %v2503, %v2501
    %v2628 = vpack.c.b16 %v2504, %v2502
    %v2629 = vpack.c.b16 %v2507, %v2505
    %v2630 = vpack.c.b16 %v2508, %v2506
    %v2631 = vpack.c.b16 %v2511, %v2509
    %v2632 = vpack.c.b16 %v2512, %v2510
    %v2633 = vpack.c.b16 %v2515, %v2513
    %v2634 = vpack.c.b16 %v2516, %v2514
    %v2635 = vpack.c.b16 %v2519, %v2517
    %v2636 = vpack.c.b16 %v2520, %v2518
    %v2637 = vpack.c.b16 %v2523, %v2521
    %v2638 = vpack.c.b16 %v2524, %v2522
    %v2639 = vpack.c.b16 %v2527, %v2525
    %v2640 = vpack.c.b16 %v2528, %v2526
    %v2641 = vpack.c.b16 %v2531, %v2529
    %v2642 = vpack.c.b16 %v2532, %v2530
    %v2643 = vpack.c.b16 %v2535, %v2533
    %v2644 = vpack.c.b16 %v2536, %v2534
    %v2645 = vpack.c.b16 %v2539, %v2537
    %v2646 = vpack.c.b16 %v2540, %v2538
    %v2647 = vpack.c.b16 %v2543, %v2541
    %v2648 = vpack.c.b16 %v2544, %v2542
    %v2649 = vpack.c.b16 %v2547, %v2545
    %v2650 = vpack.c.b16 %v2548, %v2546
    %v2651 = vpack.c.b16 %v2551, %v2549
    %v2652 = vpack.c.b16 %v2552, %v2550
    %v2653 = vpack.c.b16 %v2555, %v2553
    %v2654 = vpack.c.b16 %v2556, %v2554
    %v2655 = vpack.c.b16 %v2559, %v2557
    %v2656 = vpack.c.b16 %v2560, %v2558
    %v2657 = vpack.c.b16 %v2563, %v2561
    %v2658 = vpack.c.b16 %v2564, %v2562
    %v2659 = vpack.c.b16 %v2567, %v2565
    %v2660 = vpack.c.b16 %v2568, %v2566
    %v2661 = vpack.c.b16 %v2571, %v2569
    %v2662 = vpack.c.b16 %v2572, %v2570
    %v2663 = vpack.c.b16 %v2575, %v2573
    %v2664 = vpack.c.b16 %v2576, %v2574
    %v2665 = vpack.c.b16 %v2579, %v2577
    %v2666 = vpack.c.b16 %v2580, %v2578
    %v2667 = vpack.c.b16 %v2583, %v2581
    %v2668 = vpack.c.b16 %v2584, %v2582
    %v2669 = vpack.c.b16 %v2587, %v2585
    %v2670 = vpack.c.b16 %v2588, %v2586
    %v2671 = vpack.c.b16 %v2591, %v2589
    %v2672 = vpack.c.b16 %v2592, %v2590
    %v2673 = vpack.c.b16 %v2595, %v2593
    %v2674 = vpack.c.b16 %v2596, %v2594
    %v2675 = vpack.c.b16 %v2599, %v2597
    %v2676 = vpack.c.b16 %v2600, %v2598
    %v2677 = vpack.c.b16 %v2603, %v2601
    %v2678 = vpack.c.b16 %v2604, %v2602
    %v2679 = vpack.c.b16 %v2607, %v2605
    %v2680 = vpack.c.b16 %v2608, %v2606
    %v2681 = vpack.c.b16 %v2611, %v2609
    %v2682 = vpack.c.b16 %v2612, %v2610
    %v2683 = vpack.c.b16 %v2615, %v2613
    %v2684 = vpack.c.b16 %v2616, %v2614
    %v2685 = vpack.c.b16 %v2619, %v2617
    %v2686 = vpack.c.b16 %v2620, %v2618
    %v2687 = vpack.c.b16 %v2623, %v2621
    %v2688 = vpack.c.b16 %v2624, %v2622
    %2753 = vmatpush.bf16.msra.mxu0 %v2639
    %2754 = vmatpush.bf16.msra.mxu0 %v2637
    %2755 = vmatpush.bf16.msra.mxu0 %v2635
    %2756 = vmatpush.bf16.msra.mxu0 %v2633
    %2757 = vmatpush.bf16.msra.mxu0 %v2631
    %2758 = vmatpush.bf16.msra.mxu0 %v2629
    %2759 = vmatpush.bf16.msra.mxu0 %v2627
    %2760 = vmatpush.bf16.msra.mxu0 %v2625
    %2761 = vmatmul.bf16.gmra.mxu0 %v2365
    %v2762 = vpop.f32.mrf.mxu0
    %v2763 = vadd.f32 0.0, %v2762
    %v2764 = vpop.f32.mrf.mxu0
    %2765 = vdwg.mxu0
    %2766 = vmatpush.bf16.msra.mxu0 %v2655
    %2767 = vmatpush.bf16.msra.mxu0 %v2653
    %2768 = vmatpush.bf16.msra.mxu0 %v2651
    %2769 = vmatpush.bf16.msra.mxu0 %v2649
    %2770 = vmatpush.bf16.msra.mxu0 %v2647
    %2771 = vmatpush.bf16.msra.mxu0 %v2645
    %2772 = vmatpush.bf16.msra.mxu0 %v2643
    %2773 = vmatpush.bf16.msra.mxu0 %v2641
    %2774 = vmatmul.bf16.gmra.mxu0 %v2366
    %v2775 = vpop.f32.mrf.mxu0
    %v2776 = vadd.f32 %v2763, %v2775
    %v2777 = vpop.f32.mrf.mxu0
    %2778 = vdwg.mxu0
    %2779 = vmatpush.bf16.msra.mxu0 %v2671
    %2780 = vmatpush.bf16.msra.mxu0 %v2669
    %2781 = vmatpush.bf16.msra.mxu0 %v2667
    %2782 = vmatpush.bf16.msra.mxu0 %v2665
    %2783 = vmatpush.bf16.msra.mxu0 %v2663
    %2784 = vmatpush.bf16.msra.mxu0 %v2661
    %2785 = vmatpush.bf16.msra.mxu0 %v2659
    %2786 = vmatpush.bf16.msra.mxu0 %v2657
    %2787 = vmatmul.bf16.gmra.mxu0 %v2367
    %v2788 = vpop.f32.mrf.mxu0
    %v2789 = vadd.f32 %v2776, %v2788
    %v2790 = vpop.f32.mrf.mxu0
    %2791 = vdwg.mxu0
    %2792 = vmatpush.bf16.msra.mxu0 %v2687
    %2793 = vmatpush.bf16.msra.mxu0 %v2685
    %2794 = vmatpush.bf16.msra.mxu0 %v2683
    %2795 = vmatpush.bf16.msra.mxu0 %v2681
    %2796 = vmatpush.bf16.msra.mxu0 %v2679
    %2797 = vmatpush.bf16.msra.mxu0 %v2677
    %2798 = vmatpush.bf16.msra.mxu0 %v2675
    %2799 = vmatpush.bf16.msra.mxu0 %v2673
    %2800 = vmatmul.bf16.gmra.mxu0 %v2368
    %v2801 = vpop.f32.mrf.mxu0
    %v2802 = vadd.f32 %v2789, %v2801
    %v2803 = vpop.f32.mrf.mxu0
    %2804 = vdwg.mxu0
    %2805 = vmatpush.bf16.msra.mxu0 %v2640
    %2806 = vmatpush.bf16.msra.mxu0 %v2638
    %2807 = vmatpush.bf16.msra.mxu0 %v2636
    %2808 = vmatpush.bf16.msra.mxu0 %v2634
    %2809 = vmatpush.bf16.msra.mxu0 %v2632
    %2810 = vmatpush.bf16.msra.mxu0 %v2630
    %2811 = vmatpush.bf16.msra.mxu0 %v2628
    %2812 = vmatpush.bf16.msra.mxu0 %v2626
    %2813 = vmatmul.bf16.gmra.mxu0 %v2365
    %v2814 = vpop.f32.mrf.mxu0
    %v2815 = vadd.f32 0.0, %v2814
    %v2816 = vpop.f32.mrf.mxu0
    %2817 = vdwg.mxu0
    %2818 = vmatpush.bf16.msra.mxu0 %v2656
    %2819 = vmatpush.bf16.msra.mxu0 %v2654
    %2820 = vmatpush.bf16.msra.mxu0 %v2652
    %2821 = vmatpush.bf16.msra.mxu0 %v2650
    %2822 = vmatpush.bf16.msra.mxu0 %v2648
    %2823 = vmatpush.bf16.msra.mxu0 %v2646
    %2824 = vmatpush.bf16.msra.mxu0 %v2644
    %2825 = vmatpush.bf16.msra.mxu0 %v2642
    %2826 = vmatmul.bf16.gmra.mxu0 %v2366
    %v2827 = vpop.f32.mrf.mxu0
    %v2828 = vadd.f32 %v2815, %v2827
    %v2829 = vpop.f32.mrf.mxu0
    %2830 = vdwg.mxu0
    %2831 = vmatpush.bf16.msra.mxu0 %v2672
    %2832 = vmatpush.bf16.msra.mxu0 %v2670
    %2833 = vmatpush.bf16.msra.mxu0 %v2668
    %2834 = vmatpush.bf16.msra.mxu0 %v2666
    %2835 = vmatpush.bf16.msra.mxu0 %v2664
    %2836 = vmatpush.bf16.msra.mxu0 %v2662
    %2837 = vmatpush.bf16.msra.mxu0 %v2660
    %2838 = vmatpush.bf16.msra.mxu0 %v2658
    %2839 = vmatmul.bf16.gmra.mxu0 %v2367
    %v2840 = vpop.f32.mrf.mxu0
    %v2841 = vadd.f32 %v2828, %v2840
    %v2842 = vpop.f32.mrf.mxu0
    %2843 = vdwg.mxu0
    %2844 = vmatpush.bf16.msra.mxu0 %v2688
    %2845 = vmatpush.bf16.msra.mxu0 %v2686
    %2846 = vmatpush.bf16.msra.mxu0 %v2684
    %2847 = vmatpush.bf16.msra.mxu0 %v2682
    %2848 = vmatpush.bf16.msra.mxu0 %v2680
    %2849 = vmatpush.bf16.msra.mxu0 %v2678
    %2850 = vmatpush.bf16.msra.mxu0 %v2676
    %2851 = vmatpush.bf16.msra.mxu0 %v2674
    %2852 = vmatmul.bf16.gmra.mxu0 %v2368
    %v2853 = vpop.f32.mrf.mxu0
    %v2854 = vadd.f32 %v2841, %v2853
    %v2855 = vpop.f32.mrf.mxu0
    %2856 = vdwg.mxu0
    %v2857 = vsel %vm1582, %v2802, 0.0
    %v2858 = vrot.slane %v2857, 4
    %v2859 = vadd.f32 %v2857, %v2858
    %v2860 = vrot.slane %v2859, 2
    %v2861 = vadd.f32 %v2859, %v2860
    %v2862 = vrot.slane %v2861, 1
    %v2863 = vadd.f32 %v2861, %v2862
    %v2864 = vsel %vm1582, %v2854, 0.0
    %v2865 = vrot.slane %v2864, 4
    %v2866 = vadd.f32 %v2864, %v2865
    %v2867 = vrot.slane %v2866, 2
    %v2868 = vadd.f32 %v2866, %v2867
    %v2869 = vrot.slane %v2868, 1
    %v2870 = vadd.f32 %v2868, %v2869
    %v2871 = vmul.f32 %v2802, %v2802
    %v2872 = vmul.f32 %v2854, %v2854
    %v2873 = vsel %vm1582, %v2871, 0.0
    %v2874 = vrot.slane %v2873, 4
    %v2875 = vadd.f32 %v2873, %v2874
    %v2876 = vrot.slane %v2875, 2
    %v2877 = vadd.f32 %v2875, %v2876
    %v2878 = vrot.slane %v2877, 1
    %v2879 = vadd.f32 %v2877, %v2878
    %v2880 = vsel %vm1582, %v2872, 0.0
    %v2881 = vrot.slane %v2880, 4
    %v2882 = vadd.f32 %v2880, %v2881
    %v2883 = vrot.slane %v2882, 2
    %v2884 = vadd.f32 %v2882, %v2883
    %v2885 = vrot.slane %v2884, 1
    %v2886 = vadd.f32 %v2884, %v2885
    %v2887 = vsel %vm1645, %v2863, %v2879
    %v2888 = vsel %vm1645, %v2870, %v2886
    %v2889 = vld [vmem:[%s5] sm:$0xff]
    %v2890 = vld [vmem:[%s5 + $0x8] sm:$0xff]
    %v2891 = vld [vmem:[%s5 + $0x10] sm:$0xff]
    %v2892 = vld [vmem:[%s5 + $0x18] sm:$0xff]
    %v2893 = vld [vmem:[%s5 + $0x20] sm:$0xff]
    %v2894 = vld [vmem:[%s5 + $0x28] sm:$0xff]
    %v2895 = vld [vmem:[%s5 + $0x30] sm:$0xff]
    %v2896 = vld [vmem:[%s5 + $0x38] sm:$0xff]
    %v2897 = vld [vmem:[%s5 + $0x40] sm:$0xff]
    %v2898 = vld [vmem:[%s5 + $0x48] sm:$0xff]
    %v2899 = vld [vmem:[%s5 + $0x50] sm:$0xff]
    %v2900 = vld [vmem:[%s5 + $0x58] sm:$0xff]
    %v2901 = vld [vmem:[%s5 + $0x60] sm:$0xff]
    %v2902 = vld [vmem:[%s5 + $0x68] sm:$0xff]
    %v2903 = vld [vmem:[%s5 + $0x70] sm:$0xff]
    %v2904 = vld [vmem:[%s5 + $0x78] sm:$0xff]
    %v2905 = vld [vmem:[%s5 + $0x80] sm:$0xff]
    %v2906 = vld [vmem:[%s5 + $0x88] sm:$0xff]
    %v2907 = vld [vmem:[%s5 + $0x90] sm:$0xff]
    %v2908 = vld [vmem:[%s5 + $0x98] sm:$0xff]
    %v2909 = vld [vmem:[%s5 + $0xa0] sm:$0xff]
    %v2910 = vld [vmem:[%s5 + $0xa8] sm:$0xff]
    %v2911 = vld [vmem:[%s5 + $0xb0] sm:$0xff]
    %v2912 = vld [vmem:[%s5 + $0xb8] sm:$0xff]
    %v2913 = vld [vmem:[%s5 + $0xc0] sm:$0xff]
    %v2914 = vld [vmem:[%s5 + $0xc8] sm:$0xff]
    %v2915 = vld [vmem:[%s5 + $0xd0] sm:$0xff]
    %v2916 = vld [vmem:[%s5 + $0xd8] sm:$0xff]
    %v2917 = vld [vmem:[%s5 + $0xe0] sm:$0xff]
    %v2918 = vld [vmem:[%s5 + $0xe8] sm:$0xff]
    %v2919 = vld [vmem:[%s5 + $0xf0] sm:$0xff]
    %v2920 = vld [vmem:[%s5 + $0xf8] sm:$0xff]
    %v2921 = vld [vmem:[%s5 + $0x100] sm:$0xff]
    %v2922 = vld [vmem:[%s5 + $0x108] sm:$0xff]
    %v2923 = vld [vmem:[%s5 + $0x110] sm:$0xff]
    %v2924 = vld [vmem:[%s5 + $0x118] sm:$0xff]
    %v2925 = vld [vmem:[%s5 + $0x120] sm:$0xff]
    %v2926 = vld [vmem:[%s5 + $0x128] sm:$0xff]
    %v2927 = vld [vmem:[%s5 + $0x130] sm:$0xff]
    %v2928 = vld [vmem:[%s5 + $0x138] sm:$0xff]
    %v2929 = vld [vmem:[%s5 + $0x140] sm:$0xff]
    %v2930 = vld [vmem:[%s5 + $0x148] sm:$0xff]
    %v2931 = vld [vmem:[%s5 + $0x150] sm:$0xff]
    %v2932 = vld [vmem:[%s5 + $0x158] sm:$0xff]
    %v2933 = vld [vmem:[%s5 + $0x160] sm:$0xff]
    %v2934 = vld [vmem:[%s5 + $0x168] sm:$0xff]
    %v2935 = vld [vmem:[%s5 + $0x170] sm:$0xff]
    %v2936 = vld [vmem:[%s5 + $0x178] sm:$0xff]
    %v2937 = vld [vmem:[%s5 + $0x180] sm:$0xff]
    %v2938 = vld [vmem:[%s5 + $0x188] sm:$0xff]
    %v2939 = vld [vmem:[%s5 + $0x190] sm:$0xff]
    %v2940 = vld [vmem:[%s5 + $0x198] sm:$0xff]
    %v2941 = vld [vmem:[%s5 + $0x1a0] sm:$0xff]
    %v2942 = vld [vmem:[%s5 + $0x1a8] sm:$0xff]
    %v2943 = vld [vmem:[%s5 + $0x1b0] sm:$0xff]
    %v2944 = vld [vmem:[%s5 + $0x1b8] sm:$0xff]
    %v2945 = vld [vmem:[%s5 + $0x1c0] sm:$0xff]
    %v2946 = vld [vmem:[%s5 + $0x1c8] sm:$0xff]
    %v2947 = vld [vmem:[%s5 + $0x1d0] sm:$0xff]
    %v2948 = vld [vmem:[%s5 + $0x1d8] sm:$0xff]
    %v2949 = vld [vmem:[%s5 + $0x1e0] sm:$0xff]
    %v2950 = vld [vmem:[%s5 + $0x1e8] sm:$0xff]
    %v2951 = vld [vmem:[%s5 + $0x1f0] sm:$0xff]
    %v2952 = vld [vmem:[%s5 + $0x1f8] sm:$0xff]
    %2953 = vmatpush.msra.mxu0 %v2919
    %2954 = vmatpush.msra.mxu0 %v2917
    %2955 = vmatpush.msra.mxu0 %v2915
    %2956 = vmatpush.msra.mxu0 %v2913
    %2957 = vmatpush.msra.mxu0 %v2911
    %2958 = vmatpush.msra.mxu0 %v2909
    %2959 = vmatpush.msra.mxu0 %v2907
    %2960 = vmatpush.msra.mxu0 %v2905
    %2961 = vmatpush.msra.mxu0 %v2903
    %2962 = vmatpush.msra.mxu0 %v2901
    %2963 = vmatpush.msra.mxu0 %v2899
    %2964 = vmatpush.msra.mxu0 %v2897
    %2965 = vmatpush.msra.mxu0 %v2895
    %2966 = vmatpush.msra.mxu0 %v2893
    %2967 = vmatpush.msra.mxu0 %v2891
    %2968 = vmatpush.msra.mxu0 %v2889
    %2969 = vmatmul.f32.gmra.mxu0 %v2887
    %v2970 = vpop.f32.mrf.mxu0
    %v2971 = vadd.f32 0.0, %v2970
    %2972 = vdwg.mxu0
    %2973 = vmatpush.msra.mxu0 %v2951
    %2974 = vmatpush.msra.mxu0 %v2949
    %2975 = vmatpush.msra.mxu0 %v2947
    %2976 = vmatpush.msra.mxu0 %v2945
    %2977 = vmatpush.msra.mxu0 %v2943
    %2978 = vmatpush.msra.mxu0 %v2941
    %2979 = vmatpush.msra.mxu0 %v2939
    %2980 = vmatpush.msra.mxu0 %v2937
    %2981 = vmatpush.msra.mxu0 %v2935
    %2982 = vmatpush.msra.mxu0 %v2933
    %2983 = vmatpush.msra.mxu0 %v2931
    %2984 = vmatpush.msra.mxu0 %v2929
    %2985 = vmatpush.msra.mxu0 %v2927
    %2986 = vmatpush.msra.mxu0 %v2925
    %2987 = vmatpush.msra.mxu0 %v2923
    %2988 = vmatpush.msra.mxu0 %v2921
    %2989 = vmatmul.f32.gmra.mxu0 %v2888
    %v2990 = vpop.f32.mrf.mxu0
    %v2991 = vadd.f32 %v2971, %v2990
    %2992 = vdwg.mxu0
    %2993 = vmatpush.msra.mxu0 %v2920
    %2994 = vmatpush.msra.mxu0 %v2918
    %2995 = vmatpush.msra.mxu0 %v2916
    %2996 = vmatpush.msra.mxu0 %v2914
    %2997 = vmatpush.msra.mxu0 %v2912
    %2998 = vmatpush.msra.mxu0 %v2910
    %2999 = vmatpush.msra.mxu0 %v2908
    %3000 = vmatpush.msra.mxu0 %v2906
    %3001 = vmatpush.msra.mxu0 %v2904
    %3002 = vmatpush.msra.mxu0 %v2902
    %3003 = vmatpush.msra.mxu0 %v2900
    %3004 = vmatpush.msra.mxu0 %v2898
    %3005 = vmatpush.msra.mxu0 %v2896
    %3006 = vmatpush.msra.mxu0 %v2894
    %3007 = vmatpush.msra.mxu0 %v2892
    %3008 = vmatpush.msra.mxu0 %v2890
    %3009 = vmatmul.f32.gmra.mxu0 %v2887
    %v3010 = vpop.f32.mrf.mxu0
    %v3011 = vadd.f32 0.0, %v3010
    %3012 = vdwg.mxu0
    %3013 = vmatpush.msra.mxu0 %v2952
    %3014 = vmatpush.msra.mxu0 %v2950
    %3015 = vmatpush.msra.mxu0 %v2948
    %3016 = vmatpush.msra.mxu0 %v2946
    %3017 = vmatpush.msra.mxu0 %v2944
    %3018 = vmatpush.msra.mxu0 %v2942
    %3019 = vmatpush.msra.mxu0 %v2940
    %3020 = vmatpush.msra.mxu0 %v2938
    %3021 = vmatpush.msra.mxu0 %v2936
    %3022 = vmatpush.msra.mxu0 %v2934
    %3023 = vmatpush.msra.mxu0 %v2932
    %3024 = vmatpush.msra.mxu0 %v2930
    %3025 = vmatpush.msra.mxu0 %v2928
    %3026 = vmatpush.msra.mxu0 %v2926
    %3027 = vmatpush.msra.mxu0 %v2924
    %3028 = vmatpush.msra.mxu0 %v2922
    %3029 = vmatmul.f32.gmra.mxu0 %v2888
    %v3030 = vpop.f32.mrf.mxu0
    %v3031 = vadd.f32 %v3011, %v3030
    %3032 = vdwg.mxu0
    %v3033 = vmul.f32 %v2991, %v2991
    %v3034 = vmul.f32 %v3031, %v3031
    %v3037 = vrot.slane %v3033, 7
    %v3038 = vrot.slane %v3034, 7
    %v3041 = vsub.f32 %v2991, %v3037
    %v3042 = vsub.f32 %v3031, %v3038
    %v3043 = vmax.f32 %v3041, 0.0
    %v3044 = vmax.f32 %v3042, 0.0
    %v3045 = vadd.f32 %v3043, 1e-05
    %v3046 = vadd.f32 %v3044, 1e-05
    %v3047 = vrsqrt.pop %v3045
    %v3048 = vmul.f32 %v3047, %v3045
    %v3049 = vmul.f32 %v3048, %v3047
    %v3050 = vmul.f32 0.5, %v3049
    %v3051 = vsub.f32 1.5, %v3050
    %v3052 = vmul.f32 %v3047, %v3051
    %vm3053 = vweird.f32 %v3045
    %vm3054 = vweird.f32 %v3047
    %vm3055 = vmor %vm3053, %vm3054
    %v3056 = vsel %vm3055, %v3047, %v3052
    %v3057 = vrsqrt.pop %v3046
    %v3058 = vmul.f32 %v3057, %v3046
    %v3059 = vmul.f32 %v3058, %v3057
    %v3060 = vmul.f32 0.5, %v3059
    %v3061 = vsub.f32 1.5, %v3060
    %v3062 = vmul.f32 %v3057, %v3061
    %vm3063 = vweird.f32 %v3046
    %vm3064 = vweird.f32 %v3057
    %vm3065 = vmor %vm3063, %vm3064
    %v3066 = vsel %vm3065, %v3057, %v3062
    %v3069 = vrot.slane %v3066, 6
    %v3070 = vsel %vm1582, %v3056, %v3069
    %v3071 = vrot.slane %v3070, 7
    %v3072 = vrot.slane %v3071, 2
    %v3074 = vmul.f32 %v91, %v3072
    %v3076 = vperm.slane %v3074, 0
    %v3077 = vperm.slane %v3074, 2
    %v3080 = vmul.f32 %v2991, %v3076
    %v3081 = vmul.f32 %v3031, %v3077
    %v3084 = vrot.slane %v3081, 6
    %v3085 = vsel %vm1582, %v3080, %v3084
    %v3086 = vrot.slane %v3085, 7
    %v3088 = vsub.f32 %v91, %v3086
    %v3089 = vperm.slane %v3076, 0
    %v3090 = vperm.slane %v3077, 0
    %v3091 = vmul.f32 %v2802, %v3089
    %v3092 = vmul.f32 %v2854, %v3090
    %v3094 = vperm.slane %v3088, 1
    %v3095 = vperm.slane %v3088, 3
    %v3098 = vperm.slane %v3094, 1
    %v3099 = vperm.slane %v3095, 1
    %v3100 = vadd.f32 %v3091, %v3098
    %v3101 = vadd.f32 %v3092, %v3099
    %v3102 = vmax.f32 %v3100, 0.0
    %v3103 = vmax.f32 %v3101, 0.0
    %v3104 = vpack.c.bf16 %v3102, %v3102
    %v3105 = vpack.c.bf16 %v3103, %v3103
    %v3106 = vld [vmem:[%s3] sm:$0xf]
    %v3107 = vld [vmem:[%s3 + $0x4] sm:$0xf]
    %v3108 = vld [vmem:[%s3 + $0x8] sm:$0xf]
    %v3109 = vld [vmem:[%s3 + $0xc] sm:$0xf]
    %v3110 = vld [vmem:[%s3 + $0x10] sm:$0xf]
    %v3111 = vld [vmem:[%s3 + $0x14] sm:$0xf]
    %v3112 = vld [vmem:[%s3 + $0x18] sm:$0xf]
    %v3113 = vld [vmem:[%s3 + $0x1c] sm:$0xf]
    %v3114 = vld [vmem:[%s3 + $0x20] sm:$0xf]
    %v3115 = vld [vmem:[%s3 + $0x24] sm:$0xf]
    %v3116 = vld [vmem:[%s3 + $0x28] sm:$0xf]
    %v3117 = vld [vmem:[%s3 + $0x2c] sm:$0xf]
    %v3118 = vld [vmem:[%s3 + $0x30] sm:$0xf]
    %v3119 = vld [vmem:[%s3 + $0x34] sm:$0xf]
    %v3120 = vld [vmem:[%s3 + $0x38] sm:$0xf]
    %v3121 = vld [vmem:[%s3 + $0x3c] sm:$0xf]
    %v3122 = vld [vmem:[%s3 + $0x40] sm:$0xf]
    %v3123 = vld [vmem:[%s3 + $0x44] sm:$0xf]
    %v3124 = vld [vmem:[%s3 + $0x48] sm:$0xf]
    %v3125 = vld [vmem:[%s3 + $0x4c] sm:$0xf]
    %v3126 = vld [vmem:[%s3 + $0x50] sm:$0xf]
    %v3127 = vld [vmem:[%s3 + $0x54] sm:$0xf]
    %v3128 = vld [vmem:[%s3 + $0x58] sm:$0xf]
    %v3129 = vld [vmem:[%s3 + $0x5c] sm:$0xf]
    %v3130 = vld [vmem:[%s3 + $0x60] sm:$0xf]
    %v3131 = vld [vmem:[%s3 + $0x64] sm:$0xf]
    %v3132 = vld [vmem:[%s3 + $0x68] sm:$0xf]
    %v3133 = vld [vmem:[%s3 + $0x6c] sm:$0xf]
    %v3134 = vld [vmem:[%s3 + $0x70] sm:$0xf]
    %v3135 = vld [vmem:[%s3 + $0x74] sm:$0xf]
    %v3136 = vld [vmem:[%s3 + $0x78] sm:$0xf]
    %v3137 = vld [vmem:[%s3 + $0x7c] sm:$0xf]
    %v3170 = vunpack.c.l.b16 %v3106
    %v3171 = vunpack.c.l.b16 %v3107
    %v3172 = vunpack.c.l.b16 %v3108
    %v3173 = vunpack.c.l.b16 %v3109
    %v3174 = vunpack.c.l.b16 %v3110
    %v3175 = vunpack.c.l.b16 %v3111
    %v3176 = vunpack.c.l.b16 %v3112
    %v3177 = vunpack.c.l.b16 %v3113
    %v3178 = vunpack.c.l.b16 %v3114
    %v3179 = vunpack.c.l.b16 %v3115
    %v3180 = vunpack.c.l.b16 %v3116
    %v3181 = vunpack.c.l.b16 %v3117
    %v3182 = vunpack.c.l.b16 %v3118
    %v3183 = vunpack.c.l.b16 %v3119
    %v3184 = vunpack.c.l.b16 %v3120
    %v3185 = vunpack.c.l.b16 %v3121
    %v3186 = vunpack.c.l.b16 %v3122
    %v3187 = vunpack.c.l.b16 %v3123
    %v3188 = vunpack.c.l.b16 %v3124
    %v3189 = vunpack.c.l.b16 %v3125
    %v3190 = vunpack.c.l.b16 %v3126
    %v3191 = vunpack.c.l.b16 %v3127
    %v3192 = vunpack.c.l.b16 %v3128
    %v3193 = vunpack.c.l.b16 %v3129
    %v3194 = vunpack.c.l.b16 %v3130
    %v3195 = vunpack.c.l.b16 %v3131
    %v3196 = vunpack.c.l.b16 %v3132
    %v3197 = vunpack.c.l.b16 %v3133
    %v3198 = vunpack.c.l.b16 %v3134
    %v3199 = vunpack.c.l.b16 %v3135
    %v3200 = vunpack.c.l.b16 %v3136
    %v3201 = vunpack.c.l.b16 %v3137
    %v3202 = vpack.c.b16 %v3171, %v3170
    %v3203 = vpack.c.b16 %v3173, %v3172
    %v3204 = vpack.c.b16 %v3175, %v3174
    %v3205 = vpack.c.b16 %v3177, %v3176
    %v3206 = vpack.c.b16 %v3179, %v3178
    %v3207 = vpack.c.b16 %v3181, %v3180
    %v3208 = vpack.c.b16 %v3183, %v3182
    %v3209 = vpack.c.b16 %v3185, %v3184
    %v3210 = vpack.c.b16 %v3187, %v3186
    %v3211 = vpack.c.b16 %v3189, %v3188
    %v3212 = vpack.c.b16 %v3191, %v3190
    %v3213 = vpack.c.b16 %v3193, %v3192
    %v3214 = vpack.c.b16 %v3195, %v3194
    %v3215 = vpack.c.b16 %v3197, %v3196
    %v3216 = vpack.c.b16 %v3199, %v3198
    %v3217 = vpack.c.b16 %v3201, %v3200
    %3234 = vmatpush.bf16.msra.mxu0 %v3209
    %3235 = vmatpush.bf16.msra.mxu0 %v3208
    %3236 = vmatpush.bf16.msra.mxu0 %v3207
    %3237 = vmatpush.bf16.msra.mxu0 %v3206
    %3238 = vmatpush.bf16.msra.mxu0 %v3205
    %3239 = vmatpush.bf16.msra.mxu0 %v3204
    %3240 = vmatpush.bf16.msra.mxu0 %v3203
    %3241 = vmatpush.bf16.msra.mxu0 %v3202
    %3242 = vmatmul.bf16.gmra.mxu0 %v3104
    %v3243 = vpop.f32.mrf.mxu0
    %v3244 = vadd.f32 0.0, %v3243
    %v3245 = vpop.f32.mrf.mxu0
    %3246 = vdwg.mxu0
    %3247 = vmatpush.bf16.msra.mxu0 %v3217
    %3248 = vmatpush.bf16.msra.mxu0 %v3216
    %3249 = vmatpush.bf16.msra.mxu0 %v3215
    %3250 = vmatpush.bf16.msra.mxu0 %v3214
    %3251 = vmatpush.bf16.msra.mxu0 %v3213
    %3252 = vmatpush.bf16.msra.mxu0 %v3212
    %3253 = vmatpush.bf16.msra.mxu0 %v3211
    %3254 = vmatpush.bf16.msra.mxu0 %v3210
    %3255 = vmatmul.bf16.gmra.mxu0 %v3105
    %v3256 = vpop.f32.mrf.mxu0
    %v3257 = vadd.f32 %v3244, %v3256
    %v3258 = vpop.f32.mrf.mxu0
    %3259 = vdwg.mxu0
    %v3260 = vsel %vm1582, %v3257, 0.0
    %v3261 = vrot.slane %v3260, 4
    %v3262 = vadd.f32 %v3260, %v3261
    %v3263 = vrot.slane %v3262, 2
    %v3264 = vadd.f32 %v3262, %v3263
    %v3265 = vrot.slane %v3264, 1
    %v3266 = vadd.f32 %v3264, %v3265
    %v3267 = vmul.f32 %v3257, %v3257
    %v3268 = vsel %vm1582, %v3267, 0.0
    %v3269 = vrot.slane %v3268, 4
    %v3270 = vadd.f32 %v3268, %v3269
    %v3271 = vrot.slane %v3270, 2
    %v3272 = vadd.f32 %v3270, %v3271
    %v3273 = vrot.slane %v3272, 1
    %v3274 = vadd.f32 %v3272, %v3273
    %v3275 = vsel %vm1645, %v3266, %v3274
    %v3276 = vld [vmem:[#allocation7] sm:$0xff]
    %v3277 = vld [vmem:[#allocation7 + $0x8] sm:$0xff]
    %v3278 = vld [vmem:[#allocation7 + $0x10] sm:$0xff]
    %v3279 = vld [vmem:[#allocation7 + $0x18] sm:$0xff]
    %v3280 = vld [vmem:[#allocation7 + $0x20] sm:$0xff]
    %v3281 = vld [vmem:[#allocation7 + $0x28] sm:$0xff]
    %v3282 = vld [vmem:[#allocation7 + $0x30] sm:$0xff]
    %v3283 = vld [vmem:[#allocation7 + $0x38] sm:$0xff]
    %v3284 = vld [vmem:[#allocation7 + $0x40] sm:$0xff]
    %v3285 = vld [vmem:[#allocation7 + $0x48] sm:$0xff]
    %v3286 = vld [vmem:[#allocation7 + $0x50] sm:$0xff]
    %v3287 = vld [vmem:[#allocation7 + $0x58] sm:$0xff]
    %v3288 = vld [vmem:[#allocation7 + $0x60] sm:$0xff]
    %v3289 = vld [vmem:[#allocation7 + $0x68] sm:$0xff]
    %v3290 = vld [vmem:[#allocation7 + $0x70] sm:$0xff]
    %v3291 = vld [vmem:[#allocation7 + $0x78] sm:$0xff]
    %3292 = vmatpush.msra.mxu0 %v3291
    %3293 = vmatpush.msra.mxu0 %v3290
    %3294 = vmatpush.msra.mxu0 %v3289
    %3295 = vmatpush.msra.mxu0 %v3288
    %3296 = vmatpush.msra.mxu0 %v3287
    %3297 = vmatpush.msra.mxu0 %v3286
    %3298 = vmatpush.msra.mxu0 %v3285
    %3299 = vmatpush.msra.mxu0 %v3284
    %3300 = vmatpush.msra.mxu0 %v3283
    %3301 = vmatpush.msra.mxu0 %v3282
    %3302 = vmatpush.msra.mxu0 %v3281
    %3303 = vmatpush.msra.mxu0 %v3280
    %3304 = vmatpush.msra.mxu0 %v3279
    %3305 = vmatpush.msra.mxu0 %v3278
    %3306 = vmatpush.msra.mxu0 %v3277
    %3307 = vmatpush.msra.mxu0 %v3276
    %3308 = vmatmul.f32.gmra.mxu0 %v3275
    %v3309 = vpop.f32.mrf.mxu0
    %v3310 = vadd.f32 0.0, %v3309
    %3311 = vdwg.mxu0
    %v3312 = vmul.f32 %v3310, %v3310
    %v3314 = vrot.slane %v3312, 7
    %v3316 = vsub.f32 %v3310, %v3314
    %v3317 = vmax.f32 %v3316, 0.0
    %v3318 = vadd.f32 %v3317, 1e-05
    %v3319 = vrsqrt.pop %v3318
    %v3320 = vmul.f32 %v3319, %v3318
    %v3321 = vmul.f32 %v3320, %v3319
    %v3322 = vmul.f32 0.5, %v3321
    %v3323 = vsub.f32 1.5, %v3322
    %v3324 = vmul.f32 %v3319, %v3323
    %vm3325 = vweird.f32 %v3318
    %vm3326 = vweird.f32 %v3319
    %vm3327 = vmor %vm3325, %vm3326
    %v3328 = vsel %vm3327, %v3319, %v3324
    %v3330 = vrot.slane %v91, 4
    %v3333 = vrot.slane %v3328, 7
    %v3334 = vrot.slane %v3333, 2
    %v3336 = vmul.f32 %v3330, %v3334
    %v3337 = vmul.f32 %v3310, %v3336
    %v3339 = vrot.slane %v3337, 7
    %v3341 = vsub.f32 %v3330, %v3339
    %v3342 = vperm.slane %v3336, 0
    %v3343 = vmul.f32 %v3257, %v3342
    %v3344 = vperm.slane %v3341, 1
    %v3345 = vadd.f32 %v3343, %v3344
    %v3346 = vmax.f32 %v3345, 0.0
    %v3347 = vpack.c.bf16 %v3346, %v3346
    %v3348 = vld [vmem:[%s8] sm:$0xf]
    %v3349 = vld [vmem:[%s8 + $0x4] sm:$0xf]
    %v3350 = vld [vmem:[%s8 + $0x8] sm:$0xf]
    %v3351 = vld [vmem:[%s8 + $0xc] sm:$0xf]
    %v3352 = vld [vmem:[%s8 + $0x10] sm:$0xf]
    %v3353 = vld [vmem:[%s8 + $0x14] sm:$0xf]
    %v3354 = vld [vmem:[%s8 + $0x18] sm:$0xf]
    %v3355 = vld [vmem:[%s8 + $0x1c] sm:$0xf]
    %v3356 = vld [vmem:[%s8 + $0x20] sm:$0xf]
    %v3357 = vld [vmem:[%s8 + $0x24] sm:$0xf]
    %v3358 = vld [vmem:[%s8 + $0x28] sm:$0xf]
    %v3359 = vld [vmem:[%s8 + $0x2c] sm:$0xf]
    %v3360 = vld [vmem:[%s8 + $0x30] sm:$0xf]
    %v3361 = vld [vmem:[%s8 + $0x34] sm:$0xf]
    %v3362 = vld [vmem:[%s8 + $0x38] sm:$0xf]
    %v3363 = vld [vmem:[%s8 + $0x3c] sm:$0xf]
    %v3364 = vperm.slane %v92, 0
    %v3381 = vunpack.c.l.b16 %v3348
    %v3382 = vunpack.c.l.b16 %v3349
    %v3383 = vunpack.c.l.b16 %v3350
    %v3384 = vunpack.c.l.b16 %v3351
    %v3385 = vunpack.c.l.b16 %v3352
    %v3386 = vunpack.c.l.b16 %v3353
    %v3387 = vunpack.c.l.b16 %v3354
    %v3388 = vunpack.c.l.b16 %v3355
    %v3389 = vunpack.c.l.b16 %v3356
    %v3390 = vunpack.c.l.b16 %v3357
    %v3391 = vunpack.c.l.b16 %v3358
    %v3392 = vunpack.c.l.b16 %v3359
    %v3393 = vunpack.c.l.b16 %v3360
    %v3394 = vunpack.c.l.b16 %v3361
    %v3395 = vunpack.c.l.b16 %v3362
    %v3396 = vunpack.c.l.b16 %v3363
    %v3397 = vpack.c.b16 %v3382, %v3381
    %v3398 = vpack.c.b16 %v3384, %v3383
    %v3399 = vpack.c.b16 %v3386, %v3385
    %v3400 = vpack.c.b16 %v3388, %v3387
    %v3401 = vpack.c.b16 %v3390, %v3389
    %v3402 = vpack.c.b16 %v3392, %v3391
    %v3403 = vpack.c.b16 %v3394, %v3393
    %v3404 = vpack.c.b16 %v3396, %v3395
    %3413 = vmatpush.bf16.msra.mxu0 %v3404
    %3414 = vmatpush.bf16.msra.mxu0 %v3403
    %3415 = vmatpush.bf16.msra.mxu0 %v3402
    %3416 = vmatpush.bf16.msra.mxu0 %v3401
    %3417 = vmatpush.bf16.msra.mxu0 %v3400
    %3418 = vmatpush.bf16.msra.mxu0 %v3399
    %3419 = vmatpush.bf16.msra.mxu0 %v3398
    %3420 = vmatpush.bf16.msra.mxu0 %v3397
    %3421 = vmatmul.bf16.gmra.mxu0 %v3347
    %v3422 = vpop.f32.mrf.mxu0
    %v3423 = vadd.f32 %v3364, %v3422
    %v3424 = vpop.f32.mrf.mxu0
    %3425 = vdwg.mxu0
    %v3426 = vmax.f32 %v3423, 0.0
    %v3427 = vpack.c.bf16 %v3426, %v3426
    %v3428 = vld [vmem:[%s9] sm:$0xf]
    %v3429 = vld [vmem:[%s9 + $0x4] sm:$0xf]
    %v3430 = vld [vmem:[%s9 + $0x8] sm:$0xf]
    %v3431 = vld [vmem:[%s9 + $0xc] sm:$0xf]
    %v3432 = vld [vmem:[%s9 + $0x10] sm:$0xf]
    %v3433 = vld [vmem:[%s9 + $0x14] sm:$0xf]
    %v3434 = vld [vmem:[%s9 + $0x18] sm:$0xf]
    %v3435 = vld [vmem:[%s9 + $0x1c] sm:$0xf]
    %v3436 = vperm.slane %v92, 1
    %v3445 = vunpack.c.l.b16 %v3428
    %v3446 = vunpack.c.l.b16 %v3429
    %v3447 = vunpack.c.l.b16 %v3430
    %v3448 = vunpack.c.l.b16 %v3431
    %v3449 = vunpack.c.l.b16 %v3432
    %v3450 = vunpack.c.l.b16 %v3433
    %v3451 = vunpack.c.l.b16 %v3434
    %v3452 = vunpack.c.l.b16 %v3435
    %v3453 = vpack.c.b16 %v3446, %v3445
    %v3454 = vpack.c.b16 %v3448, %v3447
    %v3455 = vpack.c.b16 %v3450, %v3449
    %v3456 = vpack.c.b16 %v3452, %v3451
    %vm3461 = vcmask 523264
    %v3463 = vsel %vm3461, %v3427, 0
    %3465 = vmatpush.bf16.msra.mxu0 0
    %3466 = vmatpush.bf16.msra.mxu0 0
    %3467 = vmatpush.bf16.msra.mxu0 0
    %3468 = vmatpush.bf16.msra.mxu0 0
    %3469 = vmatpush.bf16.msra.mxu0 %v3456
    %3470 = vmatpush.bf16.msra.mxu0 %v3455
    %3471 = vmatpush.bf16.msra.mxu0 %v3454
    %3472 = vmatpush.bf16.msra.mxu0 %v3453
    %3473 = vmatmul.bf16.gmra.mxu0 %v3463
    %v3474 = vpop.f32.mrf.mxu0
    %v3475 = vadd.f32 %v3436, %v3474
    %v3476 = vpop.f32.mrf.mxu0
    %3477 = vdwg.mxu0
    %v3478 = vmax.f32 %v3475, 0.0
    %v3479 = vpack.c.bf16 %v3478, %v3478
    %v3480 = vld [vmem:[%s10] sm:$0xf]
    %v3481 = vld [vmem:[%s10 + $0x4] sm:$0xf]
    %v3482 = vld [vmem:[%s10 + $0x8] sm:$0xf]
    %v3483 = vld [vmem:[%s10 + $0xc] sm:$0xf]
    %v3484 = vld [vmem:[%s10 + $0x10] sm:$0xf]
    %v3485 = vld [vmem:[%s10 + $0x14] sm:$0xf]
    %v3486 = vld [vmem:[%s10 + $0x18] sm:$0xf]
    %v3487 = vld [vmem:[%s10 + $0x1c] sm:$0xf]
    %v3488 = vperm.slane %v92, 2
    %v3497 = vunpack.c.l.b16 %v3480
    %v3498 = vunpack.c.l.b16 %v3481
    %v3499 = vunpack.c.l.b16 %v3482
    %v3500 = vunpack.c.l.b16 %v3483
    %v3501 = vunpack.c.l.b16 %v3484
    %v3502 = vunpack.c.l.b16 %v3485
    %v3503 = vunpack.c.l.b16 %v3486
    %v3504 = vunpack.c.l.b16 %v3487
    %v3505 = vpack.c.b16 %v3498, %v3497
    %v3506 = vpack.c.b16 %v3500, %v3499
    %v3507 = vpack.c.b16 %v3502, %v3501
    %v3508 = vpack.c.b16 %v3504, %v3503
    %v3514 = vsel %vm3461, %v3479, 0
    %3516 = vmatpush.bf16.msra.mxu0 0
    %3517 = vmatpush.bf16.msra.mxu0 0
    %3518 = vmatpush.bf16.msra.mxu0 0
    %3519 = vmatpush.bf16.msra.mxu0 0
    %3520 = vmatpush.bf16.msra.mxu0 %v3508
    %3521 = vmatpush.bf16.msra.mxu0 %v3507
    %3522 = vmatpush.bf16.msra.mxu0 %v3506
    %3523 = vmatpush.bf16.msra.mxu0 %v3505
    %3524 = vmatmul.bf16.gmra.mxu0 %v3514
    %v3525 = vpop.f32.mrf.mxu0
    %v3526 = vadd.f32 %v3488, %v3525
    %v3527 = vpop.f32.mrf.mxu0
    %3528 = vdwg.mxu0
    %v3529 = vmax.f32 %v3526, 0.0
    %vm3530 = vcmask 254976
    %3531 = vst.msk [vmem:[#allocation8] sm:$0x3] %vm3530, %v3529
    // Predicated region
    $region62: #{simple_encoder_forward.1} parent=1 // pred_check
      _
    $region63: #{simple_encoder_forward.1} parent=1 // pred_check_branch
      %3533 = sbr.rel (0) target = $region65
    $region64: #{simple_encoder_forward.1} parent=1 // pred_region
      %3535 = vsyncadd [#allocation4], 0
      %s3537 = sshll.u32 [#allocation8], 4
      %s3538 = int_to_ptr.vmem [resolvable:$true] %s3537
      %s3539 = sshll.u32 %s12, 4
      %s3540 = int_to_ptr.hbm [resolvable:$true] %s3539
      %3542 = dma.vmem_to_hbm [thread:$0]  %s3538, 32, %s3540, [#allocation4]
    $region65: #{simple_encoder_forward.1} parent=1 // pred_fallthru
      _
    // Predicated region
    $region66: #{simple_encoder_forward.1} parent=1 // pred_check
      _
    $region67: #{simple_encoder_forward.1} parent=1 // pred_check_branch
      %3544 = sbr.rel (0) target = $region69
    $region68: #{simple_encoder_forward.1} parent=1 // pred_region
      %3546 = dma.done [#allocation4], 32
    $region69: #{simple_encoder_forward.1} parent=1 // pred_fallthru
      _
    %3547 = vsyncpa [#allocation3], 1
    %3548 = vsyncpa [#allocation6], 1
    %3549 = vsyncpa [#allocation4], 1

</llo_original>
